<compile_context>
chip_gen: v7x
topology: tpu7x:2x2x1
jax: 0.10.0
libtpu: 0.0.40
codegen_flags: <defaults>
</compile_context>

<pallas_src>
import jax
import jax.numpy as jnp
from jax.experimental import pallas as pl
from jax.experimental.pallas import tpu as pltpu

K = 5                    # conv kernel size (both stages)
CPAD = 128               # lane-dense padding: conv channels / FC output classes
NUM_CLASSES = 10

# Geometry implied by fc1 = Linear(16*5*5, 10): 32x32 input.
C1_IN, C1_OUT = 3, 48
C2_IN, C2_OUT = 48, 16
P1, P1_PAD = 14 * 14, 208            # pooled positions, padded to a multiple of 16
P2, P2_PAD = 5 * 5, 32
CK1, CK1_PAD = K * K * C1_IN, 128    # im2col depth 75  -> 128 (aligned contraction)
CK2, CK2_PAD = K * K * C2_IN, 1280   # im2col depth 1200 -> 1280

VMEM_LIMIT_BYTES = 32 * 1024 * 1024  # explicit: v5e scoped default is only 16 MiB


# ----------------------------------------------------------------------------
# Stage-1 kernel: conv (one MXU matmul) + 2x2 maxpool + folded-BN bias + PReLU.
#   p_ref:     (bn, 4, P_pad, CK_pad) bf16 patches, axis 1 = pool offset dy*2+dx
#   w_ref:     (CK_pad, 128) bf16 folded weights
#   b_ref:     (1, 128) f32 folded bias       alpha_ref: (1,) f32 in SMEM
#   o_ref:     (bn, P_pad, 128) bf16 pooled activation (lane-dense channels)
# ----------------------------------------------------------------------------
def _conv_pool_act_kernel(p_ref, w_ref, b_ref, alpha_ref, o_ref):
    bn, noff, ppad, ck = p_ref.shape
    # One tall matmul over (batch x pool-offset x position) rows.  P_pad is a
    # multiple of 16 and CK_pad a multiple of 128, so both reshapes below are
    # layout-preserving (no relayout copies).
    p = p_ref[...].reshape(bn * noff * ppad, ck)
    y = jnp.dot(p, w_ref[...], preferred_element_type=jnp.float32)
    y = y.reshape(bn, noff, ppad, CPAD)
    # 2x2 max-pool = elementwise max of the four contiguous offset slabs.
    m = jnp.maximum(jnp.maximum(y[:, 0], y[:, 1]), jnp.maximum(y[:, 2], y[:, 3]))
    # Bias + PReLU after the max: exact because the bias is shared by the four
    # candidates and PReLU is monotone for alpha >= 0 (nn.PReLU default 0.25).
    m = m + b_ref[...]
    alpha = alpha_ref[0]
    m = jnp.where(m >= 0.0, m, alpha * m)
    o_ref[...] = m.astype(o_ref.dtype)


# ----------------------------------------------------------------------------
# Stage-2 kernel: conv + pool + bias + PReLU fused with the final Linear layer.
# The pooled activation (bn, 32, 128) never leaves VMEM; the FC is applied as
# 25 accumulated (bn,128)@(128,128) bf16 dots (one per real pooled position).
#   wfc_ref: (25, 128, 128) bf16     bfc_ref: (1, 128) f32
#   o_ref:   (bn, 1, 128) f32 lane-dense logits (classes padded 10 -> 128)
# ----------------------------------------------------------------------------
def _conv_pool_act_fc_kernel(p_ref, w_ref, b_ref, alpha_ref, wfc_ref, bfc_ref, o_ref):
    bn, noff, ppad, ck = p_ref.shape
    p = p_ref[...].reshape(bn * noff * ppad, ck)
    y = jnp.dot(p, w_ref[...], preferred_element_type=jnp.float32)
    y = y.reshape(bn, noff, ppad, CPAD)
    m = jnp.maximum(jnp.maximum(y[:, 0], y[:, 1]), jnp.maximum(y[:, 2], y[:, 3]))
    m = m + b_ref[...]
    alpha = alpha_ref[0]
    m = jnp.where(m >= 0.0, m, alpha * m)               # (bn, P2_PAD, 128) f32

    acc = jnp.zeros((bn, CPAD), jnp.float32)
    for q in range(P2):                                 # padded rows q >= 25 skipped
        acc = acc + jnp.dot(m[:, q, :].astype(jnp.bfloat16), wfc_ref[q],
                            preferred_element_type=jnp.float32)
    o_ref[...] = (acc + bfc_ref[...]).reshape(bn, 1, CPAD)


# ----------------------------------------------------------------------------
# XLA glue: pool-offset-grouped im2col, zero padded to TPU-friendly sizes.
# ----------------------------------------------------------------------------
def _im2col_pooled(x_nhwc, k, p_pad, ck_pad):
    """(N,H,W,C) -> (N, 4, p_pad, ck_pad) bf16; axis 1 is the 2x2 pool offset,
    rows are pooled output positions, features ordered (kh*k+kw)*C + c."""
    x = x_nhwc.astype(jnp.bfloat16)
    n, h, w, c = x.shape
    ho, wo = h - k + 1, w - k + 1
    hh, wh = ho // 2, wo // 2
    cols = [x[:, kh:kh + ho, kw:kw + wo, :] for kh in range(k) for kw in range(k)]
    p = jnp.stack(cols, axis=3)                         # (N, Ho, Wo, k*k, C)
    p = p.reshape(n, hh, 2, wh, 2, k * k * c)
    p = jnp.transpose(p, (0, 2, 4, 1, 3, 5))            # (N, dy, dx, Hh, Wh, k*k*C)
    p = p.reshape(n, 4, hh * wh, k * k * c)
    return jnp.pad(p, ((0, 0), (0, 0), (0, p_pad - hh * wh), (0, ck_pad - k * k * c)))


def _pick_block_batch(n, cap=8):
    """Largest divisor of n that is <= cap while keeping >= 2 grid steps when
    n > 1, so both v7x TensorCores get work via 'parallel' semantics.  cap=8
    keeps per-step blocks well under v7x's 64 MiB physical / 32 MiB scoped VMEM."""
    limit = max(1, min(cap, n if n == 1 else n // 2))
    for bn in range(limit, 0, -1):
        if n % bn == 0:
            return bn
    return 1


# ----------------------------------------------------------------------------
# pallas_call wrappers
# ----------------------------------------------------------------------------
def conv_bn_prelu_pool(x_nhwc, w_fold, b_fold, alpha):
    n = x_nhwc.shape[0]
    bn = _pick_block_batch(n)
    patches = _im2col_pooled(x_nhwc, K, P1_PAD, CK1_PAD)       # (N,4,208,128) bf16
    return pl.pallas_call(
        _conv_pool_act_kernel,
        out_shape=jax.ShapeDtypeStruct((n, P1_PAD, CPAD), jnp.bfloat16),
        grid_spec=pltpu.PrefetchScalarGridSpec(
            num_scalar_prefetch=0,
            grid=(n // bn,),
            in_specs=[
                pl.BlockSpec((bn, 4, P1_PAD, CK1_PAD), lambda i: (i, 0, 0, 0)),
                pl.BlockSpec((CK1_PAD, CPAD), lambda i: (0, 0)),
                pl.BlockSpec((1, CPAD), lambda i: (0, 0)),
                pl.BlockSpec(memory_space=pltpu.MemorySpace.SMEM),     # PReLU alpha
            ],
            out_specs=pl.BlockSpec((bn, P1_PAD, CPAD), lambda i: (i, 0, 0)),
        ),
        compiler_params=pltpu.CompilerParams(
            dimension_semantics=("parallel",),
            vmem_limit_bytes=VMEM_LIMIT_BYTES),
    )(patches, w_fold, b_fold, alpha)


def conv_bn_prelu_pool_fc(x_nhwc, w_fold, b_fold, alpha, wfc, bfc):
    """Stage-2 + FC fused.  One image per grid step: M = 4*32 = 128 matmul rows
    already fills the MXU and the batch axis stays fully 'parallel'."""
    n = x_nhwc.shape[0]
    patches = _im2col_pooled(x_nhwc, K, P2_PAD, CK2_PAD)       # (N,4,32,1280) bf16
    out = pl.pallas_call(
        _conv_pool_act_fc_kernel,
        out_shape=jax.ShapeDtypeStruct((n, 1, CPAD), jnp.float32),
        grid_spec=pltpu.PrefetchScalarGridSpec(
            num_scalar_prefetch=0,
            grid=(n,),
            in_specs=[
                pl.BlockSpec((1, 4, P2_PAD, CK2_PAD), lambda i: (i, 0, 0, 0)),
                pl.BlockSpec((CK2_PAD, CPAD), lambda i: (0, 0)),
                pl.BlockSpec((1, CPAD), lambda i: (0, 0)),
                pl.BlockSpec(memory_space=pltpu.MemorySpace.SMEM),     # PReLU alpha
                pl.BlockSpec((P2, CPAD, CPAD), lambda i: (0, 0, 0)),
                pl.BlockSpec((1, CPAD), lambda i: (0, 0)),
            ],
            out_specs=pl.BlockSpec((1, 1, CPAD), lambda i: (i, 0, 0)),
        ),
        compiler_params=pltpu.CompilerParams(
            dimension_semantics=("parallel",),
            vmem_limit_bytes=VMEM_LIMIT_BYTES),
    )(patches, w_fold, b_fold, alpha, wfc, bfc)
    return out[:, 0, :NUM_CLASSES]


# ----------------------------------------------------------------------------
# Full forward
# ----------------------------------------------------------------------------
def lenet_nptn_forward(x_nchw, fp):
    n = x_nchw.shape[0]
    h = jnp.transpose(x_nchw, (0, 2, 3, 1))                           # NCHW -> NHWC glue
    h = conv_bn_prelu_pool(h, fp["w1"], fp["b1"], fp["alpha1"])       # (N,208,128) bf16
    h = h[:, :P1, :].reshape(n, 14, 14, CPAD)[:, :, :, :C1_OUT]       # (N,14,14,48)
    return conv_bn_prelu_pool_fc(h, fp["w2"], fp["b2"], fp["alpha2"],
                                 fp["wfc"], fp["bfc"])                # (N,10) f32


# ----------------------------------------------------------------------------
# Parameters: raw (module-like) init + inference-time folding.
# ----------------------------------------------------------------------------
def init_raw_params(key):
    in_chs, out_chs = (C1_IN, C2_IN), (C1_OUT, C2_OUT)
    keys = jax.random.split(key, 14)

    def conv(kw, kb, cin, cout, g):
        w = 0.05 * jax.random.normal(kw, (cin, g, K * K, cout), jnp.float32)
        b = 0.05 * jax.random.normal(kb, (cin, g, cout), jnp.float32)
        return w, b

    def bn(kg, kb, km, kv, c):
        gamma = 1.0 + 0.1 * jax.random.normal(kg, (c,), jnp.float32)
        beta = 0.1 * jax.random.normal(kb, (c,), jnp.float32)
        mean = 0.1 * jax.random.normal(km, (c,), jnp.float32)
        var = 1.0 + 0.1 * jnp.abs(jax.random.normal(kv, (c,), jnp.float32))
        return gamma, beta, mean, var

    w1, b1 = conv(keys[0], keys[1], in_chs[0], out_chs[0], 1)
    w2, b2 = conv(keys[2], keys[3], in_chs[1], out_chs[1], 1)
    fc_w = 0.05 * jax.random.normal(keys[4], (NUM_CLASSES, C2_OUT * P2), jnp.float32)
    fc_b = 0.05 * jax.random.normal(keys[5], (NUM_CLASSES,), jnp.float32)
    return dict(
        w1=w1, b1=b1, bn1=bn(keys[6], keys[7], keys[8], keys[9], out_chs[0]),
        w2=w2, b2=b2, bn2=bn(keys[10], keys[11], keys[12], keys[13], out_chs[1]),
        alpha1=jnp.float32(0.25), alpha2=jnp.float32(0.25),   # PReLU default (>= 0)
        fc_w=fc_w, fc_b=fc_b)


def _fold_conv_bn(w, b, bn_params, ck_pad, eps=1e-5, cpad=CPAD):
    """Fold 1/Cin mean + conv bias + eval BatchNorm into (ck_pad, 128) bf16 weights."""
    gamma, beta, mean, var = bn_params
    cin, g, kk, cout = w.shape
    assert g == 1, "collapsed NPTN path assumes G=1 (module default)"
    scale = gamma * jax.lax.rsqrt(var + eps)
    shift = beta - mean * scale
    # feature order must match im2col: index = (kh*K+kw)*Cin + cin
    wf = jnp.transpose(w[:, 0], (1, 0, 2)).reshape(kk * cin, cout)
    wf = wf * (scale[None, :] / cin)
    bf = jnp.mean(b[:, 0], axis=0) * scale + shift
    w_pad = jnp.zeros((ck_pad, cpad), jnp.float32).at[:kk * cin, :cout].set(wf)
    b_pad = jnp.zeros((1, cpad), jnp.float32).at[:, :cout].set(bf)
    return w_pad.astype(jnp.bfloat16), b_pad


def _fold_fc(fc_w, fc_b, c_real=C2_OUT, p=P2, cpad=CPAD, dpad=CPAD):
    """torch's .view flatten index is c*25 + q (q = h*5 + w); reorder the weight
    to wfc[q, c, dout] so the kernel consumes the lane-dense pooled activation
    directly; pad channels 16 -> 128 and classes 10 -> 128 (lane-dense output)."""
    dout = fc_w.shape[0]
    w = jnp.transpose(fc_w.reshape(dout, c_real, p), (2, 1, 0))    # (q, c, dout)
    w_pad = jnp.zeros((p, cpad, dpad), jnp.float32).at[:, :c_real, :dout].set(w)
    b_pad = jnp.zeros((1, dpad), jnp.float32).at[:, :dout].set(fc_b)
    return w_pad.astype(jnp.bfloat16), b_pad


def prepare_params(raw):
    w1, b1 = _fold_conv_bn(raw["w1"], raw["b1"], raw["bn1"], CK1_PAD)
    w2, b2 = _fold_conv_bn(raw["w2"], raw["b2"], raw["bn2"], CK2_PAD)
    wfc, bfc = _fold_fc(raw["fc_w"], raw["fc_b"])
    return dict(
        w1=w1, b1=b1, alpha1=jnp.asarray(raw["alpha1"], jnp.float32).reshape(1),
        w2=w2, b2=b2, alpha2=jnp.asarray(raw["alpha2"], jnp.float32).reshape(1),
        wfc=wfc, bfc=bfc)


if __name__ == "__main__":
    key = jax.random.PRNGKey(0)
    pkey, xkey = jax.random.split(key)
    params = prepare_params(init_raw_params(pkey))
    # 32x32 spatial is required by fc1 = Linear(16*5*5, 10); batch=2, 3 channels.
    x = jax.random.normal(xkey, (2, 3, 32, 32), jnp.float32)   # NCHW (PyTorch layout)
    fwd = jax.jit(lambda a: lenet_nptn_forward(a, params))
    out = fwd(x)
    jax.block_until_ready(out)
    assert out.shape == (2, NUM_CLASSES) and out.dtype == jnp.float32
    print("KERNEL_OK")
</pallas_src>

<mosaic_0001>
module attributes {stable_mosaic.version = 11 : i64} {
  func.func @_conv_pool_act_kernel(%arg0: i32, %arg1: memref<1x4x208x128xbf16, #tpu.memory_space<vmem>>, %arg2: memref<128x128xbf16, #tpu.memory_space<vmem>>, %arg3: memref<1x128xf32, #tpu.memory_space<vmem>>, %arg4: memref<1xf32, #tpu.memory_space<smem>>, %arg5: memref<1x208x128xbf16, #tpu.memory_space<vmem>>) attributes {dimension_semantics = [#tpu.dimension_semantics<parallel>], iteration_bounds = array<i64: 2>, scalar_prefetch = 0 : i64, scratch_operands = 0 : i64, tpu.core_type = #tpu.core_type<tc>, window_params = [{transform_indices = @transform_0, window_bounds = array<i64: 1, 4, 208, 128>}, {pipeline_mode = #tpu.pipeline_mode<synchronous>, transform_indices = @transform_1, window_bounds = array<i64: 128, 128>}, {pipeline_mode = #tpu.pipeline_mode<synchronous>, transform_indices = @transform_2, window_bounds = array<i64: 1, 128>}, {transform_indices = @transform_3, window_bounds = array<i64: 1>}, {transform_indices = @transform_4, window_bounds = array<i64: 1, 208, 128>}]} {
    %c0 = arith.constant 0 : index
    %c0_0 = arith.constant 0 : index
    %c0_1 = arith.constant 0 : index
    %c0_2 = arith.constant 0 : index
    %0 = vector.load %arg1[%c0, %c0_0, %c0_1, %c0_2] : memref<1x4x208x128xbf16, #tpu.memory_space<vmem>>, vector<1x4x208x128xbf16>
    %1 = vector.shape_cast %0 : vector<1x4x208x128xbf16> to vector<832x128xbf16>
    %c0_3 = arith.constant 0 : index
    %c0_4 = arith.constant 0 : index
    %2 = vector.load %arg2[%c0_3, %c0_4] : memref<128x128xbf16, #tpu.memory_space<vmem>>, vector<128x128xbf16>
    %cst = arith.constant dense<0.000000e+00> : vector<832x128xf32>
    %3 = tpu.matmul %1, %2, %cst {dimension_numbers = #tpu.dot_dimension_numbers<[1], [0], [0], [1], [0, 0, 1, 1], [], []>} : vector<832x128xbf16>, vector<128x128xbf16>, vector<832x128xf32> -> vector<832x128xf32>
    %4 = vector.shape_cast %3 : vector<832x128xf32> to vector<1x4x208x128xf32>
    %5 = vector.extract_strided_slice %4 {offsets = [0, 0, 0, 0], sizes = [1, 1, 208, 128], strides = [1, 1, 1, 1]} : vector<1x4x208x128xf32> to vector<1x1x208x128xf32>
    %6 = vector.shape_cast %5 : vector<1x1x208x128xf32> to vector<1x208x128xf32>
    %7 = vector.extract_strided_slice %4 {offsets = [0, 1, 0, 0], sizes = [1, 1, 208, 128], strides = [1, 1, 1, 1]} : vector<1x4x208x128xf32> to vector<1x1x208x128xf32>
    %8 = vector.shape_cast %7 : vector<1x1x208x128xf32> to vector<1x208x128xf32>
    %9 = arith.maximumf %6, %8 : vector<1x208x128xf32>
    %10 = vector.extract_strided_slice %4 {offsets = [0, 2, 0, 0], sizes = [1, 1, 208, 128], strides = [1, 1, 1, 1]} : vector<1x4x208x128xf32> to vector<1x1x208x128xf32>
    %11 = vector.shape_cast %10 : vector<1x1x208x128xf32> to vector<1x208x128xf32>
    %12 = vector.extract_strided_slice %4 {offsets = [0, 3, 0, 0], sizes = [1, 1, 208, 128], strides = [1, 1, 1, 1]} : vector<1x4x208x128xf32> to vector<1x1x208x128xf32>
    %13 = vector.shape_cast %12 : vector<1x1x208x128xf32> to vector<1x208x128xf32>
    %14 = arith.maximumf %11, %13 : vector<1x208x128xf32>
    %15 = arith.maximumf %9, %14 : vector<1x208x128xf32>
    %c0_5 = arith.constant 0 : index
    %c0_6 = arith.constant 0 : index
    %16 = vector.load %arg3[%c0_5, %c0_6] : memref<1x128xf32, #tpu.memory_space<vmem>>, vector<1x128xf32>
    %17 = vector.shape_cast %16 : vector<1x128xf32> to vector<1x1x128xf32>
    %18 = vector.broadcast %17 : vector<1x1x128xf32> to vector<1x208x128xf32>
    %19 = arith.addf %15, %18 : vector<1x208x128xf32>
    %c0_7 = arith.constant 0 : index
    %20 = memref.load %arg4[%c0_7] : memref<1xf32, #tpu.memory_space<smem>>
    %cst_8 = arith.constant 0.000000e+00 : f32
    %21 = vector.broadcast %cst_8 : f32 to vector<1x208x128xf32>
    %22 = arith.cmpf oge, %19, %21 : vector<1x208x128xf32>
    %23 = vector.broadcast %20 : f32 to vector<1x208x128xf32>
    %24 = arith.mulf %23, %19 : vector<1x208x128xf32>
    %25 = arith.select %22, %19, %24 : vector<1x208x128xi1>, vector<1x208x128xf32>
    %26 = arith.truncf %25 : vector<1x208x128xf32> to vector<1x208x128xbf16>
    %c0_9 = arith.constant 0 : index
    %c0_10 = arith.constant 0 : index
    %c0_11 = arith.constant 0 : index
    %27 = vector.load %arg5[%c0_9, %c0_10, %c0_11] : memref<1x208x128xbf16, #tpu.memory_space<vmem>>, vector<1x208x128xbf16>
    tpu.vector_store %arg5[%c0_9, %c0_10, %c0_11], %26 {strides = array<i32>} : memref<1x208x128xbf16, #tpu.memory_space<vmem>>, vector<1x208x128xbf16>,
    return
  }
  func.func @transform_0(%arg0: i32) -> (i32, i32, i32, i32) {
    %c0_i32 = arith.constant 0 : i32
    %c0_i32_0 = arith.constant 0 : i32
    %c0_i32_1 = arith.constant 0 : i32
    %c0_i32_2 = arith.constant 0 : i32
    return %arg0, %c0_i32, %c0_i32_0, %c0_i32_1 : i32, i32, i32, i32
  }
  func.func @transform_1(%arg0: i32) -> (i32, i32) {
    %c0_i32 = arith.constant 0 : i32
    %c0_i32_0 = arith.constant 0 : i32
    %c0_i32_1 = arith.constant 0 : i32
    return %c0_i32, %c0_i32_0 : i32, i32
  }
  func.func @transform_2(%arg0: i32) -> (i32, i32) {
    %c0_i32 = arith.constant 0 : i32
    %c0_i32_0 = arith.constant 0 : i32
    %c0_i32_1 = arith.constant 0 : i32
    return %c0_i32, %c0_i32_0 : i32, i32
  }
  func.func @transform_3(%arg0: i32) -> i32 {
    %c0_i32 = arith.constant 0 : i32
    %c0_i32_0 = arith.constant 0 : i32
    return %c0_i32 : i32
  }
  func.func @transform_4(%arg0: i32) -> (i32, i32, i32) {
    %c0_i32 = arith.constant 0 : i32
    %c0_i32_0 = arith.constant 0 : i32
    %c0_i32_1 = arith.constant 0 : i32
    return %arg0, %c0_i32, %c0_i32_0 : i32, i32, i32
  }
}

module attributes {stable_mosaic.version = 11 : i64} {
  func.func @_conv_pool_act_fc_kernel(%arg0: i32, %arg1: memref<1x4x32x1280xbf16, #tpu.memory_space<vmem>>, %arg2: memref<1280x128xbf16, #tpu.memory_space<vmem>>, %arg3: memref<1x128xf32, #tpu.memory_space<vmem>>, %arg4: memref<1xf32, #tpu.memory_space<smem>>, %arg5: memref<25x128x128xbf16, #tpu.memory_space<vmem>>, %arg6: memref<1x128xf32, #tpu.memory_space<vmem>>, %arg7: memref<1x1x128xf32, #tpu.memory_space<vmem>>) attributes {dimension_semantics = [#tpu.dimension_semantics<parallel>], iteration_bounds = array<i64: 2>, scalar_prefetch = 0 : i64, scratch_operands = 0 : i64, tpu.core_type = #tpu.core_type<tc>, window_params = [{transform_indices = @transform_0, window_bounds = array<i64: 1, 4, 32, 1280>}, {pipeline_mode = #tpu.pipeline_mode<synchronous>, transform_indices = @transform_1, window_bounds = array<i64: 1280, 128>}, {pipeline_mode = #tpu.pipeline_mode<synchronous>, transform_indices = @transform_2, window_bounds = array<i64: 1, 128>}, {transform_indices = @transform_3, window_bounds = array<i64: 1>}, {pipeline_mode = #tpu.pipeline_mode<synchronous>, transform_indices = @transform_4, window_bounds = array<i64: 25, 128, 128>}, {pipeline_mode = #tpu.pipeline_mode<synchronous>, transform_indices = @transform_5, window_bounds = array<i64: 1, 128>}, {transform_indices = @transform_6, window_bounds = array<i64: 1, 1, 128>}]} {
    %c0 = arith.constant 0 : index
    %c0_0 = arith.constant 0 : index
    %c0_1 = arith.constant 0 : index
    %c0_2 = arith.constant 0 : index
    %0 = vector.load %arg1[%c0, %c0_0, %c0_1, %c0_2] : memref<1x4x32x1280xbf16, #tpu.memory_space<vmem>>, vector<1x4x32x1280xbf16>
    %1 = vector.shape_cast %0 : vector<1x4x32x1280xbf16> to vector<128x1280xbf16>
    %c0_3 = arith.constant 0 : index
    %c0_4 = arith.constant 0 : index
    %2 = vector.load %arg2[%c0_3, %c0_4] : memref<1280x128xbf16, #tpu.memory_space<vmem>>, vector<1280x128xbf16>
    %cst = arith.constant dense<0.000000e+00> : vector<128x128xf32>
    %3 = tpu.matmul %1, %2, %cst {dimension_numbers = #tpu.dot_dimension_numbers<[1], [0], [0], [1], [0, 0, 1, 1], [], []>} : vector<128x1280xbf16>, vector<1280x128xbf16>, vector<128x128xf32> -> vector<128x128xf32>
    %4 = vector.shape_cast %3 : vector<128x128xf32> to vector<1x4x32x128xf32>
    %5 = vector.extract_strided_slice %4 {offsets = [0, 0, 0, 0], sizes = [1, 1, 32, 128], strides = [1, 1, 1, 1]} : vector<1x4x32x128xf32> to vector<1x1x32x128xf32>
    %6 = vector.shape_cast %5 : vector<1x1x32x128xf32> to vector<1x32x128xf32>
    %7 = vector.extract_strided_slice %4 {offsets = [0, 1, 0, 0], sizes = [1, 1, 32, 128], strides = [1, 1, 1, 1]} : vector<1x4x32x128xf32> to vector<1x1x32x128xf32>
    %8 = vector.shape_cast %7 : vector<1x1x32x128xf32> to vector<1x32x128xf32>
    %9 = arith.maximumf %6, %8 : vector<1x32x128xf32>
    %10 = vector.extract_strided_slice %4 {offsets = [0, 2, 0, 0], sizes = [1, 1, 32, 128], strides = [1, 1, 1, 1]} : vector<1x4x32x128xf32> to vector<1x1x32x128xf32>
    %11 = vector.shape_cast %10 : vector<1x1x32x128xf32> to vector<1x32x128xf32>
    %12 = vector.extract_strided_slice %4 {offsets = [0, 3, 0, 0], sizes = [1, 1, 32, 128], strides = [1, 1, 1, 1]} : vector<1x4x32x128xf32> to vector<1x1x32x128xf32>
    %13 = vector.shape_cast %12 : vector<1x1x32x128xf32> to vector<1x32x128xf32>
    %14 = arith.maximumf %11, %13 : vector<1x32x128xf32>
    %15 = arith.maximumf %9, %14 : vector<1x32x128xf32>
    %c0_5 = arith.constant 0 : index
    %c0_6 = arith.constant 0 : index
    %16 = vector.load %arg3[%c0_5, %c0_6] : memref<1x128xf32, #tpu.memory_space<vmem>>, vector<1x128xf32>
    %17 = vector.shape_cast %16 : vector<1x128xf32> to vector<1x1x128xf32>
    %18 = vector.broadcast %17 : vector<1x1x128xf32> to vector<1x32x128xf32>
    %19 = arith.addf %15, %18 : vector<1x32x128xf32>
    %c0_7 = arith.constant 0 : index
    %20 = memref.load %arg4[%c0_7] : memref<1xf32, #tpu.memory_space<smem>>
    %cst_8 = arith.constant 0.000000e+00 : f32
    %21 = vector.broadcast %cst_8 : f32 to vector<1x32x128xf32>
    %22 = arith.cmpf oge, %19, %21 : vector<1x32x128xf32>
    %23 = vector.broadcast %20 : f32 to vector<1x32x128xf32>
    %24 = arith.mulf %23, %19 : vector<1x32x128xf32>
    %25 = arith.select %22, %19, %24 : vector<1x32x128xi1>, vector<1x32x128xf32>
    %cst_9 = arith.constant 0.000000e+00 : f32
    %26 = vector.broadcast %cst_9 : f32 to vector<1x128xf32>
    %27 = vector.extract_strided_slice %25 {offsets = [0, 0, 0], sizes = [1, 1, 128], strides = [1, 1, 1]} : vector<1x32x128xf32> to vector<1x1x128xf32>
    %28 = vector.shape_cast %27 : vector<1x1x128xf32> to vector<1x128xf32>
    %29 = arith.truncf %28 : vector<1x128xf32> to vector<1x128xbf16>
    %c0_10 = arith.constant 0 : index
    %c0_11 = arith.constant 0 : index
    %c0_12 = arith.constant 0 : index
    %30 = vector.load %arg5[%c0_10, %c0_11, %c0_12] : memref<25x128x128xbf16, #tpu.memory_space<vmem>>, vector<1x128x128xbf16>
    %31 = vector.shape_cast %30 : vector<1x128x128xbf16> to vector<128x128xbf16>
    %cst_13 = arith.constant dense<0.000000e+00> : vector<1x128xf32>
    %32 = tpu.matmul %29, %31, %cst_13 {dimension_numbers = #tpu.dot_dimension_numbers<[1], [0], [0], [1], [0, 0, 1, 1], [], []>} : vector<1x128xbf16>, vector<128x128xbf16>, vector<1x128xf32> -> vector<1x128xf32>
    %33 = arith.addf %26, %32 : vector<1x128xf32>
    %34 = vector.extract_strided_slice %25 {offsets = [0, 1, 0], sizes = [1, 1, 128], strides = [1, 1, 1]} : vector<1x32x128xf32> to vector<1x1x128xf32>
    %35 = vector.shape_cast %34 : vector<1x1x128xf32> to vector<1x128xf32>
    %36 = arith.truncf %35 : vector<1x128xf32> to vector<1x128xbf16>
    %c1 = arith.constant 1 : index
    %c0_14 = arith.constant 0 : index
    %c0_15 = arith.constant 0 : index
    %37 = vector.load %arg5[%c1, %c0_14, %c0_15] : memref<25x128x128xbf16, #tpu.memory_space<vmem>>, vector<1x128x128xbf16>
    %38 = vector.shape_cast %37 : vector<1x128x128xbf16> to vector<128x128xbf16>
    %cst_16 = arith.constant dense<0.000000e+00> : vector<1x128xf32>
    %39 = tpu.matmul %36, %38, %cst_16 {dimension_numbers = #tpu.dot_dimension_numbers<[1], [0], [0], [1], [0, 0, 1, 1], [], []>} : vector<1x128xbf16>, vector<128x128xbf16>, vector<1x128xf32> -> vector<1x128xf32>
    %40 = arith.addf %33, %39 : vector<1x128xf32>
    %41 = vector.extract_strided_slice %25 {offsets = [0, 2, 0], sizes = [1, 1, 128], strides = [1, 1, 1]} : vector<1x32x128xf32> to vector<1x1x128xf32>
    %42 = vector.shape_cast %41 : vector<1x1x128xf32> to vector<1x128xf32>
    %43 = arith.truncf %42 : vector<1x128xf32> to vector<1x128xbf16>
    %c2 = arith.constant 2 : index
    %c0_17 = arith.constant 0 : index
    %c0_18 = arith.constant 0 : index
    %44 = vector.load %arg5[%c2, %c0_17, %c0_18] : memref<25x128x128xbf16, #tpu.memory_space<vmem>>, vector<1x128x128xbf16>
    %45 = vector.shape_cast %44 : vector<1x128x128xbf16> to vector<128x128xbf16>
    %cst_19 = arith.constant dense<0.000000e+00> : vector<1x128xf32>
    %46 = tpu.matmul %43, %45, %cst_19 {dimension_numbers = #tpu.dot_dimension_numbers<[1], [0], [0], [1], [0, 0, 1, 1], [], []>} : vector<1x128xbf16>, vector<128x128xbf16>, vector<1x128xf32> -> vector<1x128xf32>
    %47 = arith.addf %40, %46 : vector<1x128xf32>
    %48 = vector.extract_strided_slice %25 {offsets = [0, 3, 0], sizes = [1, 1, 128], strides = [1, 1, 1]} : vector<1x32x128xf32> to vector<1x1x128xf32>
    %49 = vector.shape_cast %48 : vector<1x1x128xf32> to vector<1x128xf32>
    %50 = arith.truncf %49 : vector<1x128xf32> to vector<1x128xbf16>
    %c3 = arith.constant 3 : index
    %c0_20 = arith.constant 0 : index
    %c0_21 = arith.constant 0 : index
    %51 = vector.load %arg5[%c3, %c0_20, %c0_21] : memref<25x128x128xbf16, #tpu.memory_space<vmem>>, vector<1x128x128xbf16>
    %52 = vector.shape_cast %51 : vector<1x128x128xbf16> to vector<128x128xbf16>
    %cst_22 = arith.constant dense<0.000000e+00> : vector<1x128xf32>
    %53 = tpu.matmul %50, %52, %cst_22 {dimension_numbers = #tpu.dot_dimension_numbers<[1], [0], [0], [1], [0, 0, 1, 1], [], []>} : vector<1x128xbf16>, vector<128x128xbf16>, vector<1x128xf32> -> vector<1x128xf32>
    %54 = arith.addf %47, %53 : vector<1x128xf32>
    %55 = vector.extract_strided_slice %25 {offsets = [0, 4, 0], sizes = [1, 1, 128], strides = [1, 1, 1]} : vector<1x32x128xf32> to vector<1x1x128xf32>
    %56 = vector.shape_cast %55 : vector<1x1x128xf32> to vector<1x128xf32>
    %57 = arith.truncf %56 : vector<1x128xf32> to vector<1x128xbf16>
    %c4 = arith.constant 4 : index
    %c0_23 = arith.constant 0 : index
    %c0_24 = arith.constant 0 : index
    %58 = vector.load %arg5[%c4, %c0_23, %c0_24] : memref<25x128x128xbf16, #tpu.memory_space<vmem>>, vector<1x128x128xbf16>
    %59 = vector.shape_cast %58 : vector<1x128x128xbf16> to vector<128x128xbf16>
    %cst_25 = arith.constant dense<0.000000e+00> : vector<1x128xf32>
    %60 = tpu.matmul %57, %59, %cst_25 {dimension_numbers = #tpu.dot_dimension_numbers<[1], [0], [0], [1], [0, 0, 1, 1], [], []>} : vector<1x128xbf16>, vector<128x128xbf16>, vector<1x128xf32> -> vector<1x128xf32>
    %61 = arith.addf %54, %60 : vector<1x128xf32>
    %62 = vector.extract_strided_slice %25 {offsets = [0, 5, 0], sizes = [1, 1, 128], strides = [1, 1, 1]} : vector<1x32x128xf32> to vector<1x1x128xf32>
    %63 = vector.shape_cast %62 : vector<1x1x128xf32> to vector<1x128xf32>
    %64 = arith.truncf %63 : vector<1x128xf32> to vector<1x128xbf16>
    %c5 = arith.constant 5 : index
    %c0_26 = arith.constant 0 : index
    %c0_27 = arith.constant 0 : index
    %65 = vector.load %arg5[%c5, %c0_26, %c0_27] : memref<25x128x128xbf16, #tpu.memory_space<vmem>>, vector<1x128x128xbf16>
    %66 = vector.shape_cast %65 : vector<1x128x128xbf16> to vector<128x128xbf16>
    %cst_28 = arith.constant dense<0.000000e+00> : vector<1x128xf32>
    %67 = tpu.matmul %64, %66, %cst_28 {dimension_numbers = #tpu.dot_dimension_numbers<[1], [0], [0], [1], [0, 0, 1, 1], [], []>} : vector<1x128xbf16>, vector<128x128xbf16>, vector<1x128xf32> -> vector<1x128xf32>
    %68 = arith.addf %61, %67 : vector<1x128xf32>
    %69 = vector.extract_strided_slice %25 {offsets = [0, 6, 0], sizes = [1, 1, 128], strides = [1, 1, 1]} : vector<1x32x128xf32> to vector<1x1x128xf32>
    %70 = vector.shape_cast %69 : vector<1x1x128xf32> to vector<1x128xf32>
    %71 = arith.truncf %70 : vector<1x128xf32> to vector<1x128xbf16>
    %c6 = arith.constant 6 : index
    %c0_29 = arith.constant 0 : index
    %c0_30 = arith.constant 0 : index
    %72 = vector.load %arg5[%c6, %c0_29, %c0_30] : memref<25x128x128xbf16, #tpu.memory_space<vmem>>, vector<1x128x128xbf16>
    %73 = vector.shape_cast %72 : vector<1x128x128xbf16> to vector<128x128xbf16>
    %cst_31 = arith.constant dense<0.000000e+00> : vector<1x128xf32>
    %74 = tpu.matmul %71, %73, %cst_31 {dimension_numbers = #tpu.dot_dimension_numbers<[1], [0], [0], [1], [0, 0, 1, 1], [], []>} : vector<1x128xbf16>, vector<128x128xbf16>, vector<1x128xf32> -> vector<1x128xf32>
    %75 = arith.addf %68, %74 : vector<1x128xf32>
    %76 = vector.extract_strided_slice %25 {offsets = [0, 7, 0], sizes = [1, 1, 128], strides = [1, 1, 1]} : vector<1x32x128xf32> to vector<1x1x128xf32>
    %77 = vector.shape_cast %76 : vector<1x1x128xf32> to vector<1x128xf32>
    %78 = arith.truncf %77 : vector<1x128xf32> to vector<1x128xbf16>
    %c7 = arith.constant 7 : index
    %c0_32 = arith.constant 0 : index
    %c0_33 = arith.constant 0 : index
    %79 = vector.load %arg5[%c7, %c0_32, %c0_33] : memref<25x128x128xbf16, #tpu.memory_space<vmem>>, vector<1x128x128xbf16>
    %80 = vector.shape_cast %79 : vector<1x128x128xbf16> to vector<128x128xbf16>
    %cst_34 = arith.constant dense<0.000000e+00> : vector<1x128xf32>
    %81 = tpu.matmul %78, %80, %cst_34 {dimension_numbers = #tpu.dot_dimension_numbers<[1], [0], [0], [1], [0, 0, 1, 1], [], []>} : vector<1x128xbf16>, vector<128x128xbf16>, vector<1x128xf32> -> vector<1x128xf32>
    %82 = arith.addf %75, %81 : vector<1x128xf32>
    %83 = vector.extract_strided_slice %25 {offsets = [0, 8, 0], sizes = [1, 1, 128], strides = [1, 1, 1]} : vector<1x32x128xf32> to vector<1x1x128xf32>
    %84 = vector.shape_cast %83 : vector<1x1x128xf32> to vector<1x128xf32>
    %85 = arith.truncf %84 : vector<1x128xf32> to vector<1x128xbf16>
    %c8 = arith.constant 8 : index
    %c0_35 = arith.constant 0 : index
    %c0_36 = arith.constant 0 : index
    %86 = vector.load %arg5[%c8, %c0_35, %c0_36] : memref<25x128x128xbf16, #tpu.memory_space<vmem>>, vector<1x128x128xbf16>
    %87 = vector.shape_cast %86 : vector<1x128x128xbf16> to vector<128x128xbf16>
    %cst_37 = arith.constant dense<0.000000e+00> : vector<1x128xf32>
    %88 = tpu.matmul %85, %87, %cst_37 {dimension_numbers = #tpu.dot_dimension_numbers<[1], [0], [0], [1], [0, 0, 1, 1], [], []>} : vector<1x128xbf16>, vector<128x128xbf16>, vector<1x128xf32> -> vector<1x128xf32>
    %89 = arith.addf %82, %88 : vector<1x128xf32>
    %90 = vector.extract_strided_slice %25 {offsets = [0, 9, 0], sizes = [1, 1, 128], strides = [1, 1, 1]} : vector<1x32x128xf32> to vector<1x1x128xf32>
    %91 = vector.shape_cast %90 : vector<1x1x128xf32> to vector<1x128xf32>
    %92 = arith.truncf %91 : vector<1x128xf32> to vector<1x128xbf16>
    %c9 = arith.constant 9 : index
    %c0_38 = arith.constant 0 : index
    %c0_39 = arith.constant 0 : index
    %93 = vector.load %arg5[%c9, %c0_38, %c0_39] : memref<25x128x128xbf16, #tpu.memory_space<vmem>>, vector<1x128x128xbf16>
    %94 = vector.shape_cast %93 : vector<1x128x128xbf16> to vector<128x128xbf16>
    %cst_40 = arith.constant dense<0.000000e+00> : vector<1x128xf32>
    %95 = tpu.matmul %92, %94, %cst_40 {dimension_numbers = #tpu.dot_dimension_numbers<[1], [0], [0], [1], [0, 0, 1, 1], [], []>} : vector<1x128xbf16>, vector<128x128xbf16>, vector<1x128xf32> -> vector<1x128xf32>
    %96 = arith.addf %89, %95 : vector<1x128xf32>
    %97 = vector.extract_strided_slice %25 {offsets = [0, 10, 0], sizes = [1, 1, 128], strides = [1, 1, 1]} : vector<1x32x128xf32> to vector<1x1x128xf32>
    %98 = vector.shape_cast %97 : vector<1x1x128xf32> to vector<1x128xf32>
    %99 = arith.truncf %98 : vector<1x128xf32> to vector<1x128xbf16>
    %c10 = arith.constant 10 : index
    %c0_41 = arith.constant 0 : index
    %c0_42 = arith.constant 0 : index
    %100 = vector.load %arg5[%c10, %c0_41, %c0_42] : memref<25x128x128xbf16, #tpu.memory_space<vmem>>, vector<1x128x128xbf16>
    %101 = vector.shape_cast %100 : vector<1x128x128xbf16> to vector<128x128xbf16>
    %cst_43 = arith.constant dense<0.000000e+00> : vector<1x128xf32>
    %102 = tpu.matmul %99, %101, %cst_43 {dimension_numbers = #tpu.dot_dimension_numbers<[1], [0], [0], [1], [0, 0, 1, 1], [], []>} : vector<1x128xbf16>, vector<128x128xbf16>, vector<1x128xf32> -> vector<1x128xf32>
    %103 = arith.addf %96, %102 : vector<1x128xf32>
    %104 = vector.extract_strided_slice %25 {offsets = [0, 11, 0], sizes = [1, 1, 128], strides = [1, 1, 1]} : vector<1x32x128xf32> to vector<1x1x128xf32>
    %105 = vector.shape_cast %104 : vector<1x1x128xf32> to vector<1x128xf32>
    %106 = arith.truncf %105 : vector<1x128xf32> to vector<1x128xbf16>
    %c11 = arith.constant 11 : index
    %c0_44 = arith.constant 0 : index
    %c0_45 = arith.constant 0 : index
    %107 = vector.load %arg5[%c11, %c0_44, %c0_45] : memref<25x128x128xbf16, #tpu.memory_space<vmem>>, vector<1x128x128xbf16>
    %108 = vector.shape_cast %107 : vector<1x128x128xbf16> to vector<128x128xbf16>
    %cst_46 = arith.constant dense<0.000000e+00> : vector<1x128xf32>
    %109 = tpu.matmul %106, %108, %cst_46 {dimension_numbers = #tpu.dot_dimension_numbers<[1], [0], [0], [1], [0, 0, 1, 1], [], []>} : vector<1x128xbf16>, vector<128x128xbf16>, vector<1x128xf32> -> vector<1x128xf32>
    %110 = arith.addf %103, %109 : vector<1x128xf32>
    %111 = vector.extract_strided_slice %25 {offsets = [0, 12, 0], sizes = [1, 1, 128], strides = [1, 1, 1]} : vector<1x32x128xf32> to vector<1x1x128xf32>
    %112 = vector.shape_cast %111 : vector<1x1x128xf32> to vector<1x128xf32>
    %113 = arith.truncf %112 : vector<1x128xf32> to vector<1x128xbf16>
    %c12 = arith.constant 12 : index
    %c0_47 = arith.constant 0 : index
    %c0_48 = arith.constant 0 : index
    %114 = vector.load %arg5[%c12, %c0_47, %c0_48] : memref<25x128x128xbf16, #tpu.memory_space<vmem>>, vector<1x128x128xbf16>
    %115 = vector.shape_cast %114 : vector<1x128x128xbf16> to vector<128x128xbf16>
    %cst_49 = arith.constant dense<0.000000e+00> : vector<1x128xf32>
    %116 = tpu.matmul %113, %115, %cst_49 {dimension_numbers = #tpu.dot_dimension_numbers<[1], [0], [0], [1], [0, 0, 1, 1], [], []>} : vector<1x128xbf16>, vector<128x128xbf16>, vector<1x128xf32> -> vector<1x128xf32>
    %117 = arith.addf %110, %116 : vector<1x128xf32>
    %118 = vector.extract_strided_slice %25 {offsets = [0, 13, 0], sizes = [1, 1, 128], strides = [1, 1, 1]} : vector<1x32x128xf32> to vector<1x1x128xf32>
    %119 = vector.shape_cast %118 : vector<1x1x128xf32> to vector<1x128xf32>
    %120 = arith.truncf %119 : vector<1x128xf32> to vector<1x128xbf16>
    %c13 = arith.constant 13 : index
    %c0_50 = arith.constant 0 : index
    %c0_51 = arith.constant 0 : index
    %121 = vector.load %arg5[%c13, %c0_50, %c0_51] : memref<25x128x128xbf16, #tpu.memory_space<vmem>>, vector<1x128x128xbf16>
    %122 = vector.shape_cast %121 : vector<1x128x128xbf16> to vector<128x128xbf16>
    %cst_52 = arith.constant dense<0.000000e+00> : vector<1x128xf32>
    %123 = tpu.matmul %120, %122, %cst_52 {dimension_numbers = #tpu.dot_dimension_numbers<[1], [0], [0], [1], [0, 0, 1, 1], [], []>} : vector<1x128xbf16>, vector<128x128xbf16>, vector<1x128xf32> -> vector<1x128xf32>
    %124 = arith.addf %117, %123 : vector<1x128xf32>
    %125 = vector.extract_strided_slice %25 {offsets = [0, 14, 0], sizes = [1, 1, 128], strides = [1, 1, 1]} : vector<1x32x128xf32> to vector<1x1x128xf32>
    %126 = vector.shape_cast %125 : vector<1x1x128xf32> to vector<1x128xf32>
    %127 = arith.truncf %126 : vector<1x128xf32> to vector<1x128xbf16>
    %c14 = arith.constant 14 : index
    %c0_53 = arith.constant 0 : index
    %c0_54 = arith.constant 0 : index
    %128 = vector.load %arg5[%c14, %c0_53, %c0_54] : memref<25x128x128xbf16, #tpu.memory_space<vmem>>, vector<1x128x128xbf16>
    %129 = vector.shape_cast %128 : vector<1x128x128xbf16> to vector<128x128xbf16>
    %cst_55 = arith.constant dense<0.000000e+00> : vector<1x128xf32>
    %130 = tpu.matmul %127, %129, %cst_55 {dimension_numbers = #tpu.dot_dimension_numbers<[1], [0], [0], [1], [0, 0, 1, 1], [], []>} : vector<1x128xbf16>, vector<128x128xbf16>, vector<1x128xf32> -> vector<1x128xf32>
    %131 = arith.addf %124, %130 : vector<1x128xf32>
    %132 = vector.extract_strided_slice %25 {offsets = [0, 15, 0], sizes = [1, 1, 128], strides = [1, 1, 1]} : vector<1x32x128xf32> to vector<1x1x128xf32>
    %133 = vector.shape_cast %132 : vector<1x1x128xf32> to vector<1x128xf32>
    %134 = arith.truncf %133 : vector<1x128xf32> to vector<1x128xbf16>
    %c15 = arith.constant 15 : index
    %c0_56 = arith.constant 0 : index
    %c0_57 = arith.constant 0 : index
    %135 = vector.load %arg5[%c15, %c0_56, %c0_57] : memref<25x128x128xbf16, #tpu.memory_space<vmem>>, vector<1x128x128xbf16>
    %136 = vector.shape_cast %135 : vector<1x128x128xbf16> to vector<128x128xbf16>
    %cst_58 = arith.constant dense<0.000000e+00> : vector<1x128xf32>
    %137 = tpu.matmul %134, %136, %cst_58 {dimension_numbers = #tpu.dot_dimension_numbers<[1], [0], [0], [1], [0, 0, 1, 1], [], []>} : vector<1x128xbf16>, vector<128x128xbf16>, vector<1x128xf32> -> vector<1x128xf32>
    %138 = arith.addf %131, %137 : vector<1x128xf32>
    %139 = vector.extract_strided_slice %25 {offsets = [0, 16, 0], sizes = [1, 1, 128], strides = [1, 1, 1]} : vector<1x32x128xf32> to vector<1x1x128xf32>
    %140 = vector.shape_cast %139 : vector<1x1x128xf32> to vector<1x128xf32>
    %141 = arith.truncf %140 : vector<1x128xf32> to vector<1x128xbf16>
    %c16 = arith.constant 16 : index
    %c0_59 = arith.constant 0 : index
    %c0_60 = arith.constant 0 : index
    %142 = vector.load %arg5[%c16, %c0_59, %c0_60] : memref<25x128x128xbf16, #tpu.memory_space<vmem>>, vector<1x128x128xbf16>
    %143 = vector.shape_cast %142 : vector<1x128x128xbf16> to vector<128x128xbf16>
    %cst_61 = arith.constant dense<0.000000e+00> : vector<1x128xf32>
    %144 = tpu.matmul %141, %143, %cst_61 {dimension_numbers = #tpu.dot_dimension_numbers<[1], [0], [0], [1], [0, 0, 1, 1], [], []>} : vector<1x128xbf16>, vector<128x128xbf16>, vector<1x128xf32> -> vector<1x128xf32>
    %145 = arith.addf %138, %144 : vector<1x128xf32>
    %146 = vector.extract_strided_slice %25 {offsets = [0, 17, 0], sizes = [1, 1, 128], strides = [1, 1, 1]} : vector<1x32x128xf32> to vector<1x1x128xf32>
    %147 = vector.shape_cast %146 : vector<1x1x128xf32> to vector<1x128xf32>
    %148 = arith.truncf %147 : vector<1x128xf32> to vector<1x128xbf16>
    %c17 = arith.constant 17 : index
    %c0_62 = arith.constant 0 : index
    %c0_63 = arith.constant 0 : index
    %149 = vector.load %arg5[%c17, %c0_62, %c0_63] : memref<25x128x128xbf16, #tpu.memory_space<vmem>>, vector<1x128x128xbf16>
    %150 = vector.shape_cast %149 : vector<1x128x128xbf16> to vector<128x128xbf16>
    %cst_64 = arith.constant dense<0.000000e+00> : vector<1x128xf32>
    %151 = tpu.matmul %148, %150, %cst_64 {dimension_numbers = #tpu.dot_dimension_numbers<[1], [0], [0], [1], [0, 0, 1, 1], [], []>} : vector<1x128xbf16>, vector<128x128xbf16>, vector<1x128xf32> -> vector<1x128xf32>
    %152 = arith.addf %145, %151 : vector<1x128xf32>
    %153 = vector.extract_strided_slice %25 {offsets = [0, 18, 0], sizes = [1, 1, 128], strides = [1, 1, 1]} : vector<1x32x128xf32> to vector<1x1x128xf32>
    %154 = vector.shape_cast %153 : vector<1x1x128xf32> to vector<1x128xf32>
    %155 = arith.truncf %154 : vector<1x128xf32> to vector<1x128xbf16>
    %c18 = arith.constant 18 : index
    %c0_65 = arith.constant 0 : index
    %c0_66 = arith.constant 0 : index
    %156 = vector.load %arg5[%c18, %c0_65, %c0_66] : memref<25x128x128xbf16, #tpu.memory_space<vmem>>, vector<1x128x128xbf16>
    %157 = vector.shape_cast %156 : vector<1x128x128xbf16> to vector<128x128xbf16>
    %cst_67 = arith.constant dense<0.000000e+00> : vector<1x128xf32>
    %158 = tpu.matmul %155, %157, %cst_67 {dimension_numbers = #tpu.dot_dimension_numbers<[1], [0], [0], [1], [0, 0, 1, 1], [], []>} : vector<1x128xbf16>, vector<128x128xbf16>, vector<1x128xf32> -> vector<1x128xf32>
    %159 = arith.addf %152, %158 : vector<1x128xf32>
    %160 = vector.extract_strided_slice %25 {offsets = [0, 19, 0], sizes = [1, 1, 128], strides = [1, 1, 1]} : vector<1x32x128xf32> to vector<1x1x128xf32>
    %161 = vector.shape_cast %160 : vector<1x1x128xf32> to vector<1x128xf32>
    %162 = arith.truncf %161 : vector<1x128xf32> to vector<1x128xbf16>
    %c19 = arith.constant 19 : index
    %c0_68 = arith.constant 0 : index
    %c0_69 = arith.constant 0 : index
    %163 = vector.load %arg5[%c19, %c0_68, %c0_69] : memref<25x128x128xbf16, #tpu.memory_space<vmem>>, vector<1x128x128xbf16>
    %164 = vector.shape_cast %163 : vector<1x128x128xbf16> to vector<128x128xbf16>
    %cst_70 = arith.constant dense<0.000000e+00> : vector<1x128xf32>
    %165 = tpu.matmul %162, %164, %cst_70 {dimension_numbers = #tpu.dot_dimension_numbers<[1], [0], [0], [1], [0, 0, 1, 1], [], []>} : vector<1x128xbf16>, vector<128x128xbf16>, vector<1x128xf32> -> vector<1x128xf32>
    %166 = arith.addf %159, %165 : vector<1x128xf32>
    %167 = vector.extract_strided_slice %25 {offsets = [0, 20, 0], sizes = [1, 1, 128], strides = [1, 1, 1]} : vector<1x32x128xf32> to vector<1x1x128xf32>
    %168 = vector.shape_cast %167 : vector<1x1x128xf32> to vector<1x128xf32>
    %169 = arith.truncf %168 : vector<1x128xf32> to vector<1x128xbf16>
    %c20 = arith.constant 20 : index
    %c0_71 = arith.constant 0 : index
    %c0_72 = arith.constant 0 : index
    %170 = vector.load %arg5[%c20, %c0_71, %c0_72] : memref<25x128x128xbf16, #tpu.memory_space<vmem>>, vector<1x128x128xbf16>
    %171 = vector.shape_cast %170 : vector<1x128x128xbf16> to vector<128x128xbf16>
    %cst_73 = arith.constant dense<0.000000e+00> : vector<1x128xf32>
    %172 = tpu.matmul %169, %171, %cst_73 {dimension_numbers = #tpu.dot_dimension_numbers<[1], [0], [0], [1], [0, 0, 1, 1], [], []>} : vector<1x128xbf16>, vector<128x128xbf16>, vector<1x128xf32> -> vector<1x128xf32>
    %173 = arith.addf %166, %172 : vector<1x128xf32>
    %174 = vector.extract_strided_slice %25 {offsets = [0, 21, 0], sizes = [1, 1, 128], strides = [1, 1, 1]} : vector<1x32x128xf32> to vector<1x1x128xf32>
    %175 = vector.shape_cast %174 : vector<1x1x128xf32> to vector<1x128xf32>
    %176 = arith.truncf %175 : vector<1x128xf32> to vector<1x128xbf16>
    %c21 = arith.constant 21 : index
    %c0_74 = arith.constant 0 : index
    %c0_75 = arith.constant 0 : index
    %177 = vector.load %arg5[%c21, %c0_74, %c0_75] : memref<25x128x128xbf16, #tpu.memory_space<vmem>>, vector<1x128x128xbf16>
    %178 = vector.shape_cast %177 : vector<1x128x128xbf16> to vector<128x128xbf16>
    %cst_76 = arith.constant dense<0.000000e+00> : vector<1x128xf32>
    %179 = tpu.matmul %176, %178, %cst_76 {dimension_numbers = #tpu.dot_dimension_numbers<[1], [0], [0], [1], [0, 0, 1, 1], [], []>} : vector<1x128xbf16>, vector<128x128xbf16>, vector<1x128xf32> -> vector<1x128xf32>
    %180 = arith.addf %173, %179 : vector<1x128xf32>
    %181 = vector.extract_strided_slice %25 {offsets = [0, 22, 0], sizes = [1, 1, 128], strides = [1, 1, 1]} : vector<1x32x128xf32> to vector<1x1x128xf32>
    %182 = vector.shape_cast %181 : vector<1x1x128xf32> to vector<1x128xf32>
    %183 = arith.truncf %182 : vector<1x128xf32> to vector<1x128xbf16>
    %c22 = arith.constant 22 : index
    %c0_77 = arith.constant 0 : index
    %c0_78 = arith.constant 0 : index
    %184 = vector.load %arg5[%c22, %c0_77, %c0_78] : memref<25x128x128xbf16, #tpu.memory_space<vmem>>, vector<1x128x128xbf16>
    %185 = vector.shape_cast %184 : vector<1x128x128xbf16> to vector<128x128xbf16>
    %cst_79 = arith.constant dense<0.000000e+00> : vector<1x128xf32>
    %186 = tpu.matmul %183, %185, %cst_79 {dimension_numbers = #tpu.dot_dimension_numbers<[1], [0], [0], [1], [0, 0, 1, 1], [], []>} : vector<1x128xbf16>, vector<128x128xbf16>, vector<1x128xf32> -> vector<1x128xf32>
    %187 = arith.addf %180, %186 : vector<1x128xf32>
    %188 = vector.extract_strided_slice %25 {offsets = [0, 23, 0], sizes = [1, 1, 128], strides = [1, 1, 1]} : vector<1x32x128xf32> to vector<1x1x128xf32>
    %189 = vector.shape_cast %188 : vector<1x1x128xf32> to vector<1x128xf32>
    %190 = arith.truncf %189 : vector<1x128xf32> to vector<1x128xbf16>
    %c23 = arith.constant 23 : index
    %c0_80 = arith.constant 0 : index
    %c0_81 = arith.constant 0 : index
    %191 = vector.load %arg5[%c23, %c0_80, %c0_81] : memref<25x128x128xbf16, #tpu.memory_space<vmem>>, vector<1x128x128xbf16>
    %192 = vector.shape_cast %191 : vector<1x128x128xbf16> to vector<128x128xbf16>
    %cst_82 = arith.constant dense<0.000000e+00> : vector<1x128xf32>
    %193 = tpu.matmul %190, %192, %cst_82 {dimension_numbers = #tpu.dot_dimension_numbers<[1], [0], [0], [1], [0, 0, 1, 1], [], []>} : vector<1x128xbf16>, vector<128x128xbf16>, vector<1x128xf32> -> vector<1x128xf32>
    %194 = arith.addf %187, %193 : vector<1x128xf32>
    %195 = vector.extract_strided_slice %25 {offsets = [0, 24, 0], sizes = [1, 1, 128], strides = [1, 1, 1]} : vector<1x32x128xf32> to vector<1x1x128xf32>
    %196 = vector.shape_cast %195 : vector<1x1x128xf32> to vector<1x128xf32>
    %197 = arith.truncf %196 : vector<1x128xf32> to vector<1x128xbf16>
    %c24 = arith.constant 24 : index
    %c0_83 = arith.constant 0 : index
    %c0_84 = arith.constant 0 : index
    %198 = vector.load %arg5[%c24, %c0_83, %c0_84] : memref<25x128x128xbf16, #tpu.memory_space<vmem>>, vector<1x128x128xbf16>
    %199 = vector.shape_cast %198 : vector<1x128x128xbf16> to vector<128x128xbf16>
    %cst_85 = arith.constant dense<0.000000e+00> : vector<1x128xf32>
    %200 = tpu.matmul %197, %199, %cst_85 {dimension_numbers = #tpu.dot_dimension_numbers<[1], [0], [0], [1], [0, 0, 1, 1], [], []>} : vector<1x128xbf16>, vector<128x128xbf16>, vector<1x128xf32> -> vector<1x128xf32>
    %201 = arith.addf %194, %200 : vector<1x128xf32>
    %c0_86 = arith.constant 0 : index
    %c0_87 = arith.constant 0 : index
    %202 = vector.load %arg6[%c0_86, %c0_87] : memref<1x128xf32, #tpu.memory_space<vmem>>, vector<1x128xf32>
    %203 = arith.addf %201, %202 : vector<1x128xf32>
    %204 = vector.shape_cast %203 : vector<1x128xf32> to vector<1x1x128xf32>
    %c0_88 = arith.constant 0 : index
    %c0_89 = arith.constant 0 : index
    %c0_90 = arith.constant 0 : index
    %205 = vector.load %arg7[%c0_88, %c0_89, %c0_90] : memref<1x1x128xf32, #tpu.memory_space<vmem>>, vector<1x1x128xf32>
    tpu.vector_store %arg7[%c0_88, %c0_89, %c0_90], %204 {strides = array<i32>} : memref<1x1x128xf32, #tpu.memory_space<vmem>>, vector<1x1x128xf32>,
    return
  }
  func.func @transform_0(%arg0: i32) -> (i32, i32, i32, i32) {
    %c0_i32 = arith.constant 0 : i32
    %c0_i32_0 = arith.constant 0 : i32
    %c0_i32_1 = arith.constant 0 : i32
    %c0_i32_2 = arith.constant 0 : i32
    return %arg0, %c0_i32, %c0_i32_0, %c0_i32_1 : i32, i32, i32, i32
  }
  func.func @transform_1(%arg0: i32) -> (i32, i32) {
    %c0_i32 = arith.constant 0 : i32
    %c0_i32_0 = arith.constant 0 : i32
    %c0_i32_1 = arith.constant 0 : i32
    return %c0_i32, %c0_i32_0 : i32, i32
  }
  func.func @transform_2(%arg0: i32) -> (i32, i32) {
    %c0_i32 = arith.constant 0 : i32
    %c0_i32_0 = arith.constant 0 : i32
    %c0_i32_1 = arith.constant 0 : i32
    return %c0_i32, %c0_i32_0 : i32, i32
  }
  func.func @transform_3(%arg0: i32) -> i32 {
    %c0_i32 = arith.constant 0 : i32
    %c0_i32_0 = arith.constant 0 : i32
    return %c0_i32 : i32
  }
  func.func @transform_4(%arg0: i32) -> (i32, i32, i32) {
    %c0_i32 = arith.constant 0 : i32
    %c0_i32_0 = arith.constant 0 : i32
    %c0_i32_1 = arith.constant 0 : i32
    %c0_i32_2 = arith.constant 0 : i32
    return %c0_i32, %c0_i32_0, %c0_i32_1 : i32, i32, i32
  }
  func.func @transform_5(%arg0: i32) -> (i32, i32) {
    %c0_i32 = arith.constant 0 : i32
    %c0_i32_0 = arith.constant 0 : i32
    %c0_i32_1 = arith.constant 0 : i32
    return %c0_i32, %c0_i32_0 : i32, i32
  }
  func.func @transform_6(%arg0: i32) -> (i32, i32, i32) {
    %c0_i32 = arith.constant 0 : i32
    %c0_i32_0 = arith.constant 0 : i32
    %c0_i32_1 = arith.constant 0 : i32
    return %arg0, %c0_i32, %c0_i32_0 : i32, i32, i32
  }
}

</mosaic_0001>

<llo_original>
// kernel: _lambda_.2
$region0: #{_lambda_.2}
  #allocation0 [shape = 'u32[]', space=smem, size = 0x4, offset = 0x4, fixed_abs, tag = 'smem constant byte address 0x4 - core index']
  #allocation1 [shape = 'u32[144,128]{1,0:T(1,128)}', space=vmem, size = 0x12000, scoped, tag = 'internal scratch']
  #allocation2 [shape = 'f32[1]{0:T(128)S(6)}', space=smem, size = 0x200, scoped, tag = 'scoped memory for _lambda_.2']
  %s0 = inlined_call_operand.vmem [shape: bf16[2,4,208,128], index: 0, kind: input, shape index: {}]
  %s1 = inlined_call_operand.vmem [shape: bf16[128,128], index: 1, kind: input, shape index: {}]
  %s2 = inlined_call_operand.vmem [shape: f32[1,128], index: 2, kind: input, shape index: {}]
  %s3 = inlined_call_operand.<no memory space> [shape: f32[1], index: 3, kind: input, shape index: {}]
  %s4 = inlined_call_operand.vmem [shape: bf16[2,208,128], index: 4, kind: output, shape index: {}]
  %s5 = sld [smem:[#allocation0]]
  $region49: #{_lambda_.2} parent=0
    _
  %s7 = ssub.s32 1, %s5
  %s8 = scalar_select 0, %s7, %s5
  %9 = sst [smem:[#allocation2]] %s3
  loop: start=0, step=1, limit=4
  $region2: #{_lambda_.2} parent=0 // loop_pre_header
    _
  $region3: #{_lambda_.2} parent=0 // loop_header
    %s11 = sphi 0, %s15
    %p12 = scmp.ge.s32.totalorder %s11, 4
    %s21 = sphi 0, %s23
    %s24 = sphi 0, %s21
    %s25 = sphi 0, %s24
    %s41 = sphi 0, %s25
    %s45 = sphi 0, %s45
    %s47 = sphi 0, %s45
    %s48 = sphi 0, %s47
    %s62 = sphi 0, %s48
    %s66 = sphi 0, %s66
    %s68 = sphi 0, %s66
    %s69 = sphi 0, %s68
    %s83 = sphi 0, %s69
    %s87 = sphi 0, %s87
    %s89 = sphi 0, %s87
    %s90 = sphi 0, %s89
    %s104 = sphi 0, %s90
    %s110 = sphi 0, %s112
    %s113 = sphi 0, %s110
    %s114 = sphi 0, %s113
    %s130 = sphi 0, %s114
  $region4: #{_lambda_.2} parent=0 // loop_header_branch
    %14 = sbr.rel (%p12) target = $region8
  $region5: #{_lambda_.2} parent=0 // loop_body
    %s16 = ssub.s32 %s11, 1
    %s17 = ssub.s32 %s11, 2
    %s18 = sadd.s32 %s11, 1
    %s19 = ssub.s32 %s11, %s18
    %p20 = scmp.eq.s32.totalorder %s19, 0
    %s22 = sadd.s32 %s21, 1
    %s23 = scalar_select %p20, %s21, %s22
    %p26 = pneg %p20
    %p27 = scmp.eq.s32.totalorder %s11, 1
    %p28 = por %p26, %p27
    %p29 = scmp.ne.s32.totalorder %s21, %s24
    %p30 = scmp.eq.s32.totalorder %s11, 0
    %p31 = por %p29, %p30
    %p32 = scmp.ne.s32.totalorder %s21, %s24
    %p33 = scmp.eq.s32.totalorder %s16, 1
    %p34 = por %p32, %p33
    %p35 = scmp.ne.s32.totalorder %s24, %s25
    %p36 = scmp.eq.s32.totalorder %s16, 0
    %p37 = por %p35, %p36
    %p38 = scmp.ne.s32.totalorder %s24, %s25
    %p39 = scmp.eq.s32.totalorder %s17, 1
    %p40 = por %p38, %p39
    %p42 = scmp.ne.s32.totalorder %s25, %s41
    %p43 = scmp.eq.s32.totalorder %s17, 0
    %p44 = por %p42, %p43
    %s46 = sadd.s32 %s45, 1
    %p49 = scmp.eq.s32.totalorder %s11, 1
    %p50 = scmp.ne.s32.totalorder %s45, %s47
    %p51 = scmp.eq.s32.totalorder %s11, 0
    %p52 = por %p50, %p51
    %p53 = scmp.ne.s32.totalorder %s45, %s47
    %p54 = scmp.eq.s32.totalorder %s16, 1
    %p55 = por %p53, %p54
    %p56 = scmp.ne.s32.totalorder %s47, %s48
    %p57 = scmp.eq.s32.totalorder %s16, 0
    %p58 = por %p56, %p57
    %p59 = scmp.ne.s32.totalorder %s47, %s48
    %p60 = scmp.eq.s32.totalorder %s17, 1
    %p61 = por %p59, %p60
    %p63 = scmp.ne.s32.totalorder %s48, %s62
    %p64 = scmp.eq.s32.totalorder %s17, 0
    %p65 = por %p63, %p64
    %s67 = sadd.s32 %s66, 1
    %p70 = scmp.eq.s32.totalorder %s11, 1
    %p71 = scmp.ne.s32.totalorder %s66, %s68
    %p72 = scmp.eq.s32.totalorder %s11, 0
    %p73 = por %p71, %p72
    %p74 = scmp.ne.s32.totalorder %s66, %s68
    %p75 = scmp.eq.s32.totalorder %s16, 1
    %p76 = por %p74, %p75
    %p77 = scmp.ne.s32.totalorder %s68, %s69
    %p78 = scmp.eq.s32.totalorder %s16, 0
    %p79 = por %p77, %p78
    %p80 = scmp.ne.s32.totalorder %s68, %s69
    %p81 = scmp.eq.s32.totalorder %s17, 1
    %p82 = por %p80, %p81
    %p84 = scmp.ne.s32.totalorder %s69, %s83
    %p85 = scmp.eq.s32.totalorder %s17, 0
    %p86 = por %p84, %p85
    %s88 = sadd.s32 %s87, 1
    %p91 = scmp.eq.s32.totalorder %s11, 1
    %p92 = scmp.ne.s32.totalorder %s87, %s89
    %p93 = scmp.eq.s32.totalorder %s11, 0
    %p94 = por %p92, %p93
    %p95 = scmp.ne.s32.totalorder %s87, %s89
    %p96 = scmp.eq.s32.totalorder %s16, 1
    %p97 = por %p95, %p96
    %p98 = scmp.ne.s32.totalorder %s89, %s90
    %p99 = scmp.eq.s32.totalorder %s16, 0
    %p100 = por %p98, %p99
    %p101 = scmp.ne.s32.totalorder %s89, %s90
    %p102 = scmp.eq.s32.totalorder %s17, 1
    %p103 = por %p101, %p102
    %p105 = scmp.ne.s32.totalorder %s90, %s104
    %p106 = scmp.eq.s32.totalorder %s17, 0
    %p107 = por %p105, %p106
    %s108 = ssub.s32 %s11, %s18
    %p109 = scmp.eq.s32.totalorder %s108, 0
    %s111 = sadd.s32 %s110, 1
    %s112 = scalar_select %p109, %s110, %s111
    %p115 = pneg %p109
    %p116 = scmp.eq.s32.totalorder %s11, 1
    %p117 = por %p115, %p116
    %p118 = scmp.ne.s32.totalorder %s110, %s113
    %p119 = scmp.eq.s32.totalorder %s11, 0
    %p120 = por %p118, %p119
    %p121 = scmp.ne.s32.totalorder %s110, %s113
    %p122 = scmp.eq.s32.totalorder %s16, 1
    %p123 = por %p121, %p122
    %p124 = scmp.ne.s32.totalorder %s113, %s114
    %p125 = scmp.eq.s32.totalorder %s16, 0
    %p126 = por %p124, %p125
    %p127 = scmp.ne.s32.totalorder %s113, %s114
    %p128 = scmp.eq.s32.totalorder %s17, 1
    %p129 = por %p127, %p128
    %p131 = scmp.ne.s32.totalorder %s114, %s130
    %p132 = scmp.eq.s32.totalorder %s17, 0
    %p133 = por %p131, %p132
    %p134 = scmp.le.s32.totalorder 1, %s11
    %p135 = scmp.lt.s32.totalorder %s11, 3
    %p136 = pnand %p134, %p135
    %p137 = pneg %p136
    // Predicated region
    $region9: #{_lambda_.2} parent=5 // pred_check
      _
    $region10: #{_lambda_.2} parent=5 // pred_check_branch
      %139 = sbr.rel (%p136) target = $region12
    $region11: #{_lambda_.2} parent=5 // pred_region
      %s140 = ssub.s32 %s11, 1
      // Predicated region
      $region13: #{_lambda_.2} parent=11 // pred_check
        %p141 = pneg %p58
      $region14: #{_lambda_.2} parent=11 // pred_check_branch
        %143 = sbr.rel (%p141) target = $region16
      $region15: #{_lambda_.2} parent=11 // pred_region
        _
      $region16: #{_lambda_.2} parent=11 // pred_fallthru
        _
      // Predicated region
      $region17: #{_lambda_.2} parent=11 // pred_check
        %p144 = pneg %p79
      $region18: #{_lambda_.2} parent=11 // pred_check_branch
        %146 = sbr.rel (%p144) target = $region20
      $region19: #{_lambda_.2} parent=11 // pred_region
        _
      $region20: #{_lambda_.2} parent=11 // pred_fallthru
        _
      // Predicated region
      $region21: #{_lambda_.2} parent=11 // pred_check
        %p147 = pneg %p100
      $region22: #{_lambda_.2} parent=11 // pred_check_branch
        %149 = sbr.rel (%p147) target = $region24
      $region23: #{_lambda_.2} parent=11 // pred_region
        _
      $region24: #{_lambda_.2} parent=11 // pred_fallthru
        _
    $region12: #{_lambda_.2} parent=5 // pred_fallthru
      _
    %p150 = scmp.lt.s32.totalorder %s11, 2
    // Predicated region
    $region25: #{_lambda_.2} parent=5 // pred_check
      %p151 = pneg %p150
    $region26: #{_lambda_.2} parent=5 // pred_check_branch
      %153 = sbr.rel (%p151) target = $region28
    $region27: #{_lambda_.2} parent=5 // pred_region
      // Predicated region
      $region29: #{_lambda_.2} parent=27 // pred_check
        %p154 = pneg %p31
      $region30: #{_lambda_.2} parent=27 // pred_check_branch
        %156 = sbr.rel (%p154) target = $region32
      $region31: #{_lambda_.2} parent=27 // pred_region
        %p157 = scmp.lt.s32.totalorder %s11, 1
        %s158 = scalar_select %p157, %s11, 1
        %s159 = smul.addr %s158, 104
        %s160 = smul.addr %s159, 4
        %s161 = scalar_lea.vmem %s0, %s160
      $region32: #{_lambda_.2} parent=27 // pred_fallthru
        _
    $region28: #{_lambda_.2} parent=5 // pred_fallthru
      _
    %p162 = scmp.le.s32.totalorder 1, %s11
    %p163 = scmp.lt.s32.totalorder %s11, 3
    %p164 = pnand %p162, %p163
    %p165 = pneg %p164
    // Predicated region
    $region33: #{_lambda_.2} parent=5 // pred_check
      _
    $region34: #{_lambda_.2} parent=5 // pred_check_branch
      %167 = sbr.rel (%p164) target = $region36
    $region35: #{_lambda_.2} parent=5 // pred_region
      %s168 = ssub.s32 %s11, 1
      %p169 = scmp.lt.s32.totalorder %s16, 1
      %s170 = scalar_select %p169, %s16, 1
      %s171 = smul.addr %s170, 104
      %s172 = smul.addr %s171, 4
      %s173 = scalar_lea.vmem %s0, %s172
      %p174 = pneg %p37
      %p175 = pneg %p34
      %p176 = pneg %p58
      %p177 = pneg %p55
      %p178 = pneg %p79
      %p179 = pneg %p76
      %p180 = pneg %p100
      %p181 = pneg %p97
      %p182 = pneg %p126
      %p183 = pneg %p123
      %p184 = scmp.lt.s32.totalorder %s16, 1
      %s185 = scalar_select %p184, %s16, 1
      %s186 = smul.addr %s185, 26
      %s187 = smul.addr %s186, 4
      %s188 = scalar_lea.vmem %s4, %s187
      %p189 = scmp.lt.s32.totalorder %s16, 1
      %s190 = scalar_select %p189, %s16, 1
      %s191 = smul.addr %s190, 104
      %s192 = smul.addr %s191, 4
      %s193 = scalar_lea.vmem %s0, %s192
      %p194 = scmp.lt.s32.totalorder %s16, 1
      %s195 = scalar_select %p194, %s16, 1
      %s196 = smul.addr %s195, 26
      %s197 = smul.addr %s196, 4
      %s198 = scalar_lea.vmem %s4, %s197
      %v200 = vld [vmem:[%s193] sm:$0xf]
      %v201 = vld [vmem:[%s193 + $0x4] sm:$0xf]
      %v202 = vld [vmem:[%s193 + $0x8] sm:$0xf]
      %v203 = vld [vmem:[%s193 + $0xc] sm:$0xf]
      %v204 = vld [vmem:[%s193 + $0x10] sm:$0xf]
      %v205 = vld [vmem:[%s193 + $0x14] sm:$0xf]
      %v206 = vld [vmem:[%s193 + $0x18] sm:$0xf]
      %v207 = vld [vmem:[%s193 + $0x1c] sm:$0xf]
      %v208 = vld [vmem:[%s193 + $0x20] sm:$0xf]
      %v209 = vld [vmem:[%s193 + $0x24] sm:$0xf]
      %v210 = vld [vmem:[%s193 + $0x28] sm:$0xf]
      %v211 = vld [vmem:[%s193 + $0x2c] sm:$0xf]
      %v212 = vld [vmem:[%s193 + $0x30] sm:$0xf]
      %v213 = vld [vmem:[%s193 + $0x34] sm:$0xf]
      %v214 = vld [vmem:[%s193 + $0x38] sm:$0xf]
      %v215 = vld [vmem:[%s193 + $0x3c] sm:$0xf]
      %v216 = vld [vmem:[%s193 + $0x40] sm:$0xf]
      %v217 = vld [vmem:[%s193 + $0x44] sm:$0xf]
      %v218 = vld [vmem:[%s193 + $0x48] sm:$0xf]
      %v219 = vld [vmem:[%s193 + $0x4c] sm:$0xf]
      %v220 = vld [vmem:[%s193 + $0x50] sm:$0xf]
      %v221 = vld [vmem:[%s193 + $0x54] sm:$0xf]
      %v222 = vld [vmem:[%s193 + $0x58] sm:$0xf]
      %v223 = vld [vmem:[%s193 + $0x5c] sm:$0xf]
      %v224 = vld [vmem:[%s193 + $0x60] sm:$0xf]
      %v225 = vld [vmem:[%s193 + $0x64] sm:$0xf]
      %v226 = vld [vmem:[%s193 + $0x68] sm:$0xf]
      %v227 = vld [vmem:[%s193 + $0x6c] sm:$0xf]
      %v228 = vld [vmem:[%s193 + $0x70] sm:$0xf]
      %v229 = vld [vmem:[%s193 + $0x74] sm:$0xf]
      %v230 = vld [vmem:[%s193 + $0x78] sm:$0xf]
      %v231 = vld [vmem:[%s193 + $0x7c] sm:$0xf]
      %v232 = vld [vmem:[%s193 + $0x80] sm:$0xf]
      %v233 = vld [vmem:[%s193 + $0x84] sm:$0xf]
      %v234 = vld [vmem:[%s193 + $0x88] sm:$0xf]
      %v235 = vld [vmem:[%s193 + $0x8c] sm:$0xf]
      %v236 = vld [vmem:[%s193 + $0x90] sm:$0xf]
      %v237 = vld [vmem:[%s193 + $0x94] sm:$0xf]
      %v238 = vld [vmem:[%s193 + $0x98] sm:$0xf]
      %v239 = vld [vmem:[%s193 + $0x9c] sm:$0xf]
      %v240 = vld [vmem:[%s193 + $0xa0] sm:$0xf]
      %v241 = vld [vmem:[%s193 + $0xa4] sm:$0xf]
      %v242 = vld [vmem:[%s193 + $0xa8] sm:$0xf]
      %v243 = vld [vmem:[%s193 + $0xac] sm:$0xf]
      %v244 = vld [vmem:[%s193 + $0xb0] sm:$0xf]
      %v245 = vld [vmem:[%s193 + $0xb4] sm:$0xf]
      %v246 = vld [vmem:[%s193 + $0xb8] sm:$0xf]
      %v247 = vld [vmem:[%s193 + $0xbc] sm:$0xf]
      %v248 = vld [vmem:[%s193 + $0xc0] sm:$0xf]
      %v249 = vld [vmem:[%s193 + $0xc4] sm:$0xf]
      %v250 = vld [vmem:[%s193 + $0xc8] sm:$0xf]
      %v251 = vld [vmem:[%s193 + $0xcc] sm:$0xf]
      %v252 = vld [vmem:[%s193 + $0xd0] sm:$0xf]
      %v253 = vld [vmem:[%s193 + $0xd4] sm:$0xf]
      %v254 = vld [vmem:[%s193 + $0xd8] sm:$0xf]
      %v255 = vld [vmem:[%s193 + $0xdc] sm:$0xf]
      %v256 = vld [vmem:[%s193 + $0xe0] sm:$0xf]
      %v257 = vld [vmem:[%s193 + $0xe4] sm:$0xf]
      %v258 = vld [vmem:[%s193 + $0xe8] sm:$0xf]
      %v259 = vld [vmem:[%s193 + $0xec] sm:$0xf]
      %v260 = vld [vmem:[%s193 + $0xf0] sm:$0xf]
      %v261 = vld [vmem:[%s193 + $0xf4] sm:$0xf]
      %v262 = vld [vmem:[%s193 + $0xf8] sm:$0xf]
      %v263 = vld [vmem:[%s193 + $0xfc] sm:$0xf]
      %v264 = vld [vmem:[%s193 + $0x100] sm:$0xf]
      %v265 = vld [vmem:[%s193 + $0x104] sm:$0xf]
      %v266 = vld [vmem:[%s193 + $0x108] sm:$0xf]
      %v267 = vld [vmem:[%s193 + $0x10c] sm:$0xf]
      %v268 = vld [vmem:[%s193 + $0x110] sm:$0xf]
      %v269 = vld [vmem:[%s193 + $0x114] sm:$0xf]
      %v270 = vld [vmem:[%s193 + $0x118] sm:$0xf]
      %v271 = vld [vmem:[%s193 + $0x11c] sm:$0xf]
      %v272 = vld [vmem:[%s193 + $0x120] sm:$0xf]
      %v273 = vld [vmem:[%s193 + $0x124] sm:$0xf]
      %v274 = vld [vmem:[%s193 + $0x128] sm:$0xf]
      %v275 = vld [vmem:[%s193 + $0x12c] sm:$0xf]
      %v276 = vld [vmem:[%s193 + $0x130] sm:$0xf]
      %v277 = vld [vmem:[%s193 + $0x134] sm:$0xf]
      %v278 = vld [vmem:[%s193 + $0x138] sm:$0xf]
      %v279 = vld [vmem:[%s193 + $0x13c] sm:$0xf]
      %v280 = vld [vmem:[%s193 + $0x140] sm:$0xf]
      %v281 = vld [vmem:[%s193 + $0x144] sm:$0xf]
      %v282 = vld [vmem:[%s193 + $0x148] sm:$0xf]
      %v283 = vld [vmem:[%s193 + $0x14c] sm:$0xf]
      %v284 = vld [vmem:[%s193 + $0x150] sm:$0xf]
      %v285 = vld [vmem:[%s193 + $0x154] sm:$0xf]
      %v286 = vld [vmem:[%s193 + $0x158] sm:$0xf]
      %v287 = vld [vmem:[%s193 + $0x15c] sm:$0xf]
      %v288 = vld [vmem:[%s193 + $0x160] sm:$0xf]
      %v289 = vld [vmem:[%s193 + $0x164] sm:$0xf]
      %v290 = vld [vmem:[%s193 + $0x168] sm:$0xf]
      %v291 = vld [vmem:[%s193 + $0x16c] sm:$0xf]
      %v292 = vld [vmem:[%s193 + $0x170] sm:$0xf]
      %v293 = vld [vmem:[%s193 + $0x174] sm:$0xf]
      %v294 = vld [vmem:[%s193 + $0x178] sm:$0xf]
      %v295 = vld [vmem:[%s193 + $0x17c] sm:$0xf]
      %v296 = vld [vmem:[%s193 + $0x180] sm:$0xf]
      %v297 = vld [vmem:[%s193 + $0x184] sm:$0xf]
      %v298 = vld [vmem:[%s193 + $0x188] sm:$0xf]
      %v299 = vld [vmem:[%s193 + $0x18c] sm:$0xf]
      %v300 = vld [vmem:[%s193 + $0x190] sm:$0xf]
      %v301 = vld [vmem:[%s193 + $0x194] sm:$0xf]
      %v302 = vld [vmem:[%s193 + $0x198] sm:$0xf]
      %v303 = vld [vmem:[%s193 + $0x19c] sm:$0xf]
      %v304 = vld [vmem:[%s1] sm:$0xf]
      %v305 = vld [vmem:[%s1 + $0x4] sm:$0xf]
      %v306 = vld [vmem:[%s1 + $0x8] sm:$0xf]
      %v307 = vld [vmem:[%s1 + $0xc] sm:$0xf]
      %v308 = vld [vmem:[%s1 + $0x10] sm:$0xf]
      %v309 = vld [vmem:[%s1 + $0x14] sm:$0xf]
      %v310 = vld [vmem:[%s1 + $0x18] sm:$0xf]
      %v311 = vld [vmem:[%s1 + $0x1c] sm:$0xf]
      %v312 = vld [vmem:[%s1 + $0x20] sm:$0xf]
      %v313 = vld [vmem:[%s1 + $0x24] sm:$0xf]
      %v314 = vld [vmem:[%s1 + $0x28] sm:$0xf]
      %v315 = vld [vmem:[%s1 + $0x2c] sm:$0xf]
      %v316 = vld [vmem:[%s1 + $0x30] sm:$0xf]
      %v317 = vld [vmem:[%s1 + $0x34] sm:$0xf]
      %v318 = vld [vmem:[%s1 + $0x38] sm:$0xf]
      %v319 = vld [vmem:[%s1 + $0x3c] sm:$0xf]
      %v424 = vunpack.c.l.b16 %v200
      %v425 = vunpack.c.l.b16 %v201
      %v426 = vunpack.c.l.b16 %v202
      %v427 = vunpack.c.l.b16 %v203
      %v428 = vunpack.c.l.b16 %v204
      %v429 = vunpack.c.l.b16 %v205
      %v430 = vunpack.c.l.b16 %v206
      %v431 = vunpack.c.l.b16 %v207
      %v432 = vunpack.c.l.b16 %v208
      %v433 = vunpack.c.l.b16 %v209
      %v434 = vunpack.c.l.b16 %v210
      %v435 = vunpack.c.l.b16 %v211
      %v436 = vunpack.c.l.b16 %v212
      %v437 = vunpack.c.l.b16 %v213
      %v438 = vunpack.c.l.b16 %v214
      %v439 = vunpack.c.l.b16 %v215
      %v440 = vunpack.c.l.b16 %v216
      %v441 = vunpack.c.l.b16 %v217
      %v442 = vunpack.c.l.b16 %v218
      %v443 = vunpack.c.l.b16 %v219
      %v444 = vunpack.c.l.b16 %v220
      %v445 = vunpack.c.l.b16 %v221
      %v446 = vunpack.c.l.b16 %v222
      %v447 = vunpack.c.l.b16 %v223
      %v448 = vunpack.c.l.b16 %v224
      %v449 = vunpack.c.l.b16 %v225
      %v450 = vunpack.c.l.b16 %v226
      %v451 = vunpack.c.l.b16 %v227
      %v452 = vunpack.c.l.b16 %v228
      %v453 = vunpack.c.l.b16 %v229
      %v454 = vunpack.c.l.b16 %v230
      %v455 = vunpack.c.l.b16 %v231
      %v456 = vunpack.c.l.b16 %v232
      %v457 = vunpack.c.l.b16 %v233
      %v458 = vunpack.c.l.b16 %v234
      %v459 = vunpack.c.l.b16 %v235
      %v460 = vunpack.c.l.b16 %v236
      %v461 = vunpack.c.l.b16 %v237
      %v462 = vunpack.c.l.b16 %v238
      %v463 = vunpack.c.l.b16 %v239
      %v464 = vunpack.c.l.b16 %v240
      %v465 = vunpack.c.l.b16 %v241
      %v466 = vunpack.c.l.b16 %v242
      %v467 = vunpack.c.l.b16 %v243
      %v468 = vunpack.c.l.b16 %v244
      %v469 = vunpack.c.l.b16 %v245
      %v470 = vunpack.c.l.b16 %v246
      %v471 = vunpack.c.l.b16 %v247
      %v472 = vunpack.c.l.b16 %v248
      %v473 = vunpack.c.l.b16 %v249
      %v474 = vunpack.c.l.b16 %v250
      %v475 = vunpack.c.l.b16 %v251
      %v476 = vunpack.c.l.b16 %v252
      %v477 = vunpack.c.l.b16 %v253
      %v478 = vunpack.c.l.b16 %v254
      %v479 = vunpack.c.l.b16 %v255
      %v480 = vunpack.c.l.b16 %v256
      %v481 = vunpack.c.l.b16 %v257
      %v482 = vunpack.c.l.b16 %v258
      %v483 = vunpack.c.l.b16 %v259
      %v484 = vunpack.c.l.b16 %v260
      %v485 = vunpack.c.l.b16 %v261
      %v486 = vunpack.c.l.b16 %v262
      %v487 = vunpack.c.l.b16 %v263
      %v488 = vunpack.c.l.b16 %v264
      %v489 = vunpack.c.l.b16 %v265
      %v490 = vunpack.c.l.b16 %v266
      %v491 = vunpack.c.l.b16 %v267
      %v492 = vunpack.c.l.b16 %v268
      %v493 = vunpack.c.l.b16 %v269
      %v494 = vunpack.c.l.b16 %v270
      %v495 = vunpack.c.l.b16 %v271
      %v496 = vunpack.c.l.b16 %v272
      %v497 = vunpack.c.l.b16 %v273
      %v498 = vunpack.c.l.b16 %v274
      %v499 = vunpack.c.l.b16 %v275
      %v500 = vunpack.c.l.b16 %v276
      %v501 = vunpack.c.l.b16 %v277
      %v502 = vunpack.c.l.b16 %v278
      %v503 = vunpack.c.l.b16 %v279
      %v504 = vunpack.c.l.b16 %v280
      %v505 = vunpack.c.l.b16 %v281
      %v506 = vunpack.c.l.b16 %v282
      %v507 = vunpack.c.l.b16 %v283
      %v508 = vunpack.c.l.b16 %v284
      %v509 = vunpack.c.l.b16 %v285
      %v510 = vunpack.c.l.b16 %v286
      %v511 = vunpack.c.l.b16 %v287
      %v512 = vunpack.c.l.b16 %v288
      %v513 = vunpack.c.l.b16 %v289
      %v514 = vunpack.c.l.b16 %v290
      %v515 = vunpack.c.l.b16 %v291
      %v516 = vunpack.c.l.b16 %v292
      %v517 = vunpack.c.l.b16 %v293
      %v518 = vunpack.c.l.b16 %v294
      %v519 = vunpack.c.l.b16 %v295
      %v520 = vunpack.c.l.b16 %v296
      %v521 = vunpack.c.l.b16 %v297
      %v522 = vunpack.c.l.b16 %v298
      %v523 = vunpack.c.l.b16 %v299
      %v524 = vunpack.c.l.b16 %v300
      %v525 = vunpack.c.l.b16 %v301
      %v526 = vunpack.c.l.b16 %v302
      %v527 = vunpack.c.l.b16 %v303
      %v528 = vpack.c.b16 %v425, %v424
      %v529 = vpack.c.b16 %v427, %v426
      %v530 = vpack.c.b16 %v429, %v428
      %v531 = vpack.c.b16 %v431, %v430
      %v532 = vpack.c.b16 %v433, %v432
      %v533 = vpack.c.b16 %v435, %v434
      %v534 = vpack.c.b16 %v437, %v436
      %v535 = vpack.c.b16 %v439, %v438
      %v536 = vpack.c.b16 %v441, %v440
      %v537 = vpack.c.b16 %v443, %v442
      %v538 = vpack.c.b16 %v445, %v444
      %v539 = vpack.c.b16 %v447, %v446
      %v540 = vpack.c.b16 %v449, %v448
      %v541 = vpack.c.b16 %v451, %v450
      %v542 = vpack.c.b16 %v453, %v452
      %v543 = vpack.c.b16 %v455, %v454
      %v544 = vpack.c.b16 %v457, %v456
      %v545 = vpack.c.b16 %v459, %v458
      %v546 = vpack.c.b16 %v461, %v460
      %v547 = vpack.c.b16 %v463, %v462
      %v548 = vpack.c.b16 %v465, %v464
      %v549 = vpack.c.b16 %v467, %v466
      %v550 = vpack.c.b16 %v469, %v468
      %v551 = vpack.c.b16 %v471, %v470
      %v552 = vpack.c.b16 %v473, %v472
      %v553 = vpack.c.b16 %v475, %v474
      %v554 = vpack.c.b16 %v477, %v476
      %v555 = vpack.c.b16 %v479, %v478
      %v556 = vpack.c.b16 %v481, %v480
      %v557 = vpack.c.b16 %v483, %v482
      %v558 = vpack.c.b16 %v485, %v484
      %v559 = vpack.c.b16 %v487, %v486
      %v560 = vpack.c.b16 %v489, %v488
      %v561 = vpack.c.b16 %v491, %v490
      %v562 = vpack.c.b16 %v493, %v492
      %v563 = vpack.c.b16 %v495, %v494
      %v564 = vpack.c.b16 %v497, %v496
      %v565 = vpack.c.b16 %v499, %v498
      %v566 = vpack.c.b16 %v501, %v500
      %v567 = vpack.c.b16 %v503, %v502
      %v568 = vpack.c.b16 %v505, %v504
      %v569 = vpack.c.b16 %v507, %v506
      %v570 = vpack.c.b16 %v509, %v508
      %v571 = vpack.c.b16 %v511, %v510
      %v572 = vpack.c.b16 %v513, %v512
      %v573 = vpack.c.b16 %v515, %v514
      %v574 = vpack.c.b16 %v517, %v516
      %v575 = vpack.c.b16 %v519, %v518
      %v576 = vpack.c.b16 %v521, %v520
      %v577 = vpack.c.b16 %v523, %v522
      %v578 = vpack.c.b16 %v525, %v524
      %v579 = vpack.c.b16 %v527, %v526
      %v648 = vunpack.c.l.b16 %v304
      %v649 = vunpack.c.l.b16 %v305
      %v650 = vunpack.c.l.b16 %v306
      %v651 = vunpack.c.l.b16 %v307
      %v652 = vunpack.c.l.b16 %v308
      %v653 = vunpack.c.l.b16 %v309
      %v654 = vunpack.c.l.b16 %v310
      %v655 = vunpack.c.l.b16 %v311
      %v656 = vunpack.c.l.b16 %v312
      %v657 = vunpack.c.l.b16 %v313
      %v658 = vunpack.c.l.b16 %v314
      %v659 = vunpack.c.l.b16 %v315
      %v660 = vunpack.c.l.b16 %v316
      %v661 = vunpack.c.l.b16 %v317
      %v662 = vunpack.c.l.b16 %v318
      %v663 = vunpack.c.l.b16 %v319
      %v664 = vpack.c.b16 %v649, %v648
      %v665 = vpack.c.b16 %v651, %v650
      %v666 = vpack.c.b16 %v653, %v652
      %v667 = vpack.c.b16 %v655, %v654
      %v668 = vpack.c.b16 %v657, %v656
      %v669 = vpack.c.b16 %v659, %v658
      %v670 = vpack.c.b16 %v661, %v660
      %v671 = vpack.c.b16 %v663, %v662
      %680 = vmatprep.subr.bf16.mxu0 0
      %681 = vmatpush1.bf16.msra.mxu0 %v664
      %682 = vmatprep.subr.bf16.mxu0 0
      %683 = vmatpush1.bf16.msra.mxu0 %v665
      %684 = vmatprep.subr.bf16.mxu0 0
      %685 = vmatpush1.bf16.msra.mxu0 %v666
      %686 = vmatprep.subr.bf16.mxu0 0
      %687 = vmatpush1.bf16.msra.mxu0 %v667
      %688 = vmatprep.subr.bf16.mxu0 0
      %689 = vmatpush1.bf16.msra.mxu0 %v668
      %690 = vmatprep.subr.bf16.mxu0 0
      %691 = vmatpush1.bf16.msra.mxu0 %v669
      %692 = vmatprep.subr.bf16.mxu0 0
      %693 = vmatpush1.bf16.msra.mxu0 %v670
      %694 = vmatprep.subr.bf16.mxu0 0
      %695 = vmatpush1.bf16.msra.mxu0 %v671
      %696 = vmatprep.subr.bf16.mxu0 0
      %697 = vmatpush1.bf16.msra.mxu0 0
      %698 = vmatprep.subr.bf16.mxu0 0
      %699 = vmatpush1.bf16.msra.mxu0 0
      %700 = vmatprep.subr.bf16.mxu0 0
      %701 = vmatpush1.bf16.msra.mxu0 0
      %702 = vmatprep.subr.bf16.mxu0 0
      %703 = vmatpush1.bf16.msra.mxu0 0
      %704 = vmatprep.subr.bf16.mxu0 0
      %705 = vmatpush1.bf16.msra.mxu0 0
      %706 = vmatprep.subr.bf16.mxu0 0
      %707 = vmatpush1.bf16.msra.mxu0 0
      %708 = vmatprep.subr.bf16.mxu0 0
      %709 = vmatpush1.bf16.msra.mxu0 0
      %710 = vmatprep.subr.bf16.mxu0 0
      %711 = vmatpush1.bf16.msra.mxu0 0
      %712 = vmatprep.mubr.bf16.mxu0 0
      %713 = vmatmul.mubr.bf16.gmra.mrb[0].mxu0 %v528
      %v714 = vpop.f32.mrb[0].mxu0
      %v715 = vadd.f32 0.0, %v714
      %v716 = vpop.f32.mrb[0].mxu0
      %v717 = vpop.f32.mrb[0].mxu0
      %v718 = vadd.f32 0.0, %v717
      %v719 = vpop.f32.mrb[0].mxu0
      %720 = vmatprep.mubr.bf16.mxu0 0
      %721 = vmatmul.mubr.bf16.gmra.mrb[0].mxu0 %v529
      %v722 = vpop.f32.mrb[0].mxu0
      %v723 = vadd.f32 0.0, %v722
      %v724 = vpop.f32.mrb[0].mxu0
      %v725 = vpop.f32.mrb[0].mxu0
      %v726 = vadd.f32 0.0, %v725
      %v727 = vpop.f32.mrb[0].mxu0
      %728 = vmatprep.mubr.bf16.mxu0 0
      %729 = vmatmul.mubr.bf16.gmra.mrb[0].mxu0 %v530
      %v730 = vpop.f32.mrb[0].mxu0
      %v731 = vadd.f32 0.0, %v730
      %v732 = vpop.f32.mrb[0].mxu0
      %v733 = vpop.f32.mrb[0].mxu0
      %v734 = vadd.f32 0.0, %v733
      %v735 = vpop.f32.mrb[0].mxu0
      %736 = vmatprep.mubr.bf16.mxu0 0
      %737 = vmatmul.mubr.bf16.gmra.mrb[0].mxu0 %v531
      %v738 = vpop.f32.mrb[0].mxu0
      %v739 = vadd.f32 0.0, %v738
      %v740 = vpop.f32.mrb[0].mxu0
      %v741 = vpop.f32.mrb[0].mxu0
      %v742 = vadd.f32 0.0, %v741
      %v743 = vpop.f32.mrb[0].mxu0
      %744 = vmatprep.mubr.bf16.mxu0 0
      %745 = vmatmul.mubr.bf16.gmra.mrb[0].mxu0 %v532
      %v746 = vpop.f32.mrb[0].mxu0
      %v747 = vadd.f32 0.0, %v746
      %v748 = vpop.f32.mrb[0].mxu0
      %v749 = vpop.f32.mrb[0].mxu0
      %v750 = vadd.f32 0.0, %v749
      %v751 = vpop.f32.mrb[0].mxu0
      %752 = vmatprep.mubr.bf16.mxu0 0
      %753 = vmatmul.mubr.bf16.gmra.mrb[0].mxu0 %v533
      %v754 = vpop.f32.mrb[0].mxu0
      %v755 = vadd.f32 0.0, %v754
      %v756 = vpop.f32.mrb[0].mxu0
      %v757 = vpop.f32.mrb[0].mxu0
      %v758 = vadd.f32 0.0, %v757
      %v759 = vpop.f32.mrb[0].mxu0
      %760 = vmatprep.mubr.bf16.mxu0 0
      %761 = vmatmul.mubr.bf16.gmra.mrb[0].mxu0 %v534
      %v762 = vpop.f32.mrb[0].mxu0
      %v763 = vadd.f32 0.0, %v762
      %v764 = vpop.f32.mrb[0].mxu0
      %v765 = vpop.f32.mrb[0].mxu0
      %v766 = vadd.f32 0.0, %v765
      %v767 = vpop.f32.mrb[0].mxu0
      %768 = vmatprep.mubr.bf16.mxu0 0
      %769 = vmatmul.mubr.bf16.gmra.mrb[0].mxu0 %v535
      %v770 = vpop.f32.mrb[0].mxu0
      %v771 = vadd.f32 0.0, %v770
      %v772 = vpop.f32.mrb[0].mxu0
      %v773 = vpop.f32.mrb[0].mxu0
      %v774 = vadd.f32 0.0, %v773
      %v775 = vpop.f32.mrb[0].mxu0
      %776 = vmatprep.mubr.bf16.mxu0 0
      %777 = vmatmul.mubr.bf16.gmra.mrb[0].mxu0 %v536
      %v778 = vpop.f32.mrb[0].mxu0
      %v779 = vadd.f32 0.0, %v778
      %v780 = vpop.f32.mrb[0].mxu0
      %v781 = vpop.f32.mrb[0].mxu0
      %v782 = vadd.f32 0.0, %v781
      %v783 = vpop.f32.mrb[0].mxu0
      %784 = vmatprep.mubr.bf16.mxu0 0
      %785 = vmatmul.mubr.bf16.gmra.mrb[0].mxu0 %v537
      %v786 = vpop.f32.mrb[0].mxu0
      %v787 = vadd.f32 0.0, %v786
      %v788 = vpop.f32.mrb[0].mxu0
      %v789 = vpop.f32.mrb[0].mxu0
      %v790 = vadd.f32 0.0, %v789
      %v791 = vpop.f32.mrb[0].mxu0
      %792 = vmatprep.mubr.bf16.mxu0 0
      %793 = vmatmul.mubr.bf16.gmra.mrb[0].mxu0 %v538
      %v794 = vpop.f32.mrb[0].mxu0
      %v795 = vadd.f32 0.0, %v794
      %v796 = vpop.f32.mrb[0].mxu0
      %v797 = vpop.f32.mrb[0].mxu0
      %v798 = vadd.f32 0.0, %v797
      %v799 = vpop.f32.mrb[0].mxu0
      %800 = vmatprep.mubr.bf16.mxu0 0
      %801 = vmatmul.mubr.bf16.gmra.mrb[0].mxu0 %v539
      %v802 = vpop.f32.mrb[0].mxu0
      %v803 = vadd.f32 0.0, %v802
      %v804 = vpop.f32.mrb[0].mxu0
      %v805 = vpop.f32.mrb[0].mxu0
      %v806 = vadd.f32 0.0, %v805
      %v807 = vpop.f32.mrb[0].mxu0
      %808 = vmatprep.mubr.bf16.mxu0 0
      %809 = vmatmul.mubr.bf16.gmra.mrb[0].mxu0 %v540
      %v810 = vpop.f32.mrb[0].mxu0
      %v811 = vadd.f32 0.0, %v810
      %v812 = vpop.f32.mrb[0].mxu0
      %v813 = vpop.f32.mrb[0].mxu0
      %v814 = vadd.f32 0.0, %v813
      %v815 = vpop.f32.mrb[0].mxu0
      %816 = vmatprep.mubr.bf16.mxu0 0
      %817 = vmatmul.mubr.bf16.gmra.mrb[0].mxu0 %v541
      %v818 = vpop.f32.mrb[0].mxu0
      %v819 = vadd.f32 0.0, %v818
      %v820 = vpop.f32.mrb[0].mxu0
      %v821 = vpop.f32.mrb[0].mxu0
      %v822 = vadd.f32 0.0, %v821
      %v823 = vpop.f32.mrb[0].mxu0
      %824 = vmatprep.mubr.bf16.mxu0 0
      %825 = vmatmul.mubr.bf16.gmra.mrb[0].mxu0 %v542
      %v826 = vpop.f32.mrb[0].mxu0
      %v827 = vadd.f32 0.0, %v826
      %v828 = vpop.f32.mrb[0].mxu0
      %v829 = vpop.f32.mrb[0].mxu0
      %v830 = vadd.f32 0.0, %v829
      %v831 = vpop.f32.mrb[0].mxu0
      %832 = vmatprep.mubr.bf16.mxu0 0
      %833 = vmatmul.mubr.bf16.gmra.mrb[0].mxu0 %v543
      %v834 = vpop.f32.mrb[0].mxu0
      %v835 = vadd.f32 0.0, %v834
      %v836 = vpop.f32.mrb[0].mxu0
      %v837 = vpop.f32.mrb[0].mxu0
      %v838 = vadd.f32 0.0, %v837
      %v839 = vpop.f32.mrb[0].mxu0
      %840 = vmatprep.mubr.bf16.mxu0 0
      %841 = vmatmul.mubr.bf16.gmra.mrb[0].mxu0 %v544
      %v842 = vpop.f32.mrb[0].mxu0
      %v843 = vadd.f32 0.0, %v842
      %v844 = vpop.f32.mrb[0].mxu0
      %v845 = vpop.f32.mrb[0].mxu0
      %v846 = vadd.f32 0.0, %v845
      %v847 = vpop.f32.mrb[0].mxu0
      %848 = vmatprep.mubr.bf16.mxu0 0
      %849 = vmatmul.mubr.bf16.gmra.mrb[0].mxu0 %v545
      %v850 = vpop.f32.mrb[0].mxu0
      %v851 = vadd.f32 0.0, %v850
      %v852 = vpop.f32.mrb[0].mxu0
      %v853 = vpop.f32.mrb[0].mxu0
      %v854 = vadd.f32 0.0, %v853
      %v855 = vpop.f32.mrb[0].mxu0
      %856 = vmatprep.mubr.bf16.mxu0 0
      %857 = vmatmul.mubr.bf16.gmra.mrb[0].mxu0 %v546
      %v858 = vpop.f32.mrb[0].mxu0
      %v859 = vadd.f32 0.0, %v858
      %v860 = vpop.f32.mrb[0].mxu0
      %v861 = vpop.f32.mrb[0].mxu0
      %v862 = vadd.f32 0.0, %v861
      %v863 = vpop.f32.mrb[0].mxu0
      %864 = vmatprep.mubr.bf16.mxu0 0
      %865 = vmatmul.mubr.bf16.gmra.mrb[0].mxu0 %v547
      %v866 = vpop.f32.mrb[0].mxu0
      %v867 = vadd.f32 0.0, %v866
      %v868 = vpop.f32.mrb[0].mxu0
      %v869 = vpop.f32.mrb[0].mxu0
      %v870 = vadd.f32 0.0, %v869
      %v871 = vpop.f32.mrb[0].mxu0
      %872 = vmatprep.mubr.bf16.mxu0 0
      %873 = vmatmul.mubr.bf16.gmra.mrb[0].mxu0 %v548
      %v874 = vpop.f32.mrb[0].mxu0
      %v875 = vadd.f32 0.0, %v874
      %v876 = vpop.f32.mrb[0].mxu0
      %v877 = vpop.f32.mrb[0].mxu0
      %v878 = vadd.f32 0.0, %v877
      %v879 = vpop.f32.mrb[0].mxu0
      %880 = vmatprep.mubr.bf16.mxu0 0
      %881 = vmatmul.mubr.bf16.gmra.mrb[0].mxu0 %v549
      %v882 = vpop.f32.mrb[0].mxu0
      %v883 = vadd.f32 0.0, %v882
      %v884 = vpop.f32.mrb[0].mxu0
      %v885 = vpop.f32.mrb[0].mxu0
      %v886 = vadd.f32 0.0, %v885
      %v887 = vpop.f32.mrb[0].mxu0
      %888 = vmatprep.mubr.bf16.mxu0 0
      %889 = vmatmul.mubr.bf16.gmra.mrb[0].mxu0 %v550
      %v890 = vpop.f32.mrb[0].mxu0
      %v891 = vadd.f32 0.0, %v890
      %v892 = vpop.f32.mrb[0].mxu0
      %v893 = vpop.f32.mrb[0].mxu0
      %v894 = vadd.f32 0.0, %v893
      %v895 = vpop.f32.mrb[0].mxu0
      %896 = vmatprep.mubr.bf16.mxu0 0
      %897 = vmatmul.mubr.bf16.gmra.mrb[0].mxu0 %v551
      %v898 = vpop.f32.mrb[0].mxu0
      %v899 = vadd.f32 0.0, %v898
      %v900 = vpop.f32.mrb[0].mxu0
      %v901 = vpop.f32.mrb[0].mxu0
      %v902 = vadd.f32 0.0, %v901
      %v903 = vpop.f32.mrb[0].mxu0
      %904 = vmatprep.mubr.bf16.mxu0 0
      %905 = vmatmul.mubr.bf16.gmra.mrb[0].mxu0 %v552
      %v906 = vpop.f32.mrb[0].mxu0
      %v907 = vadd.f32 0.0, %v906
      %v908 = vpop.f32.mrb[0].mxu0
      %v909 = vpop.f32.mrb[0].mxu0
      %v910 = vadd.f32 0.0, %v909
      %v911 = vpop.f32.mrb[0].mxu0
      %912 = vmatprep.mubr.bf16.mxu0 0
      %913 = vmatmul.mubr.bf16.gmra.mrb[0].mxu0 %v553
      %v914 = vpop.f32.mrb[0].mxu0
      %v915 = vadd.f32 0.0, %v914
      %v916 = vpop.f32.mrb[0].mxu0
      %v917 = vpop.f32.mrb[0].mxu0
      %v918 = vadd.f32 0.0, %v917
      %v919 = vpop.f32.mrb[0].mxu0
      %920 = vmatprep.mubr.bf16.mxu0 0
      %921 = vmatmul.mubr.bf16.gmra.mrb[0].mxu0 %v554
      %v922 = vpop.f32.mrb[0].mxu0
      %v923 = vadd.f32 0.0, %v922
      %v924 = vpop.f32.mrb[0].mxu0
      %v925 = vpop.f32.mrb[0].mxu0
      %v926 = vadd.f32 0.0, %v925
      %v927 = vpop.f32.mrb[0].mxu0
      %928 = vmatprep.mubr.bf16.mxu0 0
      %929 = vmatmul.mubr.bf16.gmra.mrb[0].mxu0 %v555
      %v930 = vpop.f32.mrb[0].mxu0
      %v931 = vadd.f32 0.0, %v930
      %v932 = vpop.f32.mrb[0].mxu0
      %v933 = vpop.f32.mrb[0].mxu0
      %v934 = vadd.f32 0.0, %v933
      %v935 = vpop.f32.mrb[0].mxu0
      %936 = vmatprep.mubr.bf16.mxu0 0
      %937 = vmatmul.mubr.bf16.gmra.mrb[0].mxu0 %v556
      %v938 = vpop.f32.mrb[0].mxu0
      %v939 = vadd.f32 0.0, %v938
      %v940 = vpop.f32.mrb[0].mxu0
      %v941 = vpop.f32.mrb[0].mxu0
      %v942 = vadd.f32 0.0, %v941
      %v943 = vpop.f32.mrb[0].mxu0
      %944 = vmatprep.mubr.bf16.mxu0 0
      %945 = vmatmul.mubr.bf16.gmra.mrb[0].mxu0 %v557
      %v946 = vpop.f32.mrb[0].mxu0
      %v947 = vadd.f32 0.0, %v946
      %v948 = vpop.f32.mrb[0].mxu0
      %v949 = vpop.f32.mrb[0].mxu0
      %v950 = vadd.f32 0.0, %v949
      %v951 = vpop.f32.mrb[0].mxu0
      %952 = vmatprep.mubr.bf16.mxu0 0
      %953 = vmatmul.mubr.bf16.gmra.mrb[0].mxu0 %v558
      %v954 = vpop.f32.mrb[0].mxu0
      %v955 = vadd.f32 0.0, %v954
      %v956 = vpop.f32.mrb[0].mxu0
      %v957 = vpop.f32.mrb[0].mxu0
      %v958 = vadd.f32 0.0, %v957
      %v959 = vpop.f32.mrb[0].mxu0
      %960 = vmatprep.mubr.bf16.mxu0 0
      %961 = vmatmul.mubr.bf16.gmra.mrb[0].mxu0 %v559
      %v962 = vpop.f32.mrb[0].mxu0
      %v963 = vadd.f32 0.0, %v962
      %v964 = vpop.f32.mrb[0].mxu0
      %v965 = vpop.f32.mrb[0].mxu0
      %v966 = vadd.f32 0.0, %v965
      %v967 = vpop.f32.mrb[0].mxu0
      %968 = vmatprep.mubr.bf16.mxu0 0
      %969 = vmatmul.mubr.bf16.gmra.mrb[0].mxu0 %v560
      %v970 = vpop.f32.mrb[0].mxu0
      %v971 = vadd.f32 0.0, %v970
      %v972 = vpop.f32.mrb[0].mxu0
      %v973 = vpop.f32.mrb[0].mxu0
      %v974 = vadd.f32 0.0, %v973
      %v975 = vpop.f32.mrb[0].mxu0
      %976 = vmatprep.mubr.bf16.mxu0 0
      %977 = vmatmul.mubr.bf16.gmra.mrb[0].mxu0 %v561
      %v978 = vpop.f32.mrb[0].mxu0
      %v979 = vadd.f32 0.0, %v978
      %v980 = vpop.f32.mrb[0].mxu0
      %v981 = vpop.f32.mrb[0].mxu0
      %v982 = vadd.f32 0.0, %v981
      %v983 = vpop.f32.mrb[0].mxu0
      %984 = vmatprep.mubr.bf16.mxu0 0
      %985 = vmatmul.mubr.bf16.gmra.mrb[0].mxu0 %v562
      %v986 = vpop.f32.mrb[0].mxu0
      %v987 = vadd.f32 0.0, %v986
      %v988 = vpop.f32.mrb[0].mxu0
      %v989 = vpop.f32.mrb[0].mxu0
      %v990 = vadd.f32 0.0, %v989
      %v991 = vpop.f32.mrb[0].mxu0
      %992 = vmatprep.mubr.bf16.mxu0 0
      %993 = vmatmul.mubr.bf16.gmra.mrb[0].mxu0 %v563
      %v994 = vpop.f32.mrb[0].mxu0
      %v995 = vadd.f32 0.0, %v994
      %v996 = vpop.f32.mrb[0].mxu0
      %v997 = vpop.f32.mrb[0].mxu0
      %v998 = vadd.f32 0.0, %v997
      %v999 = vpop.f32.mrb[0].mxu0
      %1000 = vmatprep.mubr.bf16.mxu0 0
      %1001 = vmatmul.mubr.bf16.gmra.mrb[0].mxu0 %v564
      %v1002 = vpop.f32.mrb[0].mxu0
      %v1003 = vadd.f32 0.0, %v1002
      %v1004 = vpop.f32.mrb[0].mxu0
      %v1005 = vpop.f32.mrb[0].mxu0
      %v1006 = vadd.f32 0.0, %v1005
      %v1007 = vpop.f32.mrb[0].mxu0
      %1008 = vmatprep.mubr.bf16.mxu0 0
      %1009 = vmatmul.mubr.bf16.gmra.mrb[0].mxu0 %v565
      %v1010 = vpop.f32.mrb[0].mxu0
      %v1011 = vadd.f32 0.0, %v1010
      %v1012 = vpop.f32.mrb[0].mxu0
      %v1013 = vpop.f32.mrb[0].mxu0
      %v1014 = vadd.f32 0.0, %v1013
      %v1015 = vpop.f32.mrb[0].mxu0
      %1016 = vmatprep.mubr.bf16.mxu0 0
      %1017 = vmatmul.mubr.bf16.gmra.mrb[0].mxu0 %v566
      %v1018 = vpop.f32.mrb[0].mxu0
      %v1019 = vadd.f32 0.0, %v1018
      %v1020 = vpop.f32.mrb[0].mxu0
      %v1021 = vpop.f32.mrb[0].mxu0
      %v1022 = vadd.f32 0.0, %v1021
      %v1023 = vpop.f32.mrb[0].mxu0
      %1024 = vmatprep.mubr.bf16.mxu0 0
      %1025 = vmatmul.mubr.bf16.gmra.mrb[0].mxu0 %v567
      %v1026 = vpop.f32.mrb[0].mxu0
      %v1027 = vadd.f32 0.0, %v1026
      %v1028 = vpop.f32.mrb[0].mxu0
      %v1029 = vpop.f32.mrb[0].mxu0
      %v1030 = vadd.f32 0.0, %v1029
      %v1031 = vpop.f32.mrb[0].mxu0
      %1032 = vmatprep.mubr.bf16.mxu0 0
      %1033 = vmatmul.mubr.bf16.gmra.mrb[0].mxu0 %v568
      %v1034 = vpop.f32.mrb[0].mxu0
      %v1035 = vadd.f32 0.0, %v1034
      %v1036 = vpop.f32.mrb[0].mxu0
      %v1037 = vpop.f32.mrb[0].mxu0
      %v1038 = vadd.f32 0.0, %v1037
      %v1039 = vpop.f32.mrb[0].mxu0
      %1040 = vmatprep.mubr.bf16.mxu0 0
      %1041 = vmatmul.mubr.bf16.gmra.mrb[0].mxu0 %v569
      %v1042 = vpop.f32.mrb[0].mxu0
      %v1043 = vadd.f32 0.0, %v1042
      %v1044 = vpop.f32.mrb[0].mxu0
      %v1045 = vpop.f32.mrb[0].mxu0
      %v1046 = vadd.f32 0.0, %v1045
      %v1047 = vpop.f32.mrb[0].mxu0
      %1048 = vmatprep.mubr.bf16.mxu0 0
      %1049 = vmatmul.mubr.bf16.gmra.mrb[0].mxu0 %v570
      %v1050 = vpop.f32.mrb[0].mxu0
      %v1051 = vadd.f32 0.0, %v1050
      %v1052 = vpop.f32.mrb[0].mxu0
      %v1053 = vpop.f32.mrb[0].mxu0
      %v1054 = vadd.f32 0.0, %v1053
      %v1055 = vpop.f32.mrb[0].mxu0
      %1056 = vmatprep.mubr.bf16.mxu0 0
      %1057 = vmatmul.mubr.bf16.gmra.mrb[0].mxu0 %v571
      %v1058 = vpop.f32.mrb[0].mxu0
      %v1059 = vadd.f32 0.0, %v1058
      %v1060 = vpop.f32.mrb[0].mxu0
      %v1061 = vpop.f32.mrb[0].mxu0
      %v1062 = vadd.f32 0.0, %v1061
      %v1063 = vpop.f32.mrb[0].mxu0
      %1064 = vmatprep.mubr.bf16.mxu0 0
      %1065 = vmatmul.mubr.bf16.gmra.mrb[0].mxu0 %v572
      %v1066 = vpop.f32.mrb[0].mxu0
      %v1067 = vadd.f32 0.0, %v1066
      %v1068 = vpop.f32.mrb[0].mxu0
      %v1069 = vpop.f32.mrb[0].mxu0
      %v1070 = vadd.f32 0.0, %v1069
      %v1071 = vpop.f32.mrb[0].mxu0
      %1072 = vmatprep.mubr.bf16.mxu0 0
      %1073 = vmatmul.mubr.bf16.gmra.mrb[0].mxu0 %v573
      %v1074 = vpop.f32.mrb[0].mxu0
      %v1075 = vadd.f32 0.0, %v1074
      %v1076 = vpop.f32.mrb[0].mxu0
      %v1077 = vpop.f32.mrb[0].mxu0
      %v1078 = vadd.f32 0.0, %v1077
      %v1079 = vpop.f32.mrb[0].mxu0
      %1080 = vmatprep.mubr.bf16.mxu0 0
      %1081 = vmatmul.mubr.bf16.gmra.mrb[0].mxu0 %v574
      %v1082 = vpop.f32.mrb[0].mxu0
      %v1083 = vadd.f32 0.0, %v1082
      %v1084 = vpop.f32.mrb[0].mxu0
      %v1085 = vpop.f32.mrb[0].mxu0
      %v1086 = vadd.f32 0.0, %v1085
      %v1087 = vpop.f32.mrb[0].mxu0
      %1088 = vmatprep.mubr.bf16.mxu0 0
      %1089 = vmatmul.mubr.bf16.gmra.mrb[0].mxu0 %v575
      %v1090 = vpop.f32.mrb[0].mxu0
      %v1091 = vadd.f32 0.0, %v1090
      %v1092 = vpop.f32.mrb[0].mxu0
      %v1093 = vpop.f32.mrb[0].mxu0
      %v1094 = vadd.f32 0.0, %v1093
      %v1095 = vpop.f32.mrb[0].mxu0
      %1096 = vmatprep.mubr.bf16.mxu0 0
      %1097 = vmatmul.mubr.bf16.gmra.mrb[0].mxu0 %v576
      %v1098 = vpop.f32.mrb[0].mxu0
      %v1099 = vadd.f32 0.0, %v1098
      %v1100 = vpop.f32.mrb[0].mxu0
      %v1101 = vpop.f32.mrb[0].mxu0
      %v1102 = vadd.f32 0.0, %v1101
      %v1103 = vpop.f32.mrb[0].mxu0
      %1104 = vmatprep.mubr.bf16.mxu0 0
      %1105 = vmatmul.mubr.bf16.gmra.mrb[0].mxu0 %v577
      %v1106 = vpop.f32.mrb[0].mxu0
      %v1107 = vadd.f32 0.0, %v1106
      %v1108 = vpop.f32.mrb[0].mxu0
      %v1109 = vpop.f32.mrb[0].mxu0
      %v1110 = vadd.f32 0.0, %v1109
      %v1111 = vpop.f32.mrb[0].mxu0
      %1112 = vmatprep.mubr.bf16.mxu0 0
      %1113 = vmatmul.mubr.bf16.gmra.mrb[0].mxu0 %v578
      %v1114 = vpop.f32.mrb[0].mxu0
      %v1115 = vadd.f32 0.0, %v1114
      %v1116 = vpop.f32.mrb[0].mxu0
      %v1117 = vpop.f32.mrb[0].mxu0
      %v1118 = vadd.f32 0.0, %v1117
      %v1119 = vpop.f32.mrb[0].mxu0
      %1120 = vmatprep.mubr.bf16.mxu0 0
      %1121 = vmatmul.mubr.bf16.gmra.mrb[0].mxu0 %v579
      %v1122 = vpop.f32.mrb[0].mxu0
      %v1123 = vadd.f32 0.0, %v1122
      %v1124 = vpop.f32.mrb[0].mxu0
      %v1125 = vpop.f32.mrb[0].mxu0
      %v1126 = vadd.f32 0.0, %v1125
      %v1127 = vpop.f32.mrb[0].mxu0
      %1128 = vdwg.mxu0
      %v1129 = vmax.f32 %v715, %v819
      %v1130 = vmax.f32 %v718, %v822
      %v1131 = vmax.f32 %v723, %v827
      %v1132 = vmax.f32 %v726, %v830
      %v1133 = vmax.f32 %v731, %v835
      %v1134 = vmax.f32 %v734, %v838
      %v1135 = vmax.f32 %v739, %v843
      %v1136 = vmax.f32 %v742, %v846
      %v1137 = vmax.f32 %v747, %v851
      %v1138 = vmax.f32 %v750, %v854
      %v1139 = vmax.f32 %v755, %v859
      %v1140 = vmax.f32 %v758, %v862
      %v1141 = vmax.f32 %v763, %v867
      %v1142 = vmax.f32 %v766, %v870
      %v1143 = vmax.f32 %v771, %v875
      %v1144 = vmax.f32 %v774, %v878
      %v1145 = vmax.f32 %v779, %v883
      %v1146 = vmax.f32 %v782, %v886
      %v1147 = vmax.f32 %v787, %v891
      %v1148 = vmax.f32 %v790, %v894
      %v1149 = vmax.f32 %v795, %v899
      %v1150 = vmax.f32 %v798, %v902
      %v1151 = vmax.f32 %v803, %v907
      %v1152 = vmax.f32 %v806, %v910
      %v1153 = vmax.f32 %v811, %v915
      %v1154 = vmax.f32 %v814, %v918
      %v1155 = vmax.f32 %v923, %v1027
      %v1156 = vmax.f32 %v926, %v1030
      %v1157 = vmax.f32 %v931, %v1035
      %v1158 = vmax.f32 %v934, %v1038
      %v1159 = vmax.f32 %v939, %v1043
      %v1160 = vmax.f32 %v942, %v1046
      %v1161 = vmax.f32 %v947, %v1051
      %v1162 = vmax.f32 %v950, %v1054
      %v1163 = vmax.f32 %v955, %v1059
      %v1164 = vmax.f32 %v958, %v1062
      %v1165 = vmax.f32 %v963, %v1067
      %v1166 = vmax.f32 %v966, %v1070
      %v1167 = vmax.f32 %v971, %v1075
      %v1168 = vmax.f32 %v974, %v1078
      %v1169 = vmax.f32 %v979, %v1083
      %v1170 = vmax.f32 %v982, %v1086
      %v1171 = vmax.f32 %v987, %v1091
      %v1172 = vmax.f32 %v990, %v1094
      %v1173 = vmax.f32 %v995, %v1099
      %v1174 = vmax.f32 %v998, %v1102
      %v1175 = vmax.f32 %v1003, %v1107
      %v1176 = vmax.f32 %v1006, %v1110
      %v1177 = vmax.f32 %v1011, %v1115
      %v1178 = vmax.f32 %v1014, %v1118
      %v1179 = vmax.f32 %v1019, %v1123
      %v1180 = vmax.f32 %v1022, %v1126
      %v1181 = vmax.f32 %v1129, %v1155
      %v1182 = vmax.f32 %v1130, %v1156
      %v1183 = vmax.f32 %v1131, %v1157
      %v1184 = vmax.f32 %v1132, %v1158
      %v1185 = vmax.f32 %v1133, %v1159
      %v1186 = vmax.f32 %v1134, %v1160
      %v1187 = vmax.f32 %v1135, %v1161
      %v1188 = vmax.f32 %v1136, %v1162
      %v1189 = vmax.f32 %v1137, %v1163
      %v1190 = vmax.f32 %v1138, %v1164
      %v1191 = vmax.f32 %v1139, %v1165
      %v1192 = vmax.f32 %v1140, %v1166
      %v1193 = vmax.f32 %v1141, %v1167
      %v1194 = vmax.f32 %v1142, %v1168
      %v1195 = vmax.f32 %v1143, %v1169
      %v1196 = vmax.f32 %v1144, %v1170
      %v1197 = vmax.f32 %v1145, %v1171
      %v1198 = vmax.f32 %v1146, %v1172
      %v1199 = vmax.f32 %v1147, %v1173
      %v1200 = vmax.f32 %v1148, %v1174
      %v1201 = vmax.f32 %v1149, %v1175
      %v1202 = vmax.f32 %v1150, %v1176
      %v1203 = vmax.f32 %v1151, %v1177
      %v1204 = vmax.f32 %v1152, %v1178
      %v1205 = vmax.f32 %v1153, %v1179
      %v1206 = vmax.f32 %v1154, %v1180
      %v1207 = vld [vmem:[%s2] sm:$0x1]
      %v1209 = vlaneseq
      %v1210 = vshrl.u32 %v1209, 7
      %v1211 = vsub.s32 0, %v1210
      %v1212 = vrot.slane %v1207, %v1211
      %v1214 = vadd.f32 %v1181, %v1212
      %v1215 = vadd.f32 %v1182, %v1212
      %v1216 = vadd.f32 %v1183, %v1212
      %v1217 = vadd.f32 %v1184, %v1212
      %v1218 = vadd.f32 %v1185, %v1212
      %v1219 = vadd.f32 %v1186, %v1212
      %v1220 = vadd.f32 %v1187, %v1212
      %v1221 = vadd.f32 %v1188, %v1212
      %v1222 = vadd.f32 %v1189, %v1212
      %v1223 = vadd.f32 %v1190, %v1212
      %v1224 = vadd.f32 %v1191, %v1212
      %v1225 = vadd.f32 %v1192, %v1212
      %v1226 = vadd.f32 %v1193, %v1212
      %v1227 = vadd.f32 %v1194, %v1212
      %v1228 = vadd.f32 %v1195, %v1212
      %v1229 = vadd.f32 %v1196, %v1212
      %v1230 = vadd.f32 %v1197, %v1212
      %v1231 = vadd.f32 %v1198, %v1212
      %v1232 = vadd.f32 %v1199, %v1212
      %v1233 = vadd.f32 %v1200, %v1212
      %v1234 = vadd.f32 %v1201, %v1212
      %v1235 = vadd.f32 %v1202, %v1212
      %v1236 = vadd.f32 %v1203, %v1212
      %v1237 = vadd.f32 %v1204, %v1212
      %v1238 = vadd.f32 %v1205, %v1212
      %v1239 = vadd.f32 %v1206, %v1212
      %s1240 = sld [smem:[#allocation2]]
      %vm1241 = vcmp.ge.f32.partialorder %v1214, 0.0
      %vm1242 = vcmp.ge.f32.partialorder %v1215, 0.0
      %vm1243 = vcmp.ge.f32.partialorder %v1216, 0.0
      %vm1244 = vcmp.ge.f32.partialorder %v1217, 0.0
      %vm1245 = vcmp.ge.f32.partialorder %v1218, 0.0
      %vm1246 = vcmp.ge.f32.partialorder %v1219, 0.0
      %vm1247 = vcmp.ge.f32.partialorder %v1220, 0.0
      %vm1248 = vcmp.ge.f32.partialorder %v1221, 0.0
      %vm1249 = vcmp.ge.f32.partialorder %v1222, 0.0
      %vm1250 = vcmp.ge.f32.partialorder %v1223, 0.0
      %vm1251 = vcmp.ge.f32.partialorder %v1224, 0.0
      %vm1252 = vcmp.ge.f32.partialorder %v1225, 0.0
      %vm1253 = vcmp.ge.f32.partialorder %v1226, 0.0
      %vm1254 = vcmp.ge.f32.partialorder %v1227, 0.0
      %vm1255 = vcmp.ge.f32.partialorder %v1228, 0.0
      %vm1256 = vcmp.ge.f32.partialorder %v1229, 0.0
      %vm1257 = vcmp.ge.f32.partialorder %v1230, 0.0
      %vm1258 = vcmp.ge.f32.partialorder %v1231, 0.0
      %vm1259 = vcmp.ge.f32.partialorder %v1232, 0.0
      %vm1260 = vcmp.ge.f32.partialorder %v1233, 0.0
      %vm1261 = vcmp.ge.f32.partialorder %v1234, 0.0
      %vm1262 = vcmp.ge.f32.partialorder %v1235, 0.0
      %vm1263 = vcmp.ge.f32.partialorder %v1236, 0.0
      %vm1264 = vcmp.ge.f32.partialorder %v1237, 0.0
      %vm1265 = vcmp.ge.f32.partialorder %v1238, 0.0
      %vm1266 = vcmp.ge.f32.partialorder %v1239, 0.0
      %v1267 = vstv %s1240
      %v1268 = vmul.f32 %v1267, %v1214
      %v1269 = vmul.f32 %v1267, %v1215
      %v1270 = vmul.f32 %v1267, %v1216
      %v1271 = vmul.f32 %v1267, %v1217
      %v1272 = vmul.f32 %v1267, %v1218
      %v1273 = vmul.f32 %v1267, %v1219
      %v1274 = vmul.f32 %v1267, %v1220
      %v1275 = vmul.f32 %v1267, %v1221
      %v1276 = vmul.f32 %v1267, %v1222
      %v1277 = vmul.f32 %v1267, %v1223
      %v1278 = vmul.f32 %v1267, %v1224
      %v1279 = vmul.f32 %v1267, %v1225
      %v1280 = vmul.f32 %v1267, %v1226
      %v1281 = vmul.f32 %v1267, %v1227
      %v1282 = vmul.f32 %v1267, %v1228
      %v1283 = vmul.f32 %v1267, %v1229
      %v1284 = vmul.f32 %v1267, %v1230
      %v1285 = vmul.f32 %v1267, %v1231
      %v1286 = vmul.f32 %v1267, %v1232
      %v1287 = vmul.f32 %v1267, %v1233
      %v1288 = vmul.f32 %v1267, %v1234
      %v1289 = vmul.f32 %v1267, %v1235
      %v1290 = vmul.f32 %v1267, %v1236
      %v1291 = vmul.f32 %v1267, %v1237
      %v1292 = vmul.f32 %v1267, %v1238
      %v1293 = vmul.f32 %v1267, %v1239
      %v1294 = vsel %vm1241, %v1214, %v1268
      %v1295 = vsel %vm1242, %v1215, %v1269
      %v1296 = vsel %vm1243, %v1216, %v1270
      %v1297 = vsel %vm1244, %v1217, %v1271
      %v1298 = vsel %vm1245, %v1218, %v1272
      %v1299 = vsel %vm1246, %v1219, %v1273
      %v1300 = vsel %vm1247, %v1220, %v1274
      %v1301 = vsel %vm1248, %v1221, %v1275
      %v1302 = vsel %vm1249, %v1222, %v1276
      %v1303 = vsel %vm1250, %v1223, %v1277
      %v1304 = vsel %vm1251, %v1224, %v1278
      %v1305 = vsel %vm1252, %v1225, %v1279
      %v1306 = vsel %vm1253, %v1226, %v1280
      %v1307 = vsel %vm1254, %v1227, %v1281
      %v1308 = vsel %vm1255, %v1228, %v1282
      %v1309 = vsel %vm1256, %v1229, %v1283
      %v1310 = vsel %vm1257, %v1230, %v1284
      %v1311 = vsel %vm1258, %v1231, %v1285
      %v1312 = vsel %vm1259, %v1232, %v1286
      %v1313 = vsel %vm1260, %v1233, %v1287
      %v1314 = vsel %vm1261, %v1234, %v1288
      %v1315 = vsel %vm1262, %v1235, %v1289
      %v1316 = vsel %vm1263, %v1236, %v1290
      %v1317 = vsel %vm1264, %v1237, %v1291
      %v1318 = vsel %vm1265, %v1238, %v1292
      %v1319 = vsel %vm1266, %v1239, %v1293
      %v1320 = vpack.c.bf16 %v1295, %v1294
      %v1321 = vpack.c.bf16 %v1297, %v1296
      %v1322 = vpack.c.bf16 %v1299, %v1298
      %v1323 = vpack.c.bf16 %v1301, %v1300
      %v1324 = vpack.c.bf16 %v1303, %v1302
      %v1325 = vpack.c.bf16 %v1305, %v1304
      %v1326 = vpack.c.bf16 %v1307, %v1306
      %v1327 = vpack.c.bf16 %v1309, %v1308
      %v1328 = vpack.c.bf16 %v1311, %v1310
      %v1329 = vpack.c.bf16 %v1313, %v1312
      %v1330 = vpack.c.bf16 %v1315, %v1314
      %v1331 = vpack.c.bf16 %v1317, %v1316
      %v1332 = vpack.c.bf16 %v1319, %v1318
      %v1346 = vunpack.c.l.b16 %v1320
      %v1347 = vunpack.c.h.b16 %v1320
      %v1348 = vunpack.c.l.b16 %v1321
      %v1349 = vunpack.c.h.b16 %v1321
      %v1350 = vunpack.c.l.b16 %v1322
      %v1351 = vunpack.c.h.b16 %v1322
      %v1352 = vunpack.c.l.b16 %v1323
      %v1353 = vunpack.c.h.b16 %v1323
      %v1354 = vunpack.c.l.b16 %v1324
      %v1355 = vunpack.c.h.b16 %v1324
      %v1356 = vunpack.c.l.b16 %v1325
      %v1357 = vunpack.c.h.b16 %v1325
      %v1358 = vunpack.c.l.b16 %v1326
      %v1359 = vunpack.c.h.b16 %v1326
      %v1360 = vunpack.c.l.b16 %v1327
      %v1361 = vunpack.c.h.b16 %v1327
      %v1362 = vunpack.c.l.b16 %v1328
      %v1363 = vunpack.c.h.b16 %v1328
      %v1364 = vunpack.c.l.b16 %v1329
      %v1365 = vunpack.c.h.b16 %v1329
      %v1366 = vunpack.c.l.b16 %v1330
      %v1367 = vunpack.c.h.b16 %v1330
      %v1368 = vunpack.c.l.b16 %v1331
      %v1369 = vunpack.c.h.b16 %v1331
      %v1370 = vunpack.c.l.b16 %v1332
      %v1371 = vunpack.c.h.b16 %v1332
      %v1372 = vpack.c.b16 %v1346, %v1346
      %v1373 = vpack.c.b16 %v1347, %v1347
      %v1374 = vpack.c.b16 %v1348, %v1348
      %v1375 = vpack.c.b16 %v1349, %v1349
      %v1376 = vpack.c.b16 %v1350, %v1350
      %v1377 = vpack.c.b16 %v1351, %v1351
      %v1378 = vpack.c.b16 %v1352, %v1352
      %v1379 = vpack.c.b16 %v1353, %v1353
      %v1380 = vpack.c.b16 %v1354, %v1354
      %v1381 = vpack.c.b16 %v1355, %v1355
      %v1382 = vpack.c.b16 %v1356, %v1356
      %v1383 = vpack.c.b16 %v1357, %v1357
      %v1384 = vpack.c.b16 %v1358, %v1358
      %v1385 = vpack.c.b16 %v1359, %v1359
      %v1386 = vpack.c.b16 %v1360, %v1360
      %v1387 = vpack.c.b16 %v1361, %v1361
      %v1388 = vpack.c.b16 %v1362, %v1362
      %v1389 = vpack.c.b16 %v1363, %v1363
      %v1390 = vpack.c.b16 %v1364, %v1364
      %v1391 = vpack.c.b16 %v1365, %v1365
      %v1392 = vpack.c.b16 %v1366, %v1366
      %v1393 = vpack.c.b16 %v1367, %v1367
      %v1394 = vpack.c.b16 %v1368, %v1368
      %v1395 = vpack.c.b16 %v1369, %v1369
      %v1396 = vpack.c.b16 %v1370, %v1370
      %v1397 = vpack.c.b16 %v1371, %v1371
      %1424 = vst [vmem:[%s198] sm:$0xf] %v1372
      %1425 = vst [vmem:[%s198 + $0x4] sm:$0xf] %v1373
      %1426 = vst [vmem:[%s198 + $0x8] sm:$0xf] %v1374
      %1427 = vst [vmem:[%s198 + $0xc] sm:$0xf] %v1375
      %1428 = vst [vmem:[%s198 + $0x10] sm:$0xf] %v1376
      %1429 = vst [vmem:[%s198 + $0x14] sm:$0xf] %v1377
      %1430 = vst [vmem:[%s198 + $0x18] sm:$0xf] %v1378
      %1431 = vst [vmem:[%s198 + $0x1c] sm:$0xf] %v1379
      %1432 = vst [vmem:[%s198 + $0x20] sm:$0xf] %v1380
      %1433 = vst [vmem:[%s198 + $0x24] sm:$0xf] %v1381
      %1434 = vst [vmem:[%s198 + $0x28] sm:$0xf] %v1382
      %1435 = vst [vmem:[%s198 + $0x2c] sm:$0xf] %v1383
      %1436 = vst [vmem:[%s198 + $0x30] sm:$0xf] %v1384
      %1437 = vst [vmem:[%s198 + $0x34] sm:$0xf] %v1385
      %1438 = vst [vmem:[%s198 + $0x38] sm:$0xf] %v1386
      %1439 = vst [vmem:[%s198 + $0x3c] sm:$0xf] %v1387
      %1440 = vst [vmem:[%s198 + $0x40] sm:$0xf] %v1388
      %1441 = vst [vmem:[%s198 + $0x44] sm:$0xf] %v1389
      %1442 = vst [vmem:[%s198 + $0x48] sm:$0xf] %v1390
      %1443 = vst [vmem:[%s198 + $0x4c] sm:$0xf] %v1391
      %1444 = vst [vmem:[%s198 + $0x50] sm:$0xf] %v1392
      %1445 = vst [vmem:[%s198 + $0x54] sm:$0xf] %v1393
      %1446 = vst [vmem:[%s198 + $0x58] sm:$0xf] %v1394
      %1447 = vst [vmem:[%s198 + $0x5c] sm:$0xf] %v1395
      %1448 = vst [vmem:[%s198 + $0x60] sm:$0xf] %v1396
      %1449 = vst [vmem:[%s198 + $0x64] sm:$0xf] %v1397
      %p1450 = scmp.lt.s32.totalorder %s16, 1
      %s1451 = scalar_select %p1450, %s16, 1
      %s1452 = smul.addr %s1451, 26
      %s1453 = smul.addr %s1452, 4
      %s1454 = scalar_lea.vmem %s4, %s1453
      // Predicated region
      $region37: #{_lambda_.2} parent=35 // pred_check
        %p1455 = pneg %p123
      $region38: #{_lambda_.2} parent=35 // pred_check_branch
        %1457 = sbr.rel (%p1455) target = $region40
      $region39: #{_lambda_.2} parent=35 // pred_region
        _
      $region40: #{_lambda_.2} parent=35 // pred_fallthru
        _
    $region36: #{_lambda_.2} parent=5 // pred_fallthru
      _
    %p1458 = scmp.le.s32.totalorder 2, %s11
    // Predicated region
    $region41: #{_lambda_.2} parent=5 // pred_check
      %p1459 = pneg %p1458
    $region42: #{_lambda_.2} parent=5 // pred_check_branch
      %1461 = sbr.rel (%p1459) target = $region44
    $region43: #{_lambda_.2} parent=5 // pred_region
      %s1462 = ssub.s32 %s11, 2
      // Predicated region
      $region45: #{_lambda_.2} parent=43 // pred_check
        %p1463 = pneg %p129
      $region46: #{_lambda_.2} parent=43 // pred_check_branch
        %1465 = sbr.rel (%p1463) target = $region48
      $region47: #{_lambda_.2} parent=43 // pred_region
        %p1466 = scmp.lt.s32.totalorder %s17, 1
        %s1467 = scalar_select %p1466, %s17, 1
        %s1468 = smul.addr %s1467, 26
        %s1469 = smul.addr %s1468, 4
        %s1470 = scalar_lea.vmem %s4, %s1469
      $region48: #{_lambda_.2} parent=43 // pred_fallthru
        _
    $region44: #{_lambda_.2} parent=5 // pred_fallthru
      _
  $region6: #{_lambda_.2} parent=0 // loop_footer
    %s15 = sadd.s32 1, %s11
  $region7: #{_lambda_.2} parent=0 // loop_footer_branch
    %10 = sbr.rel target = $region3
  $region8: #{_lambda_.2} parent=0 // loop_exit
    _

// kernel: _lambda_.3
$region0: #{_lambda_.3}
  #allocation0 [shape = 'u32[]', space=smem, size = 0x4, offset = 0x4, fixed_abs, tag = 'smem constant byte address 0x4 - core index']
  #allocation1 [shape = 'u32[144,128]{1,0:T(1,128)}', space=vmem, size = 0x12000, scoped, tag = 'internal scratch']
  #allocation2 [shape = 'f32[1]{0:T(128)S(6)}', space=smem, size = 0x200, scoped, tag = 'scoped memory for _lambda_.3']
  %s0 = inlined_call_operand.vmem [shape: bf16[2,4,32,1280], index: 0, kind: input, shape index: {}]
  %s1 = inlined_call_operand.vmem [shape: bf16[1280,128], index: 1, kind: input, shape index: {}]
  %s2 = inlined_call_operand.vmem [shape: f32[1,128], index: 2, kind: input, shape index: {}]
  %s3 = inlined_call_operand.<no memory space> [shape: f32[1], index: 3, kind: input, shape index: {}]
  %s4 = inlined_call_operand.vmem [shape: bf16[25,128,128], index: 4, kind: input, shape index: {}]
  %s5 = inlined_call_operand.vmem [shape: f32[1,128], index: 5, kind: input, shape index: {}]
  %s6 = inlined_call_operand.hbm [shape: f32[2,1,128], index: 6, kind: output, shape index: {}]
  %s7 = sld [smem:[#allocation0]]
  $region57: #{_lambda_.3} parent=0
    _
  %s9 = ssub.s32 1, %s7
  %s10 = scalar_select 0, %s9, %s7
  %11 = sst [smem:[#allocation2]] %s3
  $region1: #{_lambda_.3} parent=0
    #allocation3 [shape = 'u8[1024]{0}', space=vmem, size = 0x400, scoped, tag = 'output window, operand 0']
    #allocation4 [shape = 's32[2]{0}', space=sflag, size = 0x8, scoped, tag = 'scoped memory for _lambda_.3']
    %12 = vsyncpa [#allocation4], 0
    %s13 = scalar_lea.sflag [#allocation4], 1
    %14 = vsyncpa %s13, 0
    loop: start=0, step=1, limit=4
    $region2: #{_lambda_.3} parent=1 // loop_pre_header
      _
    $region3: #{_lambda_.3} parent=1 // loop_header
      %s16 = sphi 0, %s20
      %p17 = scmp.ge.s32.totalorder %s16, 4
      %s26 = sphi 0, %s28
      %s29 = sphi 0, %s26
      %s30 = sphi 0, %s29
      %s46 = sphi 0, %s30
      %s50 = sphi 0, %s50
      %s52 = sphi 0, %s50
      %s53 = sphi 0, %s52
      %s67 = sphi 0, %s53
      %s71 = sphi 0, %s71
      %s73 = sphi 0, %s71
      %s74 = sphi 0, %s73
      %s88 = sphi 0, %s74
      %s92 = sphi 0, %s92
      %s94 = sphi 0, %s92
      %s95 = sphi 0, %s94
      %s109 = sphi 0, %s95
      %s113 = sphi 0, %s113
      %s115 = sphi 0, %s113
      %s116 = sphi 0, %s115
      %s130 = sphi 0, %s116
      %s134 = sphi 0, %s134
      %s136 = sphi 0, %s134
      %s137 = sphi 0, %s136
      %s151 = sphi 0, %s137
      %s157 = sphi 0, %s159
      %s160 = sphi 0, %s157
      %s161 = sphi 0, %s160
      %s177 = sphi 0, %s161
    $region4: #{_lambda_.3} parent=1 // loop_header_branch
      %19 = sbr.rel (%p17) target = $region8
    $region5: #{_lambda_.3} parent=1 // loop_body
      %s21 = ssub.s32 %s16, 1
      %s22 = ssub.s32 %s16, 2
      %s23 = sadd.s32 %s16, 1
      %s24 = ssub.s32 %s16, %s23
      %p25 = scmp.eq.s32.totalorder %s24, 0
      %s27 = sadd.s32 %s26, 1
      %s28 = scalar_select %p25, %s26, %s27
      %p31 = pneg %p25
      %p32 = scmp.eq.s32.totalorder %s16, 1
      %p33 = por %p31, %p32
      %p34 = scmp.ne.s32.totalorder %s26, %s29
      %p35 = scmp.eq.s32.totalorder %s16, 0
      %p36 = por %p34, %p35
      %p37 = scmp.ne.s32.totalorder %s26, %s29
      %p38 = scmp.eq.s32.totalorder %s21, 1
      %p39 = por %p37, %p38
      %p40 = scmp.ne.s32.totalorder %s29, %s30
      %p41 = scmp.eq.s32.totalorder %s21, 0
      %p42 = por %p40, %p41
      %p43 = scmp.ne.s32.totalorder %s29, %s30
      %p44 = scmp.eq.s32.totalorder %s22, 1
      %p45 = por %p43, %p44
      %p47 = scmp.ne.s32.totalorder %s30, %s46
      %p48 = scmp.eq.s32.totalorder %s22, 0
      %p49 = por %p47, %p48
      %s51 = sadd.s32 %s50, 1
      %p54 = scmp.eq.s32.totalorder %s16, 1
      %p55 = scmp.ne.s32.totalorder %s50, %s52
      %p56 = scmp.eq.s32.totalorder %s16, 0
      %p57 = por %p55, %p56
      %p58 = scmp.ne.s32.totalorder %s50, %s52
      %p59 = scmp.eq.s32.totalorder %s21, 1
      %p60 = por %p58, %p59
      %p61 = scmp.ne.s32.totalorder %s52, %s53
      %p62 = scmp.eq.s32.totalorder %s21, 0
      %p63 = por %p61, %p62
      %p64 = scmp.ne.s32.totalorder %s52, %s53
      %p65 = scmp.eq.s32.totalorder %s22, 1
      %p66 = por %p64, %p65
      %p68 = scmp.ne.s32.totalorder %s53, %s67
      %p69 = scmp.eq.s32.totalorder %s22, 0
      %p70 = por %p68, %p69
      %s72 = sadd.s32 %s71, 1
      %p75 = scmp.eq.s32.totalorder %s16, 1
      %p76 = scmp.ne.s32.totalorder %s71, %s73
      %p77 = scmp.eq.s32.totalorder %s16, 0
      %p78 = por %p76, %p77
      %p79 = scmp.ne.s32.totalorder %s71, %s73
      %p80 = scmp.eq.s32.totalorder %s21, 1
      %p81 = por %p79, %p80
      %p82 = scmp.ne.s32.totalorder %s73, %s74
      %p83 = scmp.eq.s32.totalorder %s21, 0
      %p84 = por %p82, %p83
      %p85 = scmp.ne.s32.totalorder %s73, %s74
      %p86 = scmp.eq.s32.totalorder %s22, 1
      %p87 = por %p85, %p86
      %p89 = scmp.ne.s32.totalorder %s74, %s88
      %p90 = scmp.eq.s32.totalorder %s22, 0
      %p91 = por %p89, %p90
      %s93 = sadd.s32 %s92, 1
      %p96 = scmp.eq.s32.totalorder %s16, 1
      %p97 = scmp.ne.s32.totalorder %s92, %s94
      %p98 = scmp.eq.s32.totalorder %s16, 0
      %p99 = por %p97, %p98
      %p100 = scmp.ne.s32.totalorder %s92, %s94
      %p101 = scmp.eq.s32.totalorder %s21, 1
      %p102 = por %p100, %p101
      %p103 = scmp.ne.s32.totalorder %s94, %s95
      %p104 = scmp.eq.s32.totalorder %s21, 0
      %p105 = por %p103, %p104
      %p106 = scmp.ne.s32.totalorder %s94, %s95
      %p107 = scmp.eq.s32.totalorder %s22, 1
      %p108 = por %p106, %p107
      %p110 = scmp.ne.s32.totalorder %s95, %s109
      %p111 = scmp.eq.s32.totalorder %s22, 0
      %p112 = por %p110, %p111
      %s114 = sadd.s32 %s113, 1
      %p117 = scmp.eq.s32.totalorder %s16, 1
      %p118 = scmp.ne.s32.totalorder %s113, %s115
      %p119 = scmp.eq.s32.totalorder %s16, 0
      %p120 = por %p118, %p119
      %p121 = scmp.ne.s32.totalorder %s113, %s115
      %p122 = scmp.eq.s32.totalorder %s21, 1
      %p123 = por %p121, %p122
      %p124 = scmp.ne.s32.totalorder %s115, %s116
      %p125 = scmp.eq.s32.totalorder %s21, 0
      %p126 = por %p124, %p125
      %p127 = scmp.ne.s32.totalorder %s115, %s116
      %p128 = scmp.eq.s32.totalorder %s22, 1
      %p129 = por %p127, %p128
      %p131 = scmp.ne.s32.totalorder %s116, %s130
      %p132 = scmp.eq.s32.totalorder %s22, 0
      %p133 = por %p131, %p132
      %s135 = sadd.s32 %s134, 1
      %p138 = scmp.eq.s32.totalorder %s16, 1
      %p139 = scmp.ne.s32.totalorder %s134, %s136
      %p140 = scmp.eq.s32.totalorder %s16, 0
      %p141 = por %p139, %p140
      %p142 = scmp.ne.s32.totalorder %s134, %s136
      %p143 = scmp.eq.s32.totalorder %s21, 1
      %p144 = por %p142, %p143
      %p145 = scmp.ne.s32.totalorder %s136, %s137
      %p146 = scmp.eq.s32.totalorder %s21, 0
      %p147 = por %p145, %p146
      %p148 = scmp.ne.s32.totalorder %s136, %s137
      %p149 = scmp.eq.s32.totalorder %s22, 1
      %p150 = por %p148, %p149
      %p152 = scmp.ne.s32.totalorder %s137, %s151
      %p153 = scmp.eq.s32.totalorder %s22, 0
      %p154 = por %p152, %p153
      %s155 = ssub.s32 %s16, %s23
      %p156 = scmp.eq.s32.totalorder %s155, 0
      %s158 = sadd.s32 %s157, 1
      %s159 = scalar_select %p156, %s157, %s158
      %p162 = pneg %p156
      %p163 = scmp.eq.s32.totalorder %s16, 1
      %p164 = por %p162, %p163
      %p165 = scmp.ne.s32.totalorder %s157, %s160
      %p166 = scmp.eq.s32.totalorder %s16, 0
      %p167 = por %p165, %p166
      %p168 = scmp.ne.s32.totalorder %s157, %s160
      %p169 = scmp.eq.s32.totalorder %s21, 1
      %p170 = por %p168, %p169
      %p171 = scmp.ne.s32.totalorder %s160, %s161
      %p172 = scmp.eq.s32.totalorder %s21, 0
      %p173 = por %p171, %p172
      %p174 = scmp.ne.s32.totalorder %s160, %s161
      %p175 = scmp.eq.s32.totalorder %s22, 1
      %p176 = por %p174, %p175
      %p178 = scmp.ne.s32.totalorder %s161, %s177
      %p179 = scmp.eq.s32.totalorder %s22, 0
      %p180 = por %p178, %p179
      %p181 = scmp.le.s32.totalorder 1, %s16
      %p182 = scmp.lt.s32.totalorder %s16, 3
      %p183 = pnand %p181, %p182
      %p184 = pneg %p183
      // Predicated region
      $region9: #{_lambda_.3} parent=5 // pred_check
        _
      $region10: #{_lambda_.3} parent=5 // pred_check_branch
        %186 = sbr.rel (%p183) target = $region12
      $region11: #{_lambda_.3} parent=5 // pred_region
        %s187 = ssub.s32 %s16, 1
        // Predicated region
        $region13: #{_lambda_.3} parent=11 // pred_check
          %p188 = pneg %p63
        $region14: #{_lambda_.3} parent=11 // pred_check_branch
          %190 = sbr.rel (%p188) target = $region16
        $region15: #{_lambda_.3} parent=11 // pred_region
          _
        $region16: #{_lambda_.3} parent=11 // pred_fallthru
          _
        // Predicated region
        $region17: #{_lambda_.3} parent=11 // pred_check
          %p191 = pneg %p84
        $region18: #{_lambda_.3} parent=11 // pred_check_branch
          %193 = sbr.rel (%p191) target = $region20
        $region19: #{_lambda_.3} parent=11 // pred_region
          _
        $region20: #{_lambda_.3} parent=11 // pred_fallthru
          _
        // Predicated region
        $region21: #{_lambda_.3} parent=11 // pred_check
          %p194 = pneg %p105
        $region22: #{_lambda_.3} parent=11 // pred_check_branch
          %196 = sbr.rel (%p194) target = $region24
        $region23: #{_lambda_.3} parent=11 // pred_region
          _
        $region24: #{_lambda_.3} parent=11 // pred_fallthru
          _
        // Predicated region
        $region25: #{_lambda_.3} parent=11 // pred_check
          %p197 = pneg %p126
        $region26: #{_lambda_.3} parent=11 // pred_check_branch
          %199 = sbr.rel (%p197) target = $region28
        $region27: #{_lambda_.3} parent=11 // pred_region
          _
        $region28: #{_lambda_.3} parent=11 // pred_fallthru
          _
        // Predicated region
        $region29: #{_lambda_.3} parent=11 // pred_check
          %p200 = pneg %p147
        $region30: #{_lambda_.3} parent=11 // pred_check_branch
          %202 = sbr.rel (%p200) target = $region32
        $region31: #{_lambda_.3} parent=11 // pred_region
          _
        $region32: #{_lambda_.3} parent=11 // pred_fallthru
          _
      $region12: #{_lambda_.3} parent=5 // pred_fallthru
        _
      %p203 = scmp.lt.s32.totalorder %s16, 2
      // Predicated region
      $region33: #{_lambda_.3} parent=5 // pred_check
        %p204 = pneg %p203
      $region34: #{_lambda_.3} parent=5 // pred_check_branch
        %206 = sbr.rel (%p204) target = $region36
      $region35: #{_lambda_.3} parent=5 // pred_region
        // Predicated region
        $region37: #{_lambda_.3} parent=35 // pred_check
          %p207 = pneg %p36
        $region38: #{_lambda_.3} parent=35 // pred_check_branch
          %209 = sbr.rel (%p207) target = $region40
        $region39: #{_lambda_.3} parent=35 // pred_region
          %p210 = scmp.lt.s32.totalorder %s16, 1
          %s211 = scalar_select %p210, %s16, 1
          %s212 = smul.addr %s211, 160
          %s213 = smul.addr %s212, 4
          %s214 = scalar_lea.vmem %s0, %s213
        $region40: #{_lambda_.3} parent=35 // pred_fallthru
          _
      $region36: #{_lambda_.3} parent=5 // pred_fallthru
        _
      %p215 = scmp.le.s32.totalorder 1, %s16
      %p216 = scmp.lt.s32.totalorder %s16, 3
      %p217 = pnand %p215, %p216
      %p218 = pneg %p217
      // Predicated region
      $region41: #{_lambda_.3} parent=5 // pred_check
        _
      $region42: #{_lambda_.3} parent=5 // pred_check_branch
        %220 = sbr.rel (%p217) target = $region44
      $region43: #{_lambda_.3} parent=5 // pred_region
        %s221 = ssub.s32 %s16, 1
        %p222 = scmp.lt.s32.totalorder %s21, 1
        %s223 = scalar_select %p222, %s21, 1
        %s224 = smul.addr %s223, 160
        %s225 = smul.addr %s224, 4
        %s226 = scalar_lea.vmem %s0, %s225
        %p227 = pneg %p42
        %p228 = pneg %p39
        %p229 = pneg %p63
        %p230 = pneg %p60
        %p231 = pneg %p84
        %p232 = pneg %p81
        %p233 = pneg %p105
        %p234 = pneg %p102
        %p235 = pneg %p126
        %p236 = pneg %p123
        %p237 = pneg %p147
        %p238 = pneg %p144
        %p239 = pneg %p173
        %p240 = pneg %p170
        %s241 = sand.u32 %s160, 1
        %s242 = scalar_lea.sflag [#allocation4], %s241
        %s243 = sand.u32 %s160, 1
        %s244 = scalar_lea.vmem [#allocation3], %s243
        %p245 = scmp.lt.s32.totalorder %s21, 1
        %s246 = scalar_select %p245, %s21, 1
        %s247 = smul.addr %s246, 160
        %s248 = smul.addr %s247, 4
        %s249 = scalar_lea.vmem %s0, %s248
        %v251 = vld [vmem:[%s249] sm:$0xff]
        %v252 = vld [vmem:[%s249 + $0x8] sm:$0xff]
        %v253 = vld [vmem:[%s249 + $0x10] sm:$0xff]
        %v254 = vld [vmem:[%s249 + $0x18] sm:$0xff]
        %v255 = vld [vmem:[%s249 + $0x20] sm:$0xff]
        %v256 = vld [vmem:[%s249 + $0x28] sm:$0xff]
        %v257 = vld [vmem:[%s249 + $0x30] sm:$0xff]
        %v258 = vld [vmem:[%s249 + $0x38] sm:$0xff]
        %v259 = vld [vmem:[%s249 + $0x40] sm:$0xff]
        %v260 = vld [vmem:[%s249 + $0x48] sm:$0xff]
        %v261 = vld [vmem:[%s249 + $0x50] sm:$0xff]
        %v262 = vld [vmem:[%s249 + $0x58] sm:$0xff]
        %v263 = vld [vmem:[%s249 + $0x60] sm:$0xff]
        %v264 = vld [vmem:[%s249 + $0x68] sm:$0xff]
        %v265 = vld [vmem:[%s249 + $0x70] sm:$0xff]
        %v266 = vld [vmem:[%s249 + $0x78] sm:$0xff]
        %v267 = vld [vmem:[%s249 + $0x80] sm:$0xff]
        %v268 = vld [vmem:[%s249 + $0x88] sm:$0xff]
        %v269 = vld [vmem:[%s249 + $0x90] sm:$0xff]
        %v270 = vld [vmem:[%s249 + $0x98] sm:$0xff]
        %v271 = vld [vmem:[%s249 + $0xa0] sm:$0xff]
        %v272 = vld [vmem:[%s249 + $0xa8] sm:$0xff]
        %v273 = vld [vmem:[%s249 + $0xb0] sm:$0xff]
        %v274 = vld [vmem:[%s249 + $0xb8] sm:$0xff]
        %v275 = vld [vmem:[%s249 + $0xc0] sm:$0xff]
        %v276 = vld [vmem:[%s249 + $0xc8] sm:$0xff]
        %v277 = vld [vmem:[%s249 + $0xd0] sm:$0xff]
        %v278 = vld [vmem:[%s249 + $0xd8] sm:$0xff]
        %v279 = vld [vmem:[%s249 + $0xe0] sm:$0xff]
        %v280 = vld [vmem:[%s249 + $0xe8] sm:$0xff]
        %v281 = vld [vmem:[%s249 + $0xf0] sm:$0xff]
        %v282 = vld [vmem:[%s249 + $0xf8] sm:$0xff]
        %v283 = vld [vmem:[%s249 + $0x100] sm:$0xff]
        %v284 = vld [vmem:[%s249 + $0x108] sm:$0xff]
        %v285 = vld [vmem:[%s249 + $0x110] sm:$0xff]
        %v286 = vld [vmem:[%s249 + $0x118] sm:$0xff]
        %v287 = vld [vmem:[%s249 + $0x120] sm:$0xff]
        %v288 = vld [vmem:[%s249 + $0x128] sm:$0xff]
        %v289 = vld [vmem:[%s249 + $0x130] sm:$0xff]
        %v290 = vld [vmem:[%s249 + $0x138] sm:$0xff]
        %v291 = vld [vmem:[%s249 + $0x140] sm:$0xff]
        %v292 = vld [vmem:[%s249 + $0x148] sm:$0xff]
        %v293 = vld [vmem:[%s249 + $0x150] sm:$0xff]
        %v294 = vld [vmem:[%s249 + $0x158] sm:$0xff]
        %v295 = vld [vmem:[%s249 + $0x160] sm:$0xff]
        %v296 = vld [vmem:[%s249 + $0x168] sm:$0xff]
        %v297 = vld [vmem:[%s249 + $0x170] sm:$0xff]
        %v298 = vld [vmem:[%s249 + $0x178] sm:$0xff]
        %v299 = vld [vmem:[%s249 + $0x180] sm:$0xff]
        %v300 = vld [vmem:[%s249 + $0x188] sm:$0xff]
        %v301 = vld [vmem:[%s249 + $0x190] sm:$0xff]
        %v302 = vld [vmem:[%s249 + $0x198] sm:$0xff]
        %v303 = vld [vmem:[%s249 + $0x1a0] sm:$0xff]
        %v304 = vld [vmem:[%s249 + $0x1a8] sm:$0xff]
        %v305 = vld [vmem:[%s249 + $0x1b0] sm:$0xff]
        %v306 = vld [vmem:[%s249 + $0x1b8] sm:$0xff]
        %v307 = vld [vmem:[%s249 + $0x1c0] sm:$0xff]
        %v308 = vld [vmem:[%s249 + $0x1c8] sm:$0xff]
        %v309 = vld [vmem:[%s249 + $0x1d0] sm:$0xff]
        %v310 = vld [vmem:[%s249 + $0x1d8] sm:$0xff]
        %v311 = vld [vmem:[%s249 + $0x1e0] sm:$0xff]
        %v312 = vld [vmem:[%s249 + $0x1e8] sm:$0xff]
        %v313 = vld [vmem:[%s249 + $0x1f0] sm:$0xff]
        %v314 = vld [vmem:[%s249 + $0x1f8] sm:$0xff]
        %v315 = vld [vmem:[%s249 + $0x200] sm:$0xff]
        %v316 = vld [vmem:[%s249 + $0x208] sm:$0xff]
        %v317 = vld [vmem:[%s249 + $0x210] sm:$0xff]
        %v318 = vld [vmem:[%s249 + $0x218] sm:$0xff]
        %v319 = vld [vmem:[%s249 + $0x220] sm:$0xff]
        %v320 = vld [vmem:[%s249 + $0x228] sm:$0xff]
        %v321 = vld [vmem:[%s249 + $0x230] sm:$0xff]
        %v322 = vld [vmem:[%s249 + $0x238] sm:$0xff]
        %v323 = vld [vmem:[%s249 + $0x240] sm:$0xff]
        %v324 = vld [vmem:[%s249 + $0x248] sm:$0xff]
        %v325 = vld [vmem:[%s249 + $0x250] sm:$0xff]
        %v326 = vld [vmem:[%s249 + $0x258] sm:$0xff]
        %v327 = vld [vmem:[%s249 + $0x260] sm:$0xff]
        %v328 = vld [vmem:[%s249 + $0x268] sm:$0xff]
        %v329 = vld [vmem:[%s249 + $0x270] sm:$0xff]
        %v330 = vld [vmem:[%s249 + $0x278] sm:$0xff]
        %v331 = vld [vmem:[%s1] sm:$0xf]
        %v332 = vld [vmem:[%s1 + $0x4] sm:$0xf]
        %v333 = vld [vmem:[%s1 + $0x8] sm:$0xf]
        %v334 = vld [vmem:[%s1 + $0xc] sm:$0xf]
        %v335 = vld [vmem:[%s1 + $0x10] sm:$0xf]
        %v336 = vld [vmem:[%s1 + $0x14] sm:$0xf]
        %v337 = vld [vmem:[%s1 + $0x18] sm:$0xf]
        %v338 = vld [vmem:[%s1 + $0x1c] sm:$0xf]
        %v339 = vld [vmem:[%s1 + $0x20] sm:$0xf]
        %v340 = vld [vmem:[%s1 + $0x24] sm:$0xf]
        %v341 = vld [vmem:[%s1 + $0x28] sm:$0xf]
        %v342 = vld [vmem:[%s1 + $0x2c] sm:$0xf]
        %v343 = vld [vmem:[%s1 + $0x30] sm:$0xf]
        %v344 = vld [vmem:[%s1 + $0x34] sm:$0xf]
        %v345 = vld [vmem:[%s1 + $0x38] sm:$0xf]
        %v346 = vld [vmem:[%s1 + $0x3c] sm:$0xf]
        %v347 = vld [vmem:[%s1 + $0x40] sm:$0xf]
        %v348 = vld [vmem:[%s1 + $0x44] sm:$0xf]
        %v349 = vld [vmem:[%s1 + $0x48] sm:$0xf]
        %v350 = vld [vmem:[%s1 + $0x4c] sm:$0xf]
        %v351 = vld [vmem:[%s1 + $0x50] sm:$0xf]
        %v352 = vld [vmem:[%s1 + $0x54] sm:$0xf]
        %v353 = vld [vmem:[%s1 + $0x58] sm:$0xf]
        %v354 = vld [vmem:[%s1 + $0x5c] sm:$0xf]
        %v355 = vld [vmem:[%s1 + $0x60] sm:$0xf]
        %v356 = vld [vmem:[%s1 + $0x64] sm:$0xf]
        %v357 = vld [vmem:[%s1 + $0x68] sm:$0xf]
        %v358 = vld [vmem:[%s1 + $0x6c] sm:$0xf]
        %v359 = vld [vmem:[%s1 + $0x70] sm:$0xf]
        %v360 = vld [vmem:[%s1 + $0x74] sm:$0xf]
        %v361 = vld [vmem:[%s1 + $0x78] sm:$0xf]
        %v362 = vld [vmem:[%s1 + $0x7c] sm:$0xf]
        %v363 = vld [vmem:[%s1 + $0x80] sm:$0xf]
        %v364 = vld [vmem:[%s1 + $0x84] sm:$0xf]
        %v365 = vld [vmem:[%s1 + $0x88] sm:$0xf]
        %v366 = vld [vmem:[%s1 + $0x8c] sm:$0xf]
        %v367 = vld [vmem:[%s1 + $0x90] sm:$0xf]
        %v368 = vld [vmem:[%s1 + $0x94] sm:$0xf]
        %v369 = vld [vmem:[%s1 + $0x98] sm:$0xf]
        %v370 = vld [vmem:[%s1 + $0x9c] sm:$0xf]
        %v371 = vld [vmem:[%s1 + $0xa0] sm:$0xf]
        %v372 = vld [vmem:[%s1 + $0xa4] sm:$0xf]
        %v373 = vld [vmem:[%s1 + $0xa8] sm:$0xf]
        %v374 = vld [vmem:[%s1 + $0xac] sm:$0xf]
        %v375 = vld [vmem:[%s1 + $0xb0] sm:$0xf]
        %v376 = vld [vmem:[%s1 + $0xb4] sm:$0xf]
        %v377 = vld [vmem:[%s1 + $0xb8] sm:$0xf]
        %v378 = vld [vmem:[%s1 + $0xbc] sm:$0xf]
        %v379 = vld [vmem:[%s1 + $0xc0] sm:$0xf]
        %v380 = vld [vmem:[%s1 + $0xc4] sm:$0xf]
        %v381 = vld [vmem:[%s1 + $0xc8] sm:$0xf]
        %v382 = vld [vmem:[%s1 + $0xcc] sm:$0xf]
        %v383 = vld [vmem:[%s1 + $0xd0] sm:$0xf]
        %v384 = vld [vmem:[%s1 + $0xd4] sm:$0xf]
        %v385 = vld [vmem:[%s1 + $0xd8] sm:$0xf]
        %v386 = vld [vmem:[%s1 + $0xdc] sm:$0xf]
        %v387 = vld [vmem:[%s1 + $0xe0] sm:$0xf]
        %v388 = vld [vmem:[%s1 + $0xe4] sm:$0xf]
        %v389 = vld [vmem:[%s1 + $0xe8] sm:$0xf]
        %v390 = vld [vmem:[%s1 + $0xec] sm:$0xf]
        %v391 = vld [vmem:[%s1 + $0xf0] sm:$0xf]
        %v392 = vld [vmem:[%s1 + $0xf4] sm:$0xf]
        %v393 = vld [vmem:[%s1 + $0xf8] sm:$0xf]
        %v394 = vld [vmem:[%s1 + $0xfc] sm:$0xf]
        %v395 = vld [vmem:[%s1 + $0x100] sm:$0xf]
        %v396 = vld [vmem:[%s1 + $0x104] sm:$0xf]
        %v397 = vld [vmem:[%s1 + $0x108] sm:$0xf]
        %v398 = vld [vmem:[%s1 + $0x10c] sm:$0xf]
        %v399 = vld [vmem:[%s1 + $0x110] sm:$0xf]
        %v400 = vld [vmem:[%s1 + $0x114] sm:$0xf]
        %v401 = vld [vmem:[%s1 + $0x118] sm:$0xf]
        %v402 = vld [vmem:[%s1 + $0x11c] sm:$0xf]
        %v403 = vld [vmem:[%s1 + $0x120] sm:$0xf]
        %v404 = vld [vmem:[%s1 + $0x124] sm:$0xf]
        %v405 = vld [vmem:[%s1 + $0x128] sm:$0xf]
        %v406 = vld [vmem:[%s1 + $0x12c] sm:$0xf]
        %v407 = vld [vmem:[%s1 + $0x130] sm:$0xf]
        %v408 = vld [vmem:[%s1 + $0x134] sm:$0xf]
        %v409 = vld [vmem:[%s1 + $0x138] sm:$0xf]
        %v410 = vld [vmem:[%s1 + $0x13c] sm:$0xf]
        %v411 = vld [vmem:[%s1 + $0x140] sm:$0xf]
        %v412 = vld [vmem:[%s1 + $0x144] sm:$0xf]
        %v413 = vld [vmem:[%s1 + $0x148] sm:$0xf]
        %v414 = vld [vmem:[%s1 + $0x14c] sm:$0xf]
        %v415 = vld [vmem:[%s1 + $0x150] sm:$0xf]
        %v416 = vld [vmem:[%s1 + $0x154] sm:$0xf]
        %v417 = vld [vmem:[%s1 + $0x158] sm:$0xf]
        %v418 = vld [vmem:[%s1 + $0x15c] sm:$0xf]
        %v419 = vld [vmem:[%s1 + $0x160] sm:$0xf]
        %v420 = vld [vmem:[%s1 + $0x164] sm:$0xf]
        %v421 = vld [vmem:[%s1 + $0x168] sm:$0xf]
        %v422 = vld [vmem:[%s1 + $0x16c] sm:$0xf]
        %v423 = vld [vmem:[%s1 + $0x170] sm:$0xf]
        %v424 = vld [vmem:[%s1 + $0x174] sm:$0xf]
        %v425 = vld [vmem:[%s1 + $0x178] sm:$0xf]
        %v426 = vld [vmem:[%s1 + $0x17c] sm:$0xf]
        %v427 = vld [vmem:[%s1 + $0x180] sm:$0xf]
        %v428 = vld [vmem:[%s1 + $0x184] sm:$0xf]
        %v429 = vld [vmem:[%s1 + $0x188] sm:$0xf]
        %v430 = vld [vmem:[%s1 + $0x18c] sm:$0xf]
        %v431 = vld [vmem:[%s1 + $0x190] sm:$0xf]
        %v432 = vld [vmem:[%s1 + $0x194] sm:$0xf]
        %v433 = vld [vmem:[%s1 + $0x198] sm:$0xf]
        %v434 = vld [vmem:[%s1 + $0x19c] sm:$0xf]
        %v435 = vld [vmem:[%s1 + $0x1a0] sm:$0xf]
        %v436 = vld [vmem:[%s1 + $0x1a4] sm:$0xf]
        %v437 = vld [vmem:[%s1 + $0x1a8] sm:$0xf]
        %v438 = vld [vmem:[%s1 + $0x1ac] sm:$0xf]
        %v439 = vld [vmem:[%s1 + $0x1b0] sm:$0xf]
        %v440 = vld [vmem:[%s1 + $0x1b4] sm:$0xf]
        %v441 = vld [vmem:[%s1 + $0x1b8] sm:$0xf]
        %v442 = vld [vmem:[%s1 + $0x1bc] sm:$0xf]
        %v443 = vld [vmem:[%s1 + $0x1c0] sm:$0xf]
        %v444 = vld [vmem:[%s1 + $0x1c4] sm:$0xf]
        %v445 = vld [vmem:[%s1 + $0x1c8] sm:$0xf]
        %v446 = vld [vmem:[%s1 + $0x1cc] sm:$0xf]
        %v447 = vld [vmem:[%s1 + $0x1d0] sm:$0xf]
        %v448 = vld [vmem:[%s1 + $0x1d4] sm:$0xf]
        %v449 = vld [vmem:[%s1 + $0x1d8] sm:$0xf]
        %v450 = vld [vmem:[%s1 + $0x1dc] sm:$0xf]
        %v451 = vld [vmem:[%s1 + $0x1e0] sm:$0xf]
        %v452 = vld [vmem:[%s1 + $0x1e4] sm:$0xf]
        %v453 = vld [vmem:[%s1 + $0x1e8] sm:$0xf]
        %v454 = vld [vmem:[%s1 + $0x1ec] sm:$0xf]
        %v455 = vld [vmem:[%s1 + $0x1f0] sm:$0xf]
        %v456 = vld [vmem:[%s1 + $0x1f4] sm:$0xf]
        %v457 = vld [vmem:[%s1 + $0x1f8] sm:$0xf]
        %v458 = vld [vmem:[%s1 + $0x1fc] sm:$0xf]
        %v459 = vld [vmem:[%s1 + $0x200] sm:$0xf]
        %v460 = vld [vmem:[%s1 + $0x204] sm:$0xf]
        %v461 = vld [vmem:[%s1 + $0x208] sm:$0xf]
        %v462 = vld [vmem:[%s1 + $0x20c] sm:$0xf]
        %v463 = vld [vmem:[%s1 + $0x210] sm:$0xf]
        %v464 = vld [vmem:[%s1 + $0x214] sm:$0xf]
        %v465 = vld [vmem:[%s1 + $0x218] sm:$0xf]
        %v466 = vld [vmem:[%s1 + $0x21c] sm:$0xf]
        %v467 = vld [vmem:[%s1 + $0x220] sm:$0xf]
        %v468 = vld [vmem:[%s1 + $0x224] sm:$0xf]
        %v469 = vld [vmem:[%s1 + $0x228] sm:$0xf]
        %v470 = vld [vmem:[%s1 + $0x22c] sm:$0xf]
        %v471 = vld [vmem:[%s1 + $0x230] sm:$0xf]
        %v472 = vld [vmem:[%s1 + $0x234] sm:$0xf]
        %v473 = vld [vmem:[%s1 + $0x238] sm:$0xf]
        %v474 = vld [vmem:[%s1 + $0x23c] sm:$0xf]
        %v475 = vld [vmem:[%s1 + $0x240] sm:$0xf]
        %v476 = vld [vmem:[%s1 + $0x244] sm:$0xf]
        %v477 = vld [vmem:[%s1 + $0x248] sm:$0xf]
        %v478 = vld [vmem:[%s1 + $0x24c] sm:$0xf]
        %v479 = vld [vmem:[%s1 + $0x250] sm:$0xf]
        %v480 = vld [vmem:[%s1 + $0x254] sm:$0xf]
        %v481 = vld [vmem:[%s1 + $0x258] sm:$0xf]
        %v482 = vld [vmem:[%s1 + $0x25c] sm:$0xf]
        %v483 = vld [vmem:[%s1 + $0x260] sm:$0xf]
        %v484 = vld [vmem:[%s1 + $0x264] sm:$0xf]
        %v485 = vld [vmem:[%s1 + $0x268] sm:$0xf]
        %v486 = vld [vmem:[%s1 + $0x26c] sm:$0xf]
        %v487 = vld [vmem:[%s1 + $0x270] sm:$0xf]
        %v488 = vld [vmem:[%s1 + $0x274] sm:$0xf]
        %v489 = vld [vmem:[%s1 + $0x278] sm:$0xf]
        %v490 = vld [vmem:[%s1 + $0x27c] sm:$0xf]
        %v571 = vunpack.c.l.b16 %v251
        %v572 = vunpack.c.h.b16 %v251
        %v573 = vunpack.c.l.b16 %v252
        %v574 = vunpack.c.h.b16 %v252
        %v575 = vunpack.c.l.b16 %v253
        %v576 = vunpack.c.h.b16 %v253
        %v577 = vunpack.c.l.b16 %v254
        %v578 = vunpack.c.h.b16 %v254
        %v579 = vunpack.c.l.b16 %v255
        %v580 = vunpack.c.h.b16 %v255
        %v581 = vunpack.c.l.b16 %v256
        %v582 = vunpack.c.h.b16 %v256
        %v583 = vunpack.c.l.b16 %v257
        %v584 = vunpack.c.h.b16 %v257
        %v585 = vunpack.c.l.b16 %v258
        %v586 = vunpack.c.h.b16 %v258
        %v587 = vunpack.c.l.b16 %v259
        %v588 = vunpack.c.h.b16 %v259
        %v589 = vunpack.c.l.b16 %v260
        %v590 = vunpack.c.h.b16 %v260
        %v591 = vunpack.c.l.b16 %v261
        %v592 = vunpack.c.h.b16 %v261
        %v593 = vunpack.c.l.b16 %v262
        %v594 = vunpack.c.h.b16 %v262
        %v595 = vunpack.c.l.b16 %v263
        %v596 = vunpack.c.h.b16 %v263
        %v597 = vunpack.c.l.b16 %v264
        %v598 = vunpack.c.h.b16 %v264
        %v599 = vunpack.c.l.b16 %v265
        %v600 = vunpack.c.h.b16 %v265
        %v601 = vunpack.c.l.b16 %v266
        %v602 = vunpack.c.h.b16 %v266
        %v603 = vunpack.c.l.b16 %v267
        %v604 = vunpack.c.h.b16 %v267
        %v605 = vunpack.c.l.b16 %v268
        %v606 = vunpack.c.h.b16 %v268
        %v607 = vunpack.c.l.b16 %v269
        %v608 = vunpack.c.h.b16 %v269
        %v609 = vunpack.c.l.b16 %v270
        %v610 = vunpack.c.h.b16 %v270
        %v611 = vunpack.c.l.b16 %v271
        %v612 = vunpack.c.h.b16 %v271
        %v613 = vunpack.c.l.b16 %v272
        %v614 = vunpack.c.h.b16 %v272
        %v615 = vunpack.c.l.b16 %v273
        %v616 = vunpack.c.h.b16 %v273
        %v617 = vunpack.c.l.b16 %v274
        %v618 = vunpack.c.h.b16 %v274
        %v619 = vunpack.c.l.b16 %v275
        %v620 = vunpack.c.h.b16 %v275
        %v621 = vunpack.c.l.b16 %v276
        %v622 = vunpack.c.h.b16 %v276
        %v623 = vunpack.c.l.b16 %v277
        %v624 = vunpack.c.h.b16 %v277
        %v625 = vunpack.c.l.b16 %v278
        %v626 = vunpack.c.h.b16 %v278
        %v627 = vunpack.c.l.b16 %v279
        %v628 = vunpack.c.h.b16 %v279
        %v629 = vunpack.c.l.b16 %v280
        %v630 = vunpack.c.h.b16 %v280
        %v631 = vunpack.c.l.b16 %v281
        %v632 = vunpack.c.h.b16 %v281
        %v633 = vunpack.c.l.b16 %v282
        %v634 = vunpack.c.h.b16 %v282
        %v635 = vunpack.c.l.b16 %v283
        %v636 = vunpack.c.h.b16 %v283
        %v637 = vunpack.c.l.b16 %v284
        %v638 = vunpack.c.h.b16 %v284
        %v639 = vunpack.c.l.b16 %v285
        %v640 = vunpack.c.h.b16 %v285
        %v641 = vunpack.c.l.b16 %v286
        %v642 = vunpack.c.h.b16 %v286
        %v643 = vunpack.c.l.b16 %v287
        %v644 = vunpack.c.h.b16 %v287
        %v645 = vunpack.c.l.b16 %v288
        %v646 = vunpack.c.h.b16 %v288
        %v647 = vunpack.c.l.b16 %v289
        %v648 = vunpack.c.h.b16 %v289
        %v649 = vunpack.c.l.b16 %v290
        %v650 = vunpack.c.h.b16 %v290
        %v651 = vunpack.c.l.b16 %v291
        %v652 = vunpack.c.h.b16 %v291
        %v653 = vunpack.c.l.b16 %v292
        %v654 = vunpack.c.h.b16 %v292
        %v655 = vunpack.c.l.b16 %v293
        %v656 = vunpack.c.h.b16 %v293
        %v657 = vunpack.c.l.b16 %v294
        %v658 = vunpack.c.h.b16 %v294
        %v659 = vunpack.c.l.b16 %v295
        %v660 = vunpack.c.h.b16 %v295
        %v661 = vunpack.c.l.b16 %v296
        %v662 = vunpack.c.h.b16 %v296
        %v663 = vunpack.c.l.b16 %v297
        %v664 = vunpack.c.h.b16 %v297
        %v665 = vunpack.c.l.b16 %v298
        %v666 = vunpack.c.h.b16 %v298
        %v667 = vunpack.c.l.b16 %v299
        %v668 = vunpack.c.h.b16 %v299
        %v669 = vunpack.c.l.b16 %v300
        %v670 = vunpack.c.h.b16 %v300
        %v671 = vunpack.c.l.b16 %v301
        %v672 = vunpack.c.h.b16 %v301
        %v673 = vunpack.c.l.b16 %v302
        %v674 = vunpack.c.h.b16 %v302
        %v675 = vunpack.c.l.b16 %v303
        %v676 = vunpack.c.h.b16 %v303
        %v677 = vunpack.c.l.b16 %v304
        %v678 = vunpack.c.h.b16 %v304
        %v679 = vunpack.c.l.b16 %v305
        %v680 = vunpack.c.h.b16 %v305
        %v681 = vunpack.c.l.b16 %v306
        %v682 = vunpack.c.h.b16 %v306
        %v683 = vunpack.c.l.b16 %v307
        %v684 = vunpack.c.h.b16 %v307
        %v685 = vunpack.c.l.b16 %v308
        %v686 = vunpack.c.h.b16 %v308
        %v687 = vunpack.c.l.b16 %v309
        %v688 = vunpack.c.h.b16 %v309
        %v689 = vunpack.c.l.b16 %v310
        %v690 = vunpack.c.h.b16 %v310
        %v691 = vunpack.c.l.b16 %v311
        %v692 = vunpack.c.h.b16 %v311
        %v693 = vunpack.c.l.b16 %v312
        %v694 = vunpack.c.h.b16 %v312
        %v695 = vunpack.c.l.b16 %v313
        %v696 = vunpack.c.h.b16 %v313
        %v697 = vunpack.c.l.b16 %v314
        %v698 = vunpack.c.h.b16 %v314
        %v699 = vunpack.c.l.b16 %v315
        %v700 = vunpack.c.h.b16 %v315
        %v701 = vunpack.c.l.b16 %v316
        %v702 = vunpack.c.h.b16 %v316
        %v703 = vunpack.c.l.b16 %v317
        %v704 = vunpack.c.h.b16 %v317
        %v705 = vunpack.c.l.b16 %v318
        %v706 = vunpack.c.h.b16 %v318
        %v707 = vunpack.c.l.b16 %v319
        %v708 = vunpack.c.h.b16 %v319
        %v709 = vunpack.c.l.b16 %v320
        %v710 = vunpack.c.h.b16 %v320
        %v711 = vunpack.c.l.b16 %v321
        %v712 = vunpack.c.h.b16 %v321
        %v713 = vunpack.c.l.b16 %v322
        %v714 = vunpack.c.h.b16 %v322
        %v715 = vunpack.c.l.b16 %v323
        %v716 = vunpack.c.h.b16 %v323
        %v717 = vunpack.c.l.b16 %v324
        %v718 = vunpack.c.h.b16 %v324
        %v719 = vunpack.c.l.b16 %v325
        %v720 = vunpack.c.h.b16 %v325
        %v721 = vunpack.c.l.b16 %v326
        %v722 = vunpack.c.h.b16 %v326
        %v723 = vunpack.c.l.b16 %v327
        %v724 = vunpack.c.h.b16 %v327
        %v725 = vunpack.c.l.b16 %v328
        %v726 = vunpack.c.h.b16 %v328
        %v727 = vunpack.c.l.b16 %v329
        %v728 = vunpack.c.h.b16 %v329
        %v729 = vunpack.c.l.b16 %v330
        %v730 = vunpack.c.h.b16 %v330
        %v731 = vpack.c.b16 %v581, %v571
        %v732 = vpack.c.b16 %v582, %v572
        %v733 = vpack.c.b16 %v583, %v573
        %v734 = vpack.c.b16 %v584, %v574
        %v735 = vpack.c.b16 %v585, %v575
        %v736 = vpack.c.b16 %v586, %v576
        %v737 = vpack.c.b16 %v587, %v577
        %v738 = vpack.c.b16 %v588, %v578
        %v739 = vpack.c.b16 %v589, %v579
        %v740 = vpack.c.b16 %v590, %v580
        %v741 = vpack.c.b16 %v601, %v591
        %v742 = vpack.c.b16 %v602, %v592
        %v743 = vpack.c.b16 %v603, %v593
        %v744 = vpack.c.b16 %v604, %v594
        %v745 = vpack.c.b16 %v605, %v595
        %v746 = vpack.c.b16 %v606, %v596
        %v747 = vpack.c.b16 %v607, %v597
        %v748 = vpack.c.b16 %v608, %v598
        %v749 = vpack.c.b16 %v609, %v599
        %v750 = vpack.c.b16 %v610, %v600
        %v751 = vpack.c.b16 %v621, %v611
        %v752 = vpack.c.b16 %v622, %v612
        %v753 = vpack.c.b16 %v623, %v613
        %v754 = vpack.c.b16 %v624, %v614
        %v755 = vpack.c.b16 %v625, %v615
        %v756 = vpack.c.b16 %v626, %v616
        %v757 = vpack.c.b16 %v627, %v617
        %v758 = vpack.c.b16 %v628, %v618
        %v759 = vpack.c.b16 %v629, %v619
        %v760 = vpack.c.b16 %v630, %v620
        %v761 = vpack.c.b16 %v641, %v631
        %v762 = vpack.c.b16 %v642, %v632
        %v763 = vpack.c.b16 %v643, %v633
        %v764 = vpack.c.b16 %v644, %v634
        %v765 = vpack.c.b16 %v645, %v635
        %v766 = vpack.c.b16 %v646, %v636
        %v767 = vpack.c.b16 %v647, %v637
        %v768 = vpack.c.b16 %v648, %v638
        %v769 = vpack.c.b16 %v649, %v639
        %v770 = vpack.c.b16 %v650, %v640
        %v771 = vpack.c.b16 %v661, %v651
        %v772 = vpack.c.b16 %v662, %v652
        %v773 = vpack.c.b16 %v663, %v653
        %v774 = vpack.c.b16 %v664, %v654
        %v775 = vpack.c.b16 %v665, %v655
        %v776 = vpack.c.b16 %v666, %v656
        %v777 = vpack.c.b16 %v667, %v657
        %v778 = vpack.c.b16 %v668, %v658
        %v779 = vpack.c.b16 %v669, %v659
        %v780 = vpack.c.b16 %v670, %v660
        %v781 = vpack.c.b16 %v681, %v671
        %v782 = vpack.c.b16 %v682, %v672
        %v783 = vpack.c.b16 %v683, %v673
        %v784 = vpack.c.b16 %v684, %v674
        %v785 = vpack.c.b16 %v685, %v675
        %v786 = vpack.c.b16 %v686, %v676
        %v787 = vpack.c.b16 %v687, %v677
        %v788 = vpack.c.b16 %v688, %v678
        %v789 = vpack.c.b16 %v689, %v679
        %v790 = vpack.c.b16 %v690, %v680
        %v791 = vpack.c.b16 %v701, %v691
        %v792 = vpack.c.b16 %v702, %v692
        %v793 = vpack.c.b16 %v703, %v693
        %v794 = vpack.c.b16 %v704, %v694
        %v795 = vpack.c.b16 %v705, %v695
        %v796 = vpack.c.b16 %v706, %v696
        %v797 = vpack.c.b16 %v707, %v697
        %v798 = vpack.c.b16 %v708, %v698
        %v799 = vpack.c.b16 %v709, %v699
        %v800 = vpack.c.b16 %v710, %v700
        %v801 = vpack.c.b16 %v721, %v711
        %v802 = vpack.c.b16 %v722, %v712
        %v803 = vpack.c.b16 %v723, %v713
        %v804 = vpack.c.b16 %v724, %v714
        %v805 = vpack.c.b16 %v725, %v715
        %v806 = vpack.c.b16 %v726, %v716
        %v807 = vpack.c.b16 %v727, %v717
        %v808 = vpack.c.b16 %v728, %v718
        %v809 = vpack.c.b16 %v729, %v719
        %v810 = vpack.c.b16 %v730, %v720
        %v1051 = vunpack.c.l.b16 %v331
        %v1052 = vunpack.c.l.b16 %v332
        %v1053 = vunpack.c.l.b16 %v333
        %v1054 = vunpack.c.l.b16 %v334
        %v1055 = vunpack.c.l.b16 %v335
        %v1056 = vunpack.c.l.b16 %v336
        %v1057 = vunpack.c.l.b16 %v337
        %v1058 = vunpack.c.l.b16 %v338
        %v1059 = vunpack.c.l.b16 %v339
        %v1060 = vunpack.c.l.b16 %v340
        %v1061 = vunpack.c.l.b16 %v341
        %v1062 = vunpack.c.l.b16 %v342
        %v1063 = vunpack.c.l.b16 %v343
        %v1064 = vunpack.c.l.b16 %v344
        %v1065 = vunpack.c.l.b16 %v345
        %v1066 = vunpack.c.l.b16 %v346
        %v1067 = vunpack.c.l.b16 %v347
        %v1068 = vunpack.c.l.b16 %v348
        %v1069 = vunpack.c.l.b16 %v349
        %v1070 = vunpack.c.l.b16 %v350
        %v1071 = vunpack.c.l.b16 %v351
        %v1072 = vunpack.c.l.b16 %v352
        %v1073 = vunpack.c.l.b16 %v353
        %v1074 = vunpack.c.l.b16 %v354
        %v1075 = vunpack.c.l.b16 %v355
        %v1076 = vunpack.c.l.b16 %v356
        %v1077 = vunpack.c.l.b16 %v357
        %v1078 = vunpack.c.l.b16 %v358
        %v1079 = vunpack.c.l.b16 %v359
        %v1080 = vunpack.c.l.b16 %v360
        %v1081 = vunpack.c.l.b16 %v361
        %v1082 = vunpack.c.l.b16 %v362
        %v1083 = vunpack.c.l.b16 %v363
        %v1084 = vunpack.c.l.b16 %v364
        %v1085 = vunpack.c.l.b16 %v365
        %v1086 = vunpack.c.l.b16 %v366
        %v1087 = vunpack.c.l.b16 %v367
        %v1088 = vunpack.c.l.b16 %v368
        %v1089 = vunpack.c.l.b16 %v369
        %v1090 = vunpack.c.l.b16 %v370
        %v1091 = vunpack.c.l.b16 %v371
        %v1092 = vunpack.c.l.b16 %v372
        %v1093 = vunpack.c.l.b16 %v373
        %v1094 = vunpack.c.l.b16 %v374
        %v1095 = vunpack.c.l.b16 %v375
        %v1096 = vunpack.c.l.b16 %v376
        %v1097 = vunpack.c.l.b16 %v377
        %v1098 = vunpack.c.l.b16 %v378
        %v1099 = vunpack.c.l.b16 %v379
        %v1100 = vunpack.c.l.b16 %v380
        %v1101 = vunpack.c.l.b16 %v381
        %v1102 = vunpack.c.l.b16 %v382
        %v1103 = vunpack.c.l.b16 %v383
        %v1104 = vunpack.c.l.b16 %v384
        %v1105 = vunpack.c.l.b16 %v385
        %v1106 = vunpack.c.l.b16 %v386
        %v1107 = vunpack.c.l.b16 %v387
        %v1108 = vunpack.c.l.b16 %v388
        %v1109 = vunpack.c.l.b16 %v389
        %v1110 = vunpack.c.l.b16 %v390
        %v1111 = vunpack.c.l.b16 %v391
        %v1112 = vunpack.c.l.b16 %v392
        %v1113 = vunpack.c.l.b16 %v393
        %v1114 = vunpack.c.l.b16 %v394
        %v1115 = vunpack.c.l.b16 %v395
        %v1116 = vunpack.c.l.b16 %v396
        %v1117 = vunpack.c.l.b16 %v397
        %v1118 = vunpack.c.l.b16 %v398
        %v1119 = vunpack.c.l.b16 %v399
        %v1120 = vunpack.c.l.b16 %v400
        %v1121 = vunpack.c.l.b16 %v401
        %v1122 = vunpack.c.l.b16 %v402
        %v1123 = vunpack.c.l.b16 %v403
        %v1124 = vunpack.c.l.b16 %v404
        %v1125 = vunpack.c.l.b16 %v405
        %v1126 = vunpack.c.l.b16 %v406
        %v1127 = vunpack.c.l.b16 %v407
        %v1128 = vunpack.c.l.b16 %v408
        %v1129 = vunpack.c.l.b16 %v409
        %v1130 = vunpack.c.l.b16 %v410
        %v1131 = vunpack.c.l.b16 %v411
        %v1132 = vunpack.c.l.b16 %v412
        %v1133 = vunpack.c.l.b16 %v413
        %v1134 = vunpack.c.l.b16 %v414
        %v1135 = vunpack.c.l.b16 %v415
        %v1136 = vunpack.c.l.b16 %v416
        %v1137 = vunpack.c.l.b16 %v417
        %v1138 = vunpack.c.l.b16 %v418
        %v1139 = vunpack.c.l.b16 %v419
        %v1140 = vunpack.c.l.b16 %v420
        %v1141 = vunpack.c.l.b16 %v421
        %v1142 = vunpack.c.l.b16 %v422
        %v1143 = vunpack.c.l.b16 %v423
        %v1144 = vunpack.c.l.b16 %v424
        %v1145 = vunpack.c.l.b16 %v425
        %v1146 = vunpack.c.l.b16 %v426
        %v1147 = vunpack.c.l.b16 %v427
        %v1148 = vunpack.c.l.b16 %v428
        %v1149 = vunpack.c.l.b16 %v429
        %v1150 = vunpack.c.l.b16 %v430
        %v1151 = vunpack.c.l.b16 %v431
        %v1152 = vunpack.c.l.b16 %v432
        %v1153 = vunpack.c.l.b16 %v433
        %v1154 = vunpack.c.l.b16 %v434
        %v1155 = vunpack.c.l.b16 %v435
        %v1156 = vunpack.c.l.b16 %v436
        %v1157 = vunpack.c.l.b16 %v437
        %v1158 = vunpack.c.l.b16 %v438
        %v1159 = vunpack.c.l.b16 %v439
        %v1160 = vunpack.c.l.b16 %v440
        %v1161 = vunpack.c.l.b16 %v441
        %v1162 = vunpack.c.l.b16 %v442
        %v1163 = vunpack.c.l.b16 %v443
        %v1164 = vunpack.c.l.b16 %v444
        %v1165 = vunpack.c.l.b16 %v445
        %v1166 = vunpack.c.l.b16 %v446
        %v1167 = vunpack.c.l.b16 %v447
        %v1168 = vunpack.c.l.b16 %v448
        %v1169 = vunpack.c.l.b16 %v449
        %v1170 = vunpack.c.l.b16 %v450
        %v1171 = vunpack.c.l.b16 %v451
        %v1172 = vunpack.c.l.b16 %v452
        %v1173 = vunpack.c.l.b16 %v453
        %v1174 = vunpack.c.l.b16 %v454
        %v1175 = vunpack.c.l.b16 %v455
        %v1176 = vunpack.c.l.b16 %v456
        %v1177 = vunpack.c.l.b16 %v457
        %v1178 = vunpack.c.l.b16 %v458
        %v1179 = vunpack.c.l.b16 %v459
        %v1180 = vunpack.c.l.b16 %v460
        %v1181 = vunpack.c.l.b16 %v461
        %v1182 = vunpack.c.l.b16 %v462
        %v1183 = vunpack.c.l.b16 %v463
        %v1184 = vunpack.c.l.b16 %v464
        %v1185 = vunpack.c.l.b16 %v465
        %v1186 = vunpack.c.l.b16 %v466
        %v1187 = vunpack.c.l.b16 %v467
        %v1188 = vunpack.c.l.b16 %v468
        %v1189 = vunpack.c.l.b16 %v469
        %v1190 = vunpack.c.l.b16 %v470
        %v1191 = vunpack.c.l.b16 %v471
        %v1192 = vunpack.c.l.b16 %v472
        %v1193 = vunpack.c.l.b16 %v473
        %v1194 = vunpack.c.l.b16 %v474
        %v1195 = vunpack.c.l.b16 %v475
        %v1196 = vunpack.c.l.b16 %v476
        %v1197 = vunpack.c.l.b16 %v477
        %v1198 = vunpack.c.l.b16 %v478
        %v1199 = vunpack.c.l.b16 %v479
        %v1200 = vunpack.c.l.b16 %v480
        %v1201 = vunpack.c.l.b16 %v481
        %v1202 = vunpack.c.l.b16 %v482
        %v1203 = vunpack.c.l.b16 %v483
        %v1204 = vunpack.c.l.b16 %v484
        %v1205 = vunpack.c.l.b16 %v485
        %v1206 = vunpack.c.l.b16 %v486
        %v1207 = vunpack.c.l.b16 %v487
        %v1208 = vunpack.c.l.b16 %v488
        %v1209 = vunpack.c.l.b16 %v489
        %v1210 = vunpack.c.l.b16 %v490
        %v1211 = vpack.c.b16 %v1052, %v1051
        %v1212 = vpack.c.b16 %v1054, %v1053
        %v1213 = vpack.c.b16 %v1056, %v1055
        %v1214 = vpack.c.b16 %v1058, %v1057
        %v1215 = vpack.c.b16 %v1060, %v1059
        %v1216 = vpack.c.b16 %v1062, %v1061
        %v1217 = vpack.c.b16 %v1064, %v1063
        %v1218 = vpack.c.b16 %v1066, %v1065
        %v1219 = vpack.c.b16 %v1068, %v1067
        %v1220 = vpack.c.b16 %v1070, %v1069
        %v1221 = vpack.c.b16 %v1072, %v1071
        %v1222 = vpack.c.b16 %v1074, %v1073
        %v1223 = vpack.c.b16 %v1076, %v1075
        %v1224 = vpack.c.b16 %v1078, %v1077
        %v1225 = vpack.c.b16 %v1080, %v1079
        %v1226 = vpack.c.b16 %v1082, %v1081
        %v1227 = vpack.c.b16 %v1084, %v1083
        %v1228 = vpack.c.b16 %v1086, %v1085
        %v1229 = vpack.c.b16 %v1088, %v1087
        %v1230 = vpack.c.b16 %v1090, %v1089
        %v1231 = vpack.c.b16 %v1092, %v1091
        %v1232 = vpack.c.b16 %v1094, %v1093
        %v1233 = vpack.c.b16 %v1096, %v1095
        %v1234 = vpack.c.b16 %v1098, %v1097
        %v1235 = vpack.c.b16 %v1100, %v1099
        %v1236 = vpack.c.b16 %v1102, %v1101
        %v1237 = vpack.c.b16 %v1104, %v1103
        %v1238 = vpack.c.b16 %v1106, %v1105
        %v1239 = vpack.c.b16 %v1108, %v1107
        %v1240 = vpack.c.b16 %v1110, %v1109
        %v1241 = vpack.c.b16 %v1112, %v1111
        %v1242 = vpack.c.b16 %v1114, %v1113
        %v1243 = vpack.c.b16 %v1116, %v1115
        %v1244 = vpack.c.b16 %v1118, %v1117
        %v1245 = vpack.c.b16 %v1120, %v1119
        %v1246 = vpack.c.b16 %v1122, %v1121
        %v1247 = vpack.c.b16 %v1124, %v1123
        %v1248 = vpack.c.b16 %v1126, %v1125
        %v1249 = vpack.c.b16 %v1128, %v1127
        %v1250 = vpack.c.b16 %v1130, %v1129
        %v1251 = vpack.c.b16 %v1132, %v1131
        %v1252 = vpack.c.b16 %v1134, %v1133
        %v1253 = vpack.c.b16 %v1136, %v1135
        %v1254 = vpack.c.b16 %v1138, %v1137
        %v1255 = vpack.c.b16 %v1140, %v1139
        %v1256 = vpack.c.b16 %v1142, %v1141
        %v1257 = vpack.c.b16 %v1144, %v1143
        %v1258 = vpack.c.b16 %v1146, %v1145
        %v1259 = vpack.c.b16 %v1148, %v1147
        %v1260 = vpack.c.b16 %v1150, %v1149
        %v1261 = vpack.c.b16 %v1152, %v1151
        %v1262 = vpack.c.b16 %v1154, %v1153
        %v1263 = vpack.c.b16 %v1156, %v1155
        %v1264 = vpack.c.b16 %v1158, %v1157
        %v1265 = vpack.c.b16 %v1160, %v1159
        %v1266 = vpack.c.b16 %v1162, %v1161
        %v1267 = vpack.c.b16 %v1164, %v1163
        %v1268 = vpack.c.b16 %v1166, %v1165
        %v1269 = vpack.c.b16 %v1168, %v1167
        %v1270 = vpack.c.b16 %v1170, %v1169
        %v1271 = vpack.c.b16 %v1172, %v1171
        %v1272 = vpack.c.b16 %v1174, %v1173
        %v1273 = vpack.c.b16 %v1176, %v1175
        %v1274 = vpack.c.b16 %v1178, %v1177
        %v1275 = vpack.c.b16 %v1180, %v1179
        %v1276 = vpack.c.b16 %v1182, %v1181
        %v1277 = vpack.c.b16 %v1184, %v1183
        %v1278 = vpack.c.b16 %v1186, %v1185
        %v1279 = vpack.c.b16 %v1188, %v1187
        %v1280 = vpack.c.b16 %v1190, %v1189
        %v1281 = vpack.c.b16 %v1192, %v1191
        %v1282 = vpack.c.b16 %v1194, %v1193
        %v1283 = vpack.c.b16 %v1196, %v1195
        %v1284 = vpack.c.b16 %v1198, %v1197
        %v1285 = vpack.c.b16 %v1200, %v1199
        %v1286 = vpack.c.b16 %v1202, %v1201
        %v1287 = vpack.c.b16 %v1204, %v1203
        %v1288 = vpack.c.b16 %v1206, %v1205
        %v1289 = vpack.c.b16 %v1208, %v1207
        %v1290 = vpack.c.b16 %v1210, %v1209
        %1371 = vmatprep.subr.bf16.mxu0 0
        %1372 = vmatpush1.bf16.msra.mxu0 %v1211
        %1373 = vmatprep.subr.bf16.mxu0 0
        %1374 = vmatpush1.bf16.msra.mxu0 %v1212
        %1375 = vmatprep.subr.bf16.mxu0 0
        %1376 = vmatpush1.bf16.msra.mxu0 %v1213
        %1377 = vmatprep.subr.bf16.mxu0 0
        %1378 = vmatpush1.bf16.msra.mxu0 %v1214
        %1379 = vmatprep.subr.bf16.mxu0 0
        %1380 = vmatpush1.bf16.msra.mxu0 %v1215
        %1381 = vmatprep.subr.bf16.mxu0 0
        %1382 = vmatpush1.bf16.msra.mxu0 %v1216
        %1383 = vmatprep.subr.bf16.mxu0 0
        %1384 = vmatpush1.bf16.msra.mxu0 %v1217
        %1385 = vmatprep.subr.bf16.mxu0 0
        %1386 = vmatpush1.bf16.msra.mxu0 %v1218
        %1387 = vmatprep.subr.bf16.mxu0 0
        %1388 = vmatpush1.bf16.msra.mxu0 %v1219
        %1389 = vmatprep.subr.bf16.mxu0 0
        %1390 = vmatpush1.bf16.msra.mxu0 %v1220
        %1391 = vmatprep.subr.bf16.mxu0 0
        %1392 = vmatpush1.bf16.msra.mxu0 %v1221
        %1393 = vmatprep.subr.bf16.mxu0 0
        %1394 = vmatpush1.bf16.msra.mxu0 %v1222
        %1395 = vmatprep.subr.bf16.mxu0 0
        %1396 = vmatpush1.bf16.msra.mxu0 %v1223
        %1397 = vmatprep.subr.bf16.mxu0 0
        %1398 = vmatpush1.bf16.msra.mxu0 %v1224
        %1399 = vmatprep.subr.bf16.mxu0 0
        %1400 = vmatpush1.bf16.msra.mxu0 %v1225
        %1401 = vmatprep.subr.bf16.mxu0 0
        %1402 = vmatpush1.bf16.msra.mxu0 %v1226
        %1403 = vmatprep.mubr.bf16.mxu0 %v732
        %1404 = vmatmul.mubr.bf16.gmra.mrb[0].mxu0 %v731
        %v1405 = vpop.f32.mrb[0].mxu0
        %v1406 = vadd.f32 0.0, %v1405
        %v1407 = vpop.f32.mrb[0].mxu0
        %v1408 = vpop.f32.mrb[0].mxu0
        %v1409 = vadd.f32 0.0, %v1408
        %v1410 = vpop.f32.mrb[0].mxu0
        %1411 = vmatprep.mubr.bf16.mxu0 %v742
        %1412 = vmatmul.mubr.bf16.gmra.mrb[0].mxu0 %v741
        %v1413 = vpop.f32.mrb[0].mxu0
        %v1414 = vadd.f32 0.0, %v1413
        %v1415 = vpop.f32.mrb[0].mxu0
        %v1416 = vpop.f32.mrb[0].mxu0
        %v1417 = vadd.f32 0.0, %v1416
        %v1418 = vpop.f32.mrb[0].mxu0
        %1419 = vmatprep.mubr.bf16.mxu0 %v752
        %1420 = vmatmul.mubr.bf16.gmra.mrb[0].mxu0 %v751
        %v1421 = vpop.f32.mrb[0].mxu0
        %v1422 = vadd.f32 0.0, %v1421
        %v1423 = vpop.f32.mrb[0].mxu0
        %v1424 = vpop.f32.mrb[0].mxu0
        %v1425 = vadd.f32 0.0, %v1424
        %v1426 = vpop.f32.mrb[0].mxu0
        %1427 = vmatprep.mubr.bf16.mxu0 %v762
        %1428 = vmatmul.mubr.bf16.gmra.mrb[0].mxu0 %v761
        %v1429 = vpop.f32.mrb[0].mxu0
        %v1430 = vadd.f32 0.0, %v1429
        %v1431 = vpop.f32.mrb[0].mxu0
        %v1432 = vpop.f32.mrb[0].mxu0
        %v1433 = vadd.f32 0.0, %v1432
        %v1434 = vpop.f32.mrb[0].mxu0
        %1435 = vmatprep.mubr.bf16.mxu0 %v772
        %1436 = vmatmul.mubr.bf16.gmra.mrb[0].mxu0 %v771
        %v1437 = vpop.f32.mrb[0].mxu0
        %v1438 = vadd.f32 0.0, %v1437
        %v1439 = vpop.f32.mrb[0].mxu0
        %v1440 = vpop.f32.mrb[0].mxu0
        %v1441 = vadd.f32 0.0, %v1440
        %v1442 = vpop.f32.mrb[0].mxu0
        %1443 = vmatprep.mubr.bf16.mxu0 %v782
        %1444 = vmatmul.mubr.bf16.gmra.mrb[0].mxu0 %v781
        %v1445 = vpop.f32.mrb[0].mxu0
        %v1446 = vadd.f32 0.0, %v1445
        %v1447 = vpop.f32.mrb[0].mxu0
        %v1448 = vpop.f32.mrb[0].mxu0
        %v1449 = vadd.f32 0.0, %v1448
        %v1450 = vpop.f32.mrb[0].mxu0
        %1451 = vmatprep.mubr.bf16.mxu0 %v792
        %1452 = vmatmul.mubr.bf16.gmra.mrb[0].mxu0 %v791
        %v1453 = vpop.f32.mrb[0].mxu0
        %v1454 = vadd.f32 0.0, %v1453
        %v1455 = vpop.f32.mrb[0].mxu0
        %v1456 = vpop.f32.mrb[0].mxu0
        %v1457 = vadd.f32 0.0, %v1456
        %v1458 = vpop.f32.mrb[0].mxu0
        %1459 = vmatprep.mubr.bf16.mxu0 %v802
        %1460 = vmatmul.mubr.bf16.gmra.mrb[0].mxu0 %v801
        %v1461 = vpop.f32.mrb[0].mxu0
        %v1462 = vadd.f32 0.0, %v1461
        %v1463 = vpop.f32.mrb[0].mxu0
        %v1464 = vpop.f32.mrb[0].mxu0
        %v1465 = vadd.f32 0.0, %v1464
        %v1466 = vpop.f32.mrb[0].mxu0
        %1467 = vdwg.mxu0
        %1468 = vmatprep.subr.bf16.mxu0 0
        %1469 = vmatpush1.bf16.msra.mxu0 %v1227
        %1470 = vmatprep.subr.bf16.mxu0 0
        %1471 = vmatpush1.bf16.msra.mxu0 %v1228
        %1472 = vmatprep.subr.bf16.mxu0 0
        %1473 = vmatpush1.bf16.msra.mxu0 %v1229
        %1474 = vmatprep.subr.bf16.mxu0 0
        %1475 = vmatpush1.bf16.msra.mxu0 %v1230
        %1476 = vmatprep.subr.bf16.mxu0 0
        %1477 = vmatpush1.bf16.msra.mxu0 %v1231
        %1478 = vmatprep.subr.bf16.mxu0 0
        %1479 = vmatpush1.bf16.msra.mxu0 %v1232
        %1480 = vmatprep.subr.bf16.mxu0 0
        %1481 = vmatpush1.bf16.msra.mxu0 %v1233
        %1482 = vmatprep.subr.bf16.mxu0 0
        %1483 = vmatpush1.bf16.msra.mxu0 %v1234
        %1484 = vmatprep.subr.bf16.mxu0 0
        %1485 = vmatpush1.bf16.msra.mxu0 %v1235
        %1486 = vmatprep.subr.bf16.mxu0 0
        %1487 = vmatpush1.bf16.msra.mxu0 %v1236
        %1488 = vmatprep.subr.bf16.mxu0 0
        %1489 = vmatpush1.bf16.msra.mxu0 %v1237
        %1490 = vmatprep.subr.bf16.mxu0 0
        %1491 = vmatpush1.bf16.msra.mxu0 %v1238
        %1492 = vmatprep.subr.bf16.mxu0 0
        %1493 = vmatpush1.bf16.msra.mxu0 %v1239
        %1494 = vmatprep.subr.bf16.mxu0 0
        %1495 = vmatpush1.bf16.msra.mxu0 %v1240
        %1496 = vmatprep.subr.bf16.mxu0 0
        %1497 = vmatpush1.bf16.msra.mxu0 %v1241
        %1498 = vmatprep.subr.bf16.mxu0 0
        %1499 = vmatpush1.bf16.msra.mxu0 %v1242
        %1500 = vmatprep.mubr.bf16.mxu0 %v734
        %1501 = vmatmul.mubr.bf16.gmra.mrb[0].mxu0 %v733
        %v1502 = vpop.f32.mrb[0].mxu0
        %v1503 = vadd.f32 %v1406, %v1502
        %v1504 = vpop.f32.mrb[0].mxu0
        %v1505 = vpop.f32.mrb[0].mxu0
        %v1506 = vadd.f32 %v1409, %v1505
        %v1507 = vpop.f32.mrb[0].mxu0
        %1508 = vmatprep.mubr.bf16.mxu0 %v744
        %1509 = vmatmul.mubr.bf16.gmra.mrb[0].mxu0 %v743
        %v1510 = vpop.f32.mrb[0].mxu0
        %v1511 = vadd.f32 %v1414, %v1510
        %v1512 = vpop.f32.mrb[0].mxu0
        %v1513 = vpop.f32.mrb[0].mxu0
        %v1514 = vadd.f32 %v1417, %v1513
        %v1515 = vpop.f32.mrb[0].mxu0
        %1516 = vmatprep.mubr.bf16.mxu0 %v754
        %1517 = vmatmul.mubr.bf16.gmra.mrb[0].mxu0 %v753
        %v1518 = vpop.f32.mrb[0].mxu0
        %v1519 = vadd.f32 %v1422, %v1518
        %v1520 = vpop.f32.mrb[0].mxu0
        %v1521 = vpop.f32.mrb[0].mxu0
        %v1522 = vadd.f32 %v1425, %v1521
        %v1523 = vpop.f32.mrb[0].mxu0
        %1524 = vmatprep.mubr.bf16.mxu0 %v764
        %1525 = vmatmul.mubr.bf16.gmra.mrb[0].mxu0 %v763
        %v1526 = vpop.f32.mrb[0].mxu0
        %v1527 = vadd.f32 %v1430, %v1526
        %v1528 = vpop.f32.mrb[0].mxu0
        %v1529 = vpop.f32.mrb[0].mxu0
        %v1530 = vadd.f32 %v1433, %v1529
        %v1531 = vpop.f32.mrb[0].mxu0
        %1532 = vmatprep.mubr.bf16.mxu0 %v774
        %1533 = vmatmul.mubr.bf16.gmra.mrb[0].mxu0 %v773
        %v1534 = vpop.f32.mrb[0].mxu0
        %v1535 = vadd.f32 %v1438, %v1534
        %v1536 = vpop.f32.mrb[0].mxu0
        %v1537 = vpop.f32.mrb[0].mxu0
        %v1538 = vadd.f32 %v1441, %v1537
        %v1539 = vpop.f32.mrb[0].mxu0
        %1540 = vmatprep.mubr.bf16.mxu0 %v784
        %1541 = vmatmul.mubr.bf16.gmra.mrb[0].mxu0 %v783
        %v1542 = vpop.f32.mrb[0].mxu0
        %v1543 = vadd.f32 %v1446, %v1542
        %v1544 = vpop.f32.mrb[0].mxu0
        %v1545 = vpop.f32.mrb[0].mxu0
        %v1546 = vadd.f32 %v1449, %v1545
        %v1547 = vpop.f32.mrb[0].mxu0
        %1548 = vmatprep.mubr.bf16.mxu0 %v794
        %1549 = vmatmul.mubr.bf16.gmra.mrb[0].mxu0 %v793
        %v1550 = vpop.f32.mrb[0].mxu0
        %v1551 = vadd.f32 %v1454, %v1550
        %v1552 = vpop.f32.mrb[0].mxu0
        %v1553 = vpop.f32.mrb[0].mxu0
        %v1554 = vadd.f32 %v1457, %v1553
        %v1555 = vpop.f32.mrb[0].mxu0
        %1556 = vmatprep.mubr.bf16.mxu0 %v804
        %1557 = vmatmul.mubr.bf16.gmra.mrb[0].mxu0 %v803
        %v1558 = vpop.f32.mrb[0].mxu0
        %v1559 = vadd.f32 %v1462, %v1558
        %v1560 = vpop.f32.mrb[0].mxu0
        %v1561 = vpop.f32.mrb[0].mxu0
        %v1562 = vadd.f32 %v1465, %v1561
        %v1563 = vpop.f32.mrb[0].mxu0
        %1564 = vdwg.mxu0
        %1565 = vmatprep.subr.bf16.mxu0 0
        %1566 = vmatpush1.bf16.msra.mxu0 %v1243
        %1567 = vmatprep.subr.bf16.mxu0 0
        %1568 = vmatpush1.bf16.msra.mxu0 %v1244
        %1569 = vmatprep.subr.bf16.mxu0 0
        %1570 = vmatpush1.bf16.msra.mxu0 %v1245
        %1571 = vmatprep.subr.bf16.mxu0 0
        %1572 = vmatpush1.bf16.msra.mxu0 %v1246
        %1573 = vmatprep.subr.bf16.mxu0 0
        %1574 = vmatpush1.bf16.msra.mxu0 %v1247
        %1575 = vmatprep.subr.bf16.mxu0 0
        %1576 = vmatpush1.bf16.msra.mxu0 %v1248
        %1577 = vmatprep.subr.bf16.mxu0 0
        %1578 = vmatpush1.bf16.msra.mxu0 %v1249
        %1579 = vmatprep.subr.bf16.mxu0 0
        %1580 = vmatpush1.bf16.msra.mxu0 %v1250
        %1581 = vmatprep.subr.bf16.mxu0 0
        %1582 = vmatpush1.bf16.msra.mxu0 %v1251
        %1583 = vmatprep.subr.bf16.mxu0 0
        %1584 = vmatpush1.bf16.msra.mxu0 %v1252
        %1585 = vmatprep.subr.bf16.mxu0 0
        %1586 = vmatpush1.bf16.msra.mxu0 %v1253
        %1587 = vmatprep.subr.bf16.mxu0 0
        %1588 = vmatpush1.bf16.msra.mxu0 %v1254
        %1589 = vmatprep.subr.bf16.mxu0 0
        %1590 = vmatpush1.bf16.msra.mxu0 %v1255
        %1591 = vmatprep.subr.bf16.mxu0 0
        %1592 = vmatpush1.bf16.msra.mxu0 %v1256
        %1593 = vmatprep.subr.bf16.mxu0 0
        %1594 = vmatpush1.bf16.msra.mxu0 %v1257
        %1595 = vmatprep.subr.bf16.mxu0 0
        %1596 = vmatpush1.bf16.msra.mxu0 %v1258
        %1597 = vmatprep.mubr.bf16.mxu0 %v736
        %1598 = vmatmul.mubr.bf16.gmra.mrb[0].mxu0 %v735
        %v1599 = vpop.f32.mrb[0].mxu0
        %v1600 = vadd.f32 %v1503, %v1599
        %v1601 = vpop.f32.mrb[0].mxu0
        %v1602 = vpop.f32.mrb[0].mxu0
        %v1603 = vadd.f32 %v1506, %v1602
        %v1604 = vpop.f32.mrb[0].mxu0
        %1605 = vmatprep.mubr.bf16.mxu0 %v746
        %1606 = vmatmul.mubr.bf16.gmra.mrb[0].mxu0 %v745
        %v1607 = vpop.f32.mrb[0].mxu0
        %v1608 = vadd.f32 %v1511, %v1607
        %v1609 = vpop.f32.mrb[0].mxu0
        %v1610 = vpop.f32.mrb[0].mxu0
        %v1611 = vadd.f32 %v1514, %v1610
        %v1612 = vpop.f32.mrb[0].mxu0
        %1613 = vmatprep.mubr.bf16.mxu0 %v756
        %1614 = vmatmul.mubr.bf16.gmra.mrb[0].mxu0 %v755
        %v1615 = vpop.f32.mrb[0].mxu0
        %v1616 = vadd.f32 %v1519, %v1615
        %v1617 = vpop.f32.mrb[0].mxu0
        %v1618 = vpop.f32.mrb[0].mxu0
        %v1619 = vadd.f32 %v1522, %v1618
        %v1620 = vpop.f32.mrb[0].mxu0
        %1621 = vmatprep.mubr.bf16.mxu0 %v766
        %1622 = vmatmul.mubr.bf16.gmra.mrb[0].mxu0 %v765
        %v1623 = vpop.f32.mrb[0].mxu0
        %v1624 = vadd.f32 %v1527, %v1623
        %v1625 = vpop.f32.mrb[0].mxu0
        %v1626 = vpop.f32.mrb[0].mxu0
        %v1627 = vadd.f32 %v1530, %v1626
        %v1628 = vpop.f32.mrb[0].mxu0
        %1629 = vmatprep.mubr.bf16.mxu0 %v776
        %1630 = vmatmul.mubr.bf16.gmra.mrb[0].mxu0 %v775
        %v1631 = vpop.f32.mrb[0].mxu0
        %v1632 = vadd.f32 %v1535, %v1631
        %v1633 = vpop.f32.mrb[0].mxu0
        %v1634 = vpop.f32.mrb[0].mxu0
        %v1635 = vadd.f32 %v1538, %v1634
        %v1636 = vpop.f32.mrb[0].mxu0
        %1637 = vmatprep.mubr.bf16.mxu0 %v786
        %1638 = vmatmul.mubr.bf16.gmra.mrb[0].mxu0 %v785
        %v1639 = vpop.f32.mrb[0].mxu0
        %v1640 = vadd.f32 %v1543, %v1639
        %v1641 = vpop.f32.mrb[0].mxu0
        %v1642 = vpop.f32.mrb[0].mxu0
        %v1643 = vadd.f32 %v1546, %v1642
        %v1644 = vpop.f32.mrb[0].mxu0
        %1645 = vmatprep.mubr.bf16.mxu0 %v796
        %1646 = vmatmul.mubr.bf16.gmra.mrb[0].mxu0 %v795
        %v1647 = vpop.f32.mrb[0].mxu0
        %v1648 = vadd.f32 %v1551, %v1647
        %v1649 = vpop.f32.mrb[0].mxu0
        %v1650 = vpop.f32.mrb[0].mxu0
        %v1651 = vadd.f32 %v1554, %v1650
        %v1652 = vpop.f32.mrb[0].mxu0
        %1653 = vmatprep.mubr.bf16.mxu0 %v806
        %1654 = vmatmul.mubr.bf16.gmra.mrb[0].mxu0 %v805
        %v1655 = vpop.f32.mrb[0].mxu0
        %v1656 = vadd.f32 %v1559, %v1655
        %v1657 = vpop.f32.mrb[0].mxu0
        %v1658 = vpop.f32.mrb[0].mxu0
        %v1659 = vadd.f32 %v1562, %v1658
        %v1660 = vpop.f32.mrb[0].mxu0
        %1661 = vdwg.mxu0
        %1662 = vmatprep.subr.bf16.mxu0 0
        %1663 = vmatpush1.bf16.msra.mxu0 %v1259
        %1664 = vmatprep.subr.bf16.mxu0 0
        %1665 = vmatpush1.bf16.msra.mxu0 %v1260
        %1666 = vmatprep.subr.bf16.mxu0 0
        %1667 = vmatpush1.bf16.msra.mxu0 %v1261
        %1668 = vmatprep.subr.bf16.mxu0 0
        %1669 = vmatpush1.bf16.msra.mxu0 %v1262
        %1670 = vmatprep.subr.bf16.mxu0 0
        %1671 = vmatpush1.bf16.msra.mxu0 %v1263
        %1672 = vmatprep.subr.bf16.mxu0 0
        %1673 = vmatpush1.bf16.msra.mxu0 %v1264
        %1674 = vmatprep.subr.bf16.mxu0 0
        %1675 = vmatpush1.bf16.msra.mxu0 %v1265
        %1676 = vmatprep.subr.bf16.mxu0 0
        %1677 = vmatpush1.bf16.msra.mxu0 %v1266
        %1678 = vmatprep.subr.bf16.mxu0 0
        %1679 = vmatpush1.bf16.msra.mxu0 %v1267
        %1680 = vmatprep.subr.bf16.mxu0 0
        %1681 = vmatpush1.bf16.msra.mxu0 %v1268
        %1682 = vmatprep.subr.bf16.mxu0 0
        %1683 = vmatpush1.bf16.msra.mxu0 %v1269
        %1684 = vmatprep.subr.bf16.mxu0 0
        %1685 = vmatpush1.bf16.msra.mxu0 %v1270
        %1686 = vmatprep.subr.bf16.mxu0 0
        %1687 = vmatpush1.bf16.msra.mxu0 %v1271
        %1688 = vmatprep.subr.bf16.mxu0 0
        %1689 = vmatpush1.bf16.msra.mxu0 %v1272
        %1690 = vmatprep.subr.bf16.mxu0 0
        %1691 = vmatpush1.bf16.msra.mxu0 %v1273
        %1692 = vmatprep.subr.bf16.mxu0 0
        %1693 = vmatpush1.bf16.msra.mxu0 %v1274
        %1694 = vmatprep.mubr.bf16.mxu0 %v738
        %1695 = vmatmul.mubr.bf16.gmra.mrb[0].mxu0 %v737
        %v1696 = vpop.f32.mrb[0].mxu0
        %v1697 = vadd.f32 %v1600, %v1696
        %v1698 = vpop.f32.mrb[0].mxu0
        %v1699 = vpop.f32.mrb[0].mxu0
        %v1700 = vadd.f32 %v1603, %v1699
        %v1701 = vpop.f32.mrb[0].mxu0
        %1702 = vmatprep.mubr.bf16.mxu0 %v748
        %1703 = vmatmul.mubr.bf16.gmra.mrb[0].mxu0 %v747
        %v1704 = vpop.f32.mrb[0].mxu0
        %v1705 = vadd.f32 %v1608, %v1704
        %v1706 = vpop.f32.mrb[0].mxu0
        %v1707 = vpop.f32.mrb[0].mxu0
        %v1708 = vadd.f32 %v1611, %v1707
        %v1709 = vpop.f32.mrb[0].mxu0
        %1710 = vmatprep.mubr.bf16.mxu0 %v758
        %1711 = vmatmul.mubr.bf16.gmra.mrb[0].mxu0 %v757
        %v1712 = vpop.f32.mrb[0].mxu0
        %v1713 = vadd.f32 %v1616, %v1712
        %v1714 = vpop.f32.mrb[0].mxu0
        %v1715 = vpop.f32.mrb[0].mxu0
        %v1716 = vadd.f32 %v1619, %v1715
        %v1717 = vpop.f32.mrb[0].mxu0
        %1718 = vmatprep.mubr.bf16.mxu0 %v768
        %1719 = vmatmul.mubr.bf16.gmra.mrb[0].mxu0 %v767
        %v1720 = vpop.f32.mrb[0].mxu0
        %v1721 = vadd.f32 %v1624, %v1720
        %v1722 = vpop.f32.mrb[0].mxu0
        %v1723 = vpop.f32.mrb[0].mxu0
        %v1724 = vadd.f32 %v1627, %v1723
        %v1725 = vpop.f32.mrb[0].mxu0
        %1726 = vmatprep.mubr.bf16.mxu0 %v778
        %1727 = vmatmul.mubr.bf16.gmra.mrb[0].mxu0 %v777
        %v1728 = vpop.f32.mrb[0].mxu0
        %v1729 = vadd.f32 %v1632, %v1728
        %v1730 = vpop.f32.mrb[0].mxu0
        %v1731 = vpop.f32.mrb[0].mxu0
        %v1732 = vadd.f32 %v1635, %v1731
        %v1733 = vpop.f32.mrb[0].mxu0
        %1734 = vmatprep.mubr.bf16.mxu0 %v788
        %1735 = vmatmul.mubr.bf16.gmra.mrb[0].mxu0 %v787
        %v1736 = vpop.f32.mrb[0].mxu0
        %v1737 = vadd.f32 %v1640, %v1736
        %v1738 = vpop.f32.mrb[0].mxu0
        %v1739 = vpop.f32.mrb[0].mxu0
        %v1740 = vadd.f32 %v1643, %v1739
        %v1741 = vpop.f32.mrb[0].mxu0
        %1742 = vmatprep.mubr.bf16.mxu0 %v798
        %1743 = vmatmul.mubr.bf16.gmra.mrb[0].mxu0 %v797
        %v1744 = vpop.f32.mrb[0].mxu0
        %v1745 = vadd.f32 %v1648, %v1744
        %v1746 = vpop.f32.mrb[0].mxu0
        %v1747 = vpop.f32.mrb[0].mxu0
        %v1748 = vadd.f32 %v1651, %v1747
        %v1749 = vpop.f32.mrb[0].mxu0
        %1750 = vmatprep.mubr.bf16.mxu0 %v808
        %1751 = vmatmul.mubr.bf16.gmra.mrb[0].mxu0 %v807
        %v1752 = vpop.f32.mrb[0].mxu0
        %v1753 = vadd.f32 %v1656, %v1752
        %v1754 = vpop.f32.mrb[0].mxu0
        %v1755 = vpop.f32.mrb[0].mxu0
        %v1756 = vadd.f32 %v1659, %v1755
        %v1757 = vpop.f32.mrb[0].mxu0
        %1758 = vdwg.mxu0
        %1759 = vmatprep.subr.bf16.mxu0 0
        %1760 = vmatpush1.bf16.msra.mxu0 %v1275
        %1761 = vmatprep.subr.bf16.mxu0 0
        %1762 = vmatpush1.bf16.msra.mxu0 %v1276
        %1763 = vmatprep.subr.bf16.mxu0 0
        %1764 = vmatpush1.bf16.msra.mxu0 %v1277
        %1765 = vmatprep.subr.bf16.mxu0 0
        %1766 = vmatpush1.bf16.msra.mxu0 %v1278
        %1767 = vmatprep.subr.bf16.mxu0 0
        %1768 = vmatpush1.bf16.msra.mxu0 %v1279
        %1769 = vmatprep.subr.bf16.mxu0 0
        %1770 = vmatpush1.bf16.msra.mxu0 %v1280
        %1771 = vmatprep.subr.bf16.mxu0 0
        %1772 = vmatpush1.bf16.msra.mxu0 %v1281
        %1773 = vmatprep.subr.bf16.mxu0 0
        %1774 = vmatpush1.bf16.msra.mxu0 %v1282
        %1775 = vmatprep.subr.bf16.mxu0 0
        %1776 = vmatpush1.bf16.msra.mxu0 %v1283
        %1777 = vmatprep.subr.bf16.mxu0 0
        %1778 = vmatpush1.bf16.msra.mxu0 %v1284
        %1779 = vmatprep.subr.bf16.mxu0 0
        %1780 = vmatpush1.bf16.msra.mxu0 %v1285
        %1781 = vmatprep.subr.bf16.mxu0 0
        %1782 = vmatpush1.bf16.msra.mxu0 %v1286
        %1783 = vmatprep.subr.bf16.mxu0 0
        %1784 = vmatpush1.bf16.msra.mxu0 %v1287
        %1785 = vmatprep.subr.bf16.mxu0 0
        %1786 = vmatpush1.bf16.msra.mxu0 %v1288
        %1787 = vmatprep.subr.bf16.mxu0 0
        %1788 = vmatpush1.bf16.msra.mxu0 %v1289
        %1789 = vmatprep.subr.bf16.mxu0 0
        %1790 = vmatpush1.bf16.msra.mxu0 %v1290
        %1791 = vmatprep.mubr.bf16.mxu0 %v740
        %1792 = vmatmul.mubr.bf16.gmra.mrb[0].mxu0 %v739
        %v1793 = vpop.f32.mrb[0].mxu0
        %v1794 = vadd.f32 %v1697, %v1793
        %v1795 = vpop.f32.mrb[0].mxu0
        %v1796 = vpop.f32.mrb[0].mxu0
        %v1797 = vadd.f32 %v1700, %v1796
        %v1798 = vpop.f32.mrb[0].mxu0
        %1799 = vmatprep.mubr.bf16.mxu0 %v750
        %1800 = vmatmul.mubr.bf16.gmra.mrb[0].mxu0 %v749
        %v1801 = vpop.f32.mrb[0].mxu0
        %v1802 = vadd.f32 %v1705, %v1801
        %v1803 = vpop.f32.mrb[0].mxu0
        %v1804 = vpop.f32.mrb[0].mxu0
        %v1805 = vadd.f32 %v1708, %v1804
        %v1806 = vpop.f32.mrb[0].mxu0
        %1807 = vmatprep.mubr.bf16.mxu0 %v760
        %1808 = vmatmul.mubr.bf16.gmra.mrb[0].mxu0 %v759
        %v1809 = vpop.f32.mrb[0].mxu0
        %v1810 = vadd.f32 %v1713, %v1809
        %v1811 = vpop.f32.mrb[0].mxu0
        %v1812 = vpop.f32.mrb[0].mxu0
        %v1813 = vadd.f32 %v1716, %v1812
        %v1814 = vpop.f32.mrb[0].mxu0
        %1815 = vmatprep.mubr.bf16.mxu0 %v770
        %1816 = vmatmul.mubr.bf16.gmra.mrb[0].mxu0 %v769
        %v1817 = vpop.f32.mrb[0].mxu0
        %v1818 = vadd.f32 %v1721, %v1817
        %v1819 = vpop.f32.mrb[0].mxu0
        %v1820 = vpop.f32.mrb[0].mxu0
        %v1821 = vadd.f32 %v1724, %v1820
        %v1822 = vpop.f32.mrb[0].mxu0
        %1823 = vmatprep.mubr.bf16.mxu0 %v780
        %1824 = vmatmul.mubr.bf16.gmra.mrb[0].mxu0 %v779
        %v1825 = vpop.f32.mrb[0].mxu0
        %v1826 = vadd.f32 %v1729, %v1825
        %v1827 = vpop.f32.mrb[0].mxu0
        %v1828 = vpop.f32.mrb[0].mxu0
        %v1829 = vadd.f32 %v1732, %v1828
        %v1830 = vpop.f32.mrb[0].mxu0
        %1831 = vmatprep.mubr.bf16.mxu0 %v790
        %1832 = vmatmul.mubr.bf16.gmra.mrb[0].mxu0 %v789
        %v1833 = vpop.f32.mrb[0].mxu0
        %v1834 = vadd.f32 %v1737, %v1833
        %v1835 = vpop.f32.mrb[0].mxu0
        %v1836 = vpop.f32.mrb[0].mxu0
        %v1837 = vadd.f32 %v1740, %v1836
        %v1838 = vpop.f32.mrb[0].mxu0
        %1839 = vmatprep.mubr.bf16.mxu0 %v800
        %1840 = vmatmul.mubr.bf16.gmra.mrb[0].mxu0 %v799
        %v1841 = vpop.f32.mrb[0].mxu0
        %v1842 = vadd.f32 %v1745, %v1841
        %v1843 = vpop.f32.mrb[0].mxu0
        %v1844 = vpop.f32.mrb[0].mxu0
        %v1845 = vadd.f32 %v1748, %v1844
        %v1846 = vpop.f32.mrb[0].mxu0
        %1847 = vmatprep.mubr.bf16.mxu0 %v810
        %1848 = vmatmul.mubr.bf16.gmra.mrb[0].mxu0 %v809
        %v1849 = vpop.f32.mrb[0].mxu0
        %v1850 = vadd.f32 %v1753, %v1849
        %v1851 = vpop.f32.mrb[0].mxu0
        %v1852 = vpop.f32.mrb[0].mxu0
        %v1853 = vadd.f32 %v1756, %v1852
        %v1854 = vpop.f32.mrb[0].mxu0
        %1855 = vdwg.mxu0
        %v1856 = vmax.f32 %v1794, %v1810
        %v1857 = vmax.f32 %v1797, %v1813
        %v1858 = vmax.f32 %v1802, %v1818
        %v1859 = vmax.f32 %v1805, %v1821
        %v1860 = vmax.f32 %v1826, %v1842
        %v1861 = vmax.f32 %v1829, %v1845
        %v1862 = vmax.f32 %v1834, %v1850
        %v1863 = vmax.f32 %v1837, %v1853
        %v1864 = vmax.f32 %v1856, %v1860
        %v1865 = vmax.f32 %v1857, %v1861
        %v1866 = vmax.f32 %v1858, %v1862
        %v1867 = vmax.f32 %v1859, %v1863
        %v1868 = vld [vmem:[%s2] sm:$0x1]
        %v1870 = vlaneseq
        %v1871 = vshrl.u32 %v1870, 7
        %v1872 = vsub.s32 0, %v1871
        %v1873 = vrot.slane %v1868, %v1872
        %v1875 = vadd.f32 %v1864, %v1873
        %v1876 = vadd.f32 %v1865, %v1873
        %v1877 = vadd.f32 %v1866, %v1873
        %v1878 = vadd.f32 %v1867, %v1873
        %s1879 = sld [smem:[#allocation2]]
        %vm1880 = vcmp.ge.f32.partialorder %v1875, 0.0
        %vm1881 = vcmp.ge.f32.partialorder %v1876, 0.0
        %vm1882 = vcmp.ge.f32.partialorder %v1877, 0.0
        %vm1883 = vcmp.ge.f32.partialorder %v1878, 0.0
        %v1884 = vstv %s1879
        %v1885 = vmul.f32 %v1884, %v1875
        %v1886 = vmul.f32 %v1884, %v1876
        %v1887 = vmul.f32 %v1884, %v1877
        %v1888 = vmul.f32 %v1884, %v1878
        %v1889 = vsel %vm1880, %v1875, %v1885
        %v1890 = vsel %vm1881, %v1876, %v1886
        %v1891 = vsel %vm1882, %v1877, %v1887
        %v1892 = vsel %vm1883, %v1878, %v1888
        %v1893 = vpack.c.bf16 %v1889, %v1889
        %v1894 = vld [vmem:[%s4] sm:$0xf]
        %v1895 = vld [vmem:[%s4 + $0x4] sm:$0xf]
        %v1896 = vld [vmem:[%s4 + $0x8] sm:$0xf]
        %v1897 = vld [vmem:[%s4 + $0xc] sm:$0xf]
        %v1898 = vld [vmem:[%s4 + $0x10] sm:$0xf]
        %v1899 = vld [vmem:[%s4 + $0x14] sm:$0xf]
        %v1900 = vld [vmem:[%s4 + $0x18] sm:$0xf]
        %v1901 = vld [vmem:[%s4 + $0x1c] sm:$0xf]
        %v1902 = vld [vmem:[%s4 + $0x20] sm:$0xf]
        %v1903 = vld [vmem:[%s4 + $0x24] sm:$0xf]
        %v1904 = vld [vmem:[%s4 + $0x28] sm:$0xf]
        %v1905 = vld [vmem:[%s4 + $0x2c] sm:$0xf]
        %v1906 = vld [vmem:[%s4 + $0x30] sm:$0xf]
        %v1907 = vld [vmem:[%s4 + $0x34] sm:$0xf]
        %v1908 = vld [vmem:[%s4 + $0x38] sm:$0xf]
        %v1909 = vld [vmem:[%s4 + $0x3c] sm:$0xf]
        %s1910 = scalar_lea.vmem %s4, 64
        %v1911 = vld [vmem:[%s1910] sm:$0xf]
        %v1912 = vld [vmem:[%s1910 + $0x4] sm:$0xf]
        %v1913 = vld [vmem:[%s1910 + $0x8] sm:$0xf]
        %v1914 = vld [vmem:[%s1910 + $0xc] sm:$0xf]
        %v1915 = vld [vmem:[%s1910 + $0x10] sm:$0xf]
        %v1916 = vld [vmem:[%s1910 + $0x14] sm:$0xf]
        %v1917 = vld [vmem:[%s1910 + $0x18] sm:$0xf]
        %v1918 = vld [vmem:[%s1910 + $0x1c] sm:$0xf]
        %v1919 = vld [vmem:[%s1910 + $0x20] sm:$0xf]
        %v1920 = vld [vmem:[%s1910 + $0x24] sm:$0xf]
        %v1921 = vld [vmem:[%s1910 + $0x28] sm:$0xf]
        %v1922 = vld [vmem:[%s1910 + $0x2c] sm:$0xf]
        %v1923 = vld [vmem:[%s1910 + $0x30] sm:$0xf]
        %v1924 = vld [vmem:[%s1910 + $0x34] sm:$0xf]
        %v1925 = vld [vmem:[%s1910 + $0x38] sm:$0xf]
        %v1926 = vld [vmem:[%s1910 + $0x3c] sm:$0xf]
        %v1928 = vshrl.u32 %v1893, 16
        %v1947 = vunpack.c.l.b16 %v1911
        %v1948 = vunpack.c.l.b16 %v1912
        %v1949 = vunpack.c.l.b16 %v1913
        %v1950 = vunpack.c.l.b16 %v1914
        %v1951 = vunpack.c.l.b16 %v1915
        %v1952 = vunpack.c.l.b16 %v1916
        %v1953 = vunpack.c.l.b16 %v1917
        %v1954 = vunpack.c.l.b16 %v1918
        %v1955 = vunpack.c.l.b16 %v1919
        %v1956 = vunpack.c.l.b16 %v1920
        %v1957 = vunpack.c.l.b16 %v1921
        %v1958 = vunpack.c.l.b16 %v1922
        %v1959 = vunpack.c.l.b16 %v1923
        %v1960 = vunpack.c.l.b16 %v1924
        %v1961 = vunpack.c.l.b16 %v1925
        %v1962 = vunpack.c.l.b16 %v1926
        %v1963 = vpack.c.b16 %v1948, %v1947
        %v1964 = vpack.c.b16 %v1950, %v1949
        %v1965 = vpack.c.b16 %v1952, %v1951
        %v1966 = vpack.c.b16 %v1954, %v1953
        %v1967 = vpack.c.b16 %v1956, %v1955
        %v1968 = vpack.c.b16 %v1958, %v1957
        %v1969 = vpack.c.b16 %v1960, %v1959
        %v1970 = vpack.c.b16 %v1962, %v1961
        %1979 = vmatprep.subr.bf16.mxu0 0
        %1980 = vmatpush1.bf16.msra.mxu0 %v1963
        %1981 = vmatprep.subr.bf16.mxu0 0
        %1982 = vmatpush1.bf16.msra.mxu0 %v1964
        %1983 = vmatprep.subr.bf16.mxu0 0
        %1984 = vmatpush1.bf16.msra.mxu0 %v1965
        %1985 = vmatprep.subr.bf16.mxu0 0
        %1986 = vmatpush1.bf16.msra.mxu0 %v1966
        %1987 = vmatprep.subr.bf16.mxu0 0
        %1988 = vmatpush1.bf16.msra.mxu0 %v1967
        %1989 = vmatprep.subr.bf16.mxu0 0
        %1990 = vmatpush1.bf16.msra.mxu0 %v1968
        %1991 = vmatprep.subr.bf16.mxu0 0
        %1992 = vmatpush1.bf16.msra.mxu0 %v1969
        %1993 = vmatprep.subr.bf16.mxu0 0
        %1994 = vmatpush1.bf16.msra.mxu0 %v1970
        %1995 = vmatprep.subr.bf16.mxu0 0
        %1996 = vmatpush1.bf16.msra.mxu0 0
        %1997 = vmatprep.subr.bf16.mxu0 0
        %1998 = vmatpush1.bf16.msra.mxu0 0
        %1999 = vmatprep.subr.bf16.mxu0 0
        %2000 = vmatpush1.bf16.msra.mxu0 0
        %2001 = vmatprep.subr.bf16.mxu0 0
        %2002 = vmatpush1.bf16.msra.mxu0 0
        %2003 = vmatprep.subr.bf16.mxu0 0
        %2004 = vmatpush1.bf16.msra.mxu0 0
        %2005 = vmatprep.subr.bf16.mxu0 0
        %2006 = vmatpush1.bf16.msra.mxu0 0
        %2007 = vmatprep.subr.bf16.mxu0 0
        %2008 = vmatpush1.bf16.msra.mxu0 0
        %2009 = vmatprep.subr.bf16.mxu0 0
        %2010 = vmatpush1.bf16.msra.mxu0 0
        %2011 = vmatprep.mubr.bf16.mxu0 0
        %2012 = vmatmul.mubr.bf16.gmra.mrb[0].mxu0 %v1928
        %v2013 = vpop.f32.mrb[0].mxu0
        %v2014 = vadd.f32 0.0, %v2013
        %v2015 = vpop.f32.mrb[0].mxu0
        %v2016 = vpop.f32.mrb[0].mxu0
        %v2017 = vpop.f32.mrb[0].mxu0
        %2018 = vdwg.mxu0
        %v2035 = vunpack.c.l.b16 %v1894
        %v2036 = vunpack.c.l.b16 %v1895
        %v2037 = vunpack.c.l.b16 %v1896
        %v2038 = vunpack.c.l.b16 %v1897
        %v2039 = vunpack.c.l.b16 %v1898
        %v2040 = vunpack.c.l.b16 %v1899
        %v2041 = vunpack.c.l.b16 %v1900
        %v2042 = vunpack.c.l.b16 %v1901
        %v2043 = vunpack.c.l.b16 %v1902
        %v2044 = vunpack.c.l.b16 %v1903
        %v2045 = vunpack.c.l.b16 %v1904
        %v2046 = vunpack.c.l.b16 %v1905
        %v2047 = vunpack.c.l.b16 %v1906
        %v2048 = vunpack.c.l.b16 %v1907
        %v2049 = vunpack.c.l.b16 %v1908
        %v2050 = vunpack.c.l.b16 %v1909
        %v2051 = vpack.c.b16 %v2036, %v2035
        %v2052 = vpack.c.b16 %v2038, %v2037
        %v2053 = vpack.c.b16 %v2040, %v2039
        %v2054 = vpack.c.b16 %v2042, %v2041
        %v2055 = vpack.c.b16 %v2044, %v2043
        %v2056 = vpack.c.b16 %v2046, %v2045
        %v2057 = vpack.c.b16 %v2048, %v2047
        %v2058 = vpack.c.b16 %v2050, %v2049
        %2067 = vmatprep.subr.bf16.mxu0 0
        %2068 = vmatpush1.bf16.msra.mxu0 %v2051
        %2069 = vmatprep.subr.bf16.mxu0 0
        %2070 = vmatpush1.bf16.msra.mxu0 %v2052
        %2071 = vmatprep.subr.bf16.mxu0 0
        %2072 = vmatpush1.bf16.msra.mxu0 %v2053
        %2073 = vmatprep.subr.bf16.mxu0 0
        %2074 = vmatpush1.bf16.msra.mxu0 %v2054
        %2075 = vmatprep.subr.bf16.mxu0 0
        %2076 = vmatpush1.bf16.msra.mxu0 %v2055
        %2077 = vmatprep.subr.bf16.mxu0 0
        %2078 = vmatpush1.bf16.msra.mxu0 %v2056
        %2079 = vmatprep.subr.bf16.mxu0 0
        %2080 = vmatpush1.bf16.msra.mxu0 %v2057
        %2081 = vmatprep.subr.bf16.mxu0 0
        %2082 = vmatpush1.bf16.msra.mxu0 %v2058
        %2083 = vmatprep.subr.bf16.mxu0 0
        %2084 = vmatpush1.bf16.msra.mxu0 0
        %2085 = vmatprep.subr.bf16.mxu0 0
        %2086 = vmatpush1.bf16.msra.mxu0 0
        %2087 = vmatprep.subr.bf16.mxu0 0
        %2088 = vmatpush1.bf16.msra.mxu0 0
        %2089 = vmatprep.subr.bf16.mxu0 0
        %2090 = vmatpush1.bf16.msra.mxu0 0
        %2091 = vmatprep.subr.bf16.mxu0 0
        %2092 = vmatpush1.bf16.msra.mxu0 0
        %2093 = vmatprep.subr.bf16.mxu0 0
        %2094 = vmatpush1.bf16.msra.mxu0 0
        %2095 = vmatprep.subr.bf16.mxu0 0
        %2096 = vmatpush1.bf16.msra.mxu0 0
        %2097 = vmatprep.subr.bf16.mxu0 0
        %2098 = vmatpush1.bf16.msra.mxu0 0
        %2099 = vmatprep.mubr.bf16.mxu0 0
        %2100 = vmatmul.mubr.bf16.gmra.mrb[0].mxu0 %v1893
        %v2101 = vpop.f32.mrb[0].mxu0
        %v2102 = vadd.f32 %v2014, %v2101
        %v2103 = vpop.f32.mrb[0].mxu0
        %v2104 = vpop.f32.mrb[0].mxu0
        %v2105 = vpop.f32.mrb[0].mxu0
        %2106 = vdwg.mxu0
        %s2107 = scalar_lea.vmem %s4, 128
        %v2108 = vld [vmem:[%s2107] sm:$0xf]
        %v2109 = vld [vmem:[%s2107 + $0x4] sm:$0xf]
        %v2110 = vld [vmem:[%s2107 + $0x8] sm:$0xf]
        %v2111 = vld [vmem:[%s2107 + $0xc] sm:$0xf]
        %v2112 = vld [vmem:[%s2107 + $0x10] sm:$0xf]
        %v2113 = vld [vmem:[%s2107 + $0x14] sm:$0xf]
        %v2114 = vld [vmem:[%s2107 + $0x18] sm:$0xf]
        %v2115 = vld [vmem:[%s2107 + $0x1c] sm:$0xf]
        %v2116 = vld [vmem:[%s2107 + $0x20] sm:$0xf]
        %v2117 = vld [vmem:[%s2107 + $0x24] sm:$0xf]
        %v2118 = vld [vmem:[%s2107 + $0x28] sm:$0xf]
        %v2119 = vld [vmem:[%s2107 + $0x2c] sm:$0xf]
        %v2120 = vld [vmem:[%s2107 + $0x30] sm:$0xf]
        %v2121 = vld [vmem:[%s2107 + $0x34] sm:$0xf]
        %v2122 = vld [vmem:[%s2107 + $0x38] sm:$0xf]
        %v2123 = vld [vmem:[%s2107 + $0x3c] sm:$0xf]
        %v2125 = vrot.slane %v1893, 1
        %v2143 = vunpack.c.l.b16 %v2108
        %v2144 = vunpack.c.l.b16 %v2109
        %v2145 = vunpack.c.l.b16 %v2110
        %v2146 = vunpack.c.l.b16 %v2111
        %v2147 = vunpack.c.l.b16 %v2112
        %v2148 = vunpack.c.l.b16 %v2113
        %v2149 = vunpack.c.l.b16 %v2114
        %v2150 = vunpack.c.l.b16 %v2115
        %v2151 = vunpack.c.l.b16 %v2116
        %v2152 = vunpack.c.l.b16 %v2117
        %v2153 = vunpack.c.l.b16 %v2118
        %v2154 = vunpack.c.l.b16 %v2119
        %v2155 = vunpack.c.l.b16 %v2120
        %v2156 = vunpack.c.l.b16 %v2121
        %v2157 = vunpack.c.l.b16 %v2122
        %v2158 = vunpack.c.l.b16 %v2123
        %v2159 = vpack.c.b16 %v2144, %v2143
        %v2160 = vpack.c.b16 %v2146, %v2145
        %v2161 = vpack.c.b16 %v2148, %v2147
        %v2162 = vpack.c.b16 %v2150, %v2149
        %v2163 = vpack.c.b16 %v2152, %v2151
        %v2164 = vpack.c.b16 %v2154, %v2153
        %v2165 = vpack.c.b16 %v2156, %v2155
        %v2166 = vpack.c.b16 %v2158, %v2157
        %2175 = vmatprep.subr.bf16.mxu0 0
        %2176 = vmatpush1.bf16.msra.mxu0 %v2159
        %2177 = vmatprep.subr.bf16.mxu0 0
        %2178 = vmatpush1.bf16.msra.mxu0 %v2160
        %2179 = vmatprep.subr.bf16.mxu0 0
        %2180 = vmatpush1.bf16.msra.mxu0 %v2161
        %2181 = vmatprep.subr.bf16.mxu0 0
        %2182 = vmatpush1.bf16.msra.mxu0 %v2162
        %2183 = vmatprep.subr.bf16.mxu0 0
        %2184 = vmatpush1.bf16.msra.mxu0 %v2163
        %2185 = vmatprep.subr.bf16.mxu0 0
        %2186 = vmatpush1.bf16.msra.mxu0 %v2164
        %2187 = vmatprep.subr.bf16.mxu0 0
        %2188 = vmatpush1.bf16.msra.mxu0 %v2165
        %2189 = vmatprep.subr.bf16.mxu0 0
        %2190 = vmatpush1.bf16.msra.mxu0 %v2166
        %2191 = vmatprep.subr.bf16.mxu0 0
        %2192 = vmatpush1.bf16.msra.mxu0 0
        %2193 = vmatprep.subr.bf16.mxu0 0
        %2194 = vmatpush1.bf16.msra.mxu0 0
        %2195 = vmatprep.subr.bf16.mxu0 0
        %2196 = vmatpush1.bf16.msra.mxu0 0
        %2197 = vmatprep.subr.bf16.mxu0 0
        %2198 = vmatpush1.bf16.msra.mxu0 0
        %2199 = vmatprep.subr.bf16.mxu0 0
        %2200 = vmatpush1.bf16.msra.mxu0 0
        %2201 = vmatprep.subr.bf16.mxu0 0
        %2202 = vmatpush1.bf16.msra.mxu0 0
        %2203 = vmatprep.subr.bf16.mxu0 0
        %2204 = vmatpush1.bf16.msra.mxu0 0
        %2205 = vmatprep.subr.bf16.mxu0 0
        %2206 = vmatpush1.bf16.msra.mxu0 0
        %2207 = vmatprep.mubr.bf16.mxu0 0
        %2208 = vmatmul.mubr.bf16.gmra.mrb[0].mxu0 %v2125
        %v2209 = vpop.f32.mrb[0].mxu0
        %v2210 = vadd.f32 0.0, %v2209
        %v2211 = vpop.f32.mrb[0].mxu0
        %v2212 = vpop.f32.mrb[0].mxu0
        %v2213 = vpop.f32.mrb[0].mxu0
        %2214 = vdwg.mxu0
        %v2215 = vadd.f32 %v2102, %v2210
        %s2216 = scalar_lea.vmem %s4, 192
        %v2217 = vld [vmem:[%s2216] sm:$0xf]
        %v2218 = vld [vmem:[%s2216 + $0x4] sm:$0xf]
        %v2219 = vld [vmem:[%s2216 + $0x8] sm:$0xf]
        %v2220 = vld [vmem:[%s2216 + $0xc] sm:$0xf]
        %v2221 = vld [vmem:[%s2216 + $0x10] sm:$0xf]
        %v2222 = vld [vmem:[%s2216 + $0x14] sm:$0xf]
        %v2223 = vld [vmem:[%s2216 + $0x18] sm:$0xf]
        %v2224 = vld [vmem:[%s2216 + $0x1c] sm:$0xf]
        %v2225 = vld [vmem:[%s2216 + $0x20] sm:$0xf]
        %v2226 = vld [vmem:[%s2216 + $0x24] sm:$0xf]
        %v2227 = vld [vmem:[%s2216 + $0x28] sm:$0xf]
        %v2228 = vld [vmem:[%s2216 + $0x2c] sm:$0xf]
        %v2229 = vld [vmem:[%s2216 + $0x30] sm:$0xf]
        %v2230 = vld [vmem:[%s2216 + $0x34] sm:$0xf]
        %v2231 = vld [vmem:[%s2216 + $0x38] sm:$0xf]
        %v2232 = vld [vmem:[%s2216 + $0x3c] sm:$0xf]
        %v2233 = vrot.slane %v1928, 1
        %v2251 = vunpack.c.l.b16 %v2217
        %v2252 = vunpack.c.l.b16 %v2218
        %v2253 = vunpack.c.l.b16 %v2219
        %v2254 = vunpack.c.l.b16 %v2220
        %v2255 = vunpack.c.l.b16 %v2221
        %v2256 = vunpack.c.l.b16 %v2222
        %v2257 = vunpack.c.l.b16 %v2223
        %v2258 = vunpack.c.l.b16 %v2224
        %v2259 = vunpack.c.l.b16 %v2225
        %v2260 = vunpack.c.l.b16 %v2226
        %v2261 = vunpack.c.l.b16 %v2227
        %v2262 = vunpack.c.l.b16 %v2228
        %v2263 = vunpack.c.l.b16 %v2229
        %v2264 = vunpack.c.l.b16 %v2230
        %v2265 = vunpack.c.l.b16 %v2231
        %v2266 = vunpack.c.l.b16 %v2232
        %v2267 = vpack.c.b16 %v2252, %v2251
        %v2268 = vpack.c.b16 %v2254, %v2253
        %v2269 = vpack.c.b16 %v2256, %v2255
        %v2270 = vpack.c.b16 %v2258, %v2257
        %v2271 = vpack.c.b16 %v2260, %v2259
        %v2272 = vpack.c.b16 %v2262, %v2261
        %v2273 = vpack.c.b16 %v2264, %v2263
        %v2274 = vpack.c.b16 %v2266, %v2265
        %2283 = vmatprep.subr.bf16.mxu0 0
        %2284 = vmatpush1.bf16.msra.mxu0 %v2267
        %2285 = vmatprep.subr.bf16.mxu0 0
        %2286 = vmatpush1.bf16.msra.mxu0 %v2268
        %2287 = vmatprep.subr.bf16.mxu0 0
        %2288 = vmatpush1.bf16.msra.mxu0 %v2269
        %2289 = vmatprep.subr.bf16.mxu0 0
        %2290 = vmatpush1.bf16.msra.mxu0 %v2270
        %2291 = vmatprep.subr.bf16.mxu0 0
        %2292 = vmatpush1.bf16.msra.mxu0 %v2271
        %2293 = vmatprep.subr.bf16.mxu0 0
        %2294 = vmatpush1.bf16.msra.mxu0 %v2272
        %2295 = vmatprep.subr.bf16.mxu0 0
        %2296 = vmatpush1.bf16.msra.mxu0 %v2273
        %2297 = vmatprep.subr.bf16.mxu0 0
        %2298 = vmatpush1.bf16.msra.mxu0 %v2274
        %2299 = vmatprep.subr.bf16.mxu0 0
        %2300 = vmatpush1.bf16.msra.mxu0 0
        %2301 = vmatprep.subr.bf16.mxu0 0
        %2302 = vmatpush1.bf16.msra.mxu0 0
        %2303 = vmatprep.subr.bf16.mxu0 0
        %2304 = vmatpush1.bf16.msra.mxu0 0
        %2305 = vmatprep.subr.bf16.mxu0 0
        %2306 = vmatpush1.bf16.msra.mxu0 0
        %2307 = vmatprep.subr.bf16.mxu0 0
        %2308 = vmatpush1.bf16.msra.mxu0 0
        %2309 = vmatprep.subr.bf16.mxu0 0
        %2310 = vmatpush1.bf16.msra.mxu0 0
        %2311 = vmatprep.subr.bf16.mxu0 0
        %2312 = vmatpush1.bf16.msra.mxu0 0
        %2313 = vmatprep.subr.bf16.mxu0 0
        %2314 = vmatpush1.bf16.msra.mxu0 0
        %2315 = vmatprep.mubr.bf16.mxu0 0
        %2316 = vmatmul.mubr.bf16.gmra.mrb[0].mxu0 %v2233
        %v2317 = vpop.f32.mrb[0].mxu0
        %v2318 = vadd.f32 0.0, %v2317
        %v2319 = vpop.f32.mrb[0].mxu0
        %v2320 = vpop.f32.mrb[0].mxu0
        %v2321 = vpop.f32.mrb[0].mxu0
        %2322 = vdwg.mxu0
        %v2323 = vadd.f32 %v2215, %v2318
        %s2324 = scalar_lea.vmem %s4, 256
        %v2325 = vld [vmem:[%s2324] sm:$0xf]
        %v2326 = vld [vmem:[%s2324 + $0x4] sm:$0xf]
        %v2327 = vld [vmem:[%s2324 + $0x8] sm:$0xf]
        %v2328 = vld [vmem:[%s2324 + $0xc] sm:$0xf]
        %v2329 = vld [vmem:[%s2324 + $0x10] sm:$0xf]
        %v2330 = vld [vmem:[%s2324 + $0x14] sm:$0xf]
        %v2331 = vld [vmem:[%s2324 + $0x18] sm:$0xf]
        %v2332 = vld [vmem:[%s2324 + $0x1c] sm:$0xf]
        %v2333 = vld [vmem:[%s2324 + $0x20] sm:$0xf]
        %v2334 = vld [vmem:[%s2324 + $0x24] sm:$0xf]
        %v2335 = vld [vmem:[%s2324 + $0x28] sm:$0xf]
        %v2336 = vld [vmem:[%s2324 + $0x2c] sm:$0xf]
        %v2337 = vld [vmem:[%s2324 + $0x30] sm:$0xf]
        %v2338 = vld [vmem:[%s2324 + $0x34] sm:$0xf]
        %v2339 = vld [vmem:[%s2324 + $0x38] sm:$0xf]
        %v2340 = vld [vmem:[%s2324 + $0x3c] sm:$0xf]
        %v2341 = vrot.slane %v1893, 2
        %v2359 = vunpack.c.l.b16 %v2325
        %v2360 = vunpack.c.l.b16 %v2326
        %v2361 = vunpack.c.l.b16 %v2327
        %v2362 = vunpack.c.l.b16 %v2328
        %v2363 = vunpack.c.l.b16 %v2329
        %v2364 = vunpack.c.l.b16 %v2330
        %v2365 = vunpack.c.l.b16 %v2331
        %v2366 = vunpack.c.l.b16 %v2332
        %v2367 = vunpack.c.l.b16 %v2333
        %v2368 = vunpack.c.l.b16 %v2334
        %v2369 = vunpack.c.l.b16 %v2335
        %v2370 = vunpack.c.l.b16 %v2336
        %v2371 = vunpack.c.l.b16 %v2337
        %v2372 = vunpack.c.l.b16 %v2338
        %v2373 = vunpack.c.l.b16 %v2339
        %v2374 = vunpack.c.l.b16 %v2340
        %v2375 = vpack.c.b16 %v2360, %v2359
        %v2376 = vpack.c.b16 %v2362, %v2361
        %v2377 = vpack.c.b16 %v2364, %v2363
        %v2378 = vpack.c.b16 %v2366, %v2365
        %v2379 = vpack.c.b16 %v2368, %v2367
        %v2380 = vpack.c.b16 %v2370, %v2369
        %v2381 = vpack.c.b16 %v2372, %v2371
        %v2382 = vpack.c.b16 %v2374, %v2373
        %2391 = vmatprep.subr.bf16.mxu0 0
        %2392 = vmatpush1.bf16.msra.mxu0 %v2375
        %2393 = vmatprep.subr.bf16.mxu0 0
        %2394 = vmatpush1.bf16.msra.mxu0 %v2376
        %2395 = vmatprep.subr.bf16.mxu0 0
        %2396 = vmatpush1.bf16.msra.mxu0 %v2377
        %2397 = vmatprep.subr.bf16.mxu0 0
        %2398 = vmatpush1.bf16.msra.mxu0 %v2378
        %2399 = vmatprep.subr.bf16.mxu0 0
        %2400 = vmatpush1.bf16.msra.mxu0 %v2379
        %2401 = vmatprep.subr.bf16.mxu0 0
        %2402 = vmatpush1.bf16.msra.mxu0 %v2380
        %2403 = vmatprep.subr.bf16.mxu0 0
        %2404 = vmatpush1.bf16.msra.mxu0 %v2381
        %2405 = vmatprep.subr.bf16.mxu0 0
        %2406 = vmatpush1.bf16.msra.mxu0 %v2382
        %2407 = vmatprep.subr.bf16.mxu0 0
        %2408 = vmatpush1.bf16.msra.mxu0 0
        %2409 = vmatprep.subr.bf16.mxu0 0
        %2410 = vmatpush1.bf16.msra.mxu0 0
        %2411 = vmatprep.subr.bf16.mxu0 0
        %2412 = vmatpush1.bf16.msra.mxu0 0
        %2413 = vmatprep.subr.bf16.mxu0 0
        %2414 = vmatpush1.bf16.msra.mxu0 0
        %2415 = vmatprep.subr.bf16.mxu0 0
        %2416 = vmatpush1.bf16.msra.mxu0 0
        %2417 = vmatprep.subr.bf16.mxu0 0
        %2418 = vmatpush1.bf16.msra.mxu0 0
        %2419 = vmatprep.subr.bf16.mxu0 0
        %2420 = vmatpush1.bf16.msra.mxu0 0
        %2421 = vmatprep.subr.bf16.mxu0 0
        %2422 = vmatpush1.bf16.msra.mxu0 0
        %2423 = vmatprep.mubr.bf16.mxu0 0
        %2424 = vmatmul.mubr.bf16.gmra.mrb[0].mxu0 %v2341
        %v2425 = vpop.f32.mrb[0].mxu0
        %v2426 = vadd.f32 0.0, %v2425
        %v2427 = vpop.f32.mrb[0].mxu0
        %v2428 = vpop.f32.mrb[0].mxu0
        %v2429 = vpop.f32.mrb[0].mxu0
        %2430 = vdwg.mxu0
        %v2431 = vadd.f32 %v2323, %v2426
        %s2432 = scalar_lea.vmem %s4, 320
        %v2433 = vld [vmem:[%s2432] sm:$0xf]
        %v2434 = vld [vmem:[%s2432 + $0x4] sm:$0xf]
        %v2435 = vld [vmem:[%s2432 + $0x8] sm:$0xf]
        %v2436 = vld [vmem:[%s2432 + $0xc] sm:$0xf]
        %v2437 = vld [vmem:[%s2432 + $0x10] sm:$0xf]
        %v2438 = vld [vmem:[%s2432 + $0x14] sm:$0xf]
        %v2439 = vld [vmem:[%s2432 + $0x18] sm:$0xf]
        %v2440 = vld [vmem:[%s2432 + $0x1c] sm:$0xf]
        %v2441 = vld [vmem:[%s2432 + $0x20] sm:$0xf]
        %v2442 = vld [vmem:[%s2432 + $0x24] sm:$0xf]
        %v2443 = vld [vmem:[%s2432 + $0x28] sm:$0xf]
        %v2444 = vld [vmem:[%s2432 + $0x2c] sm:$0xf]
        %v2445 = vld [vmem:[%s2432 + $0x30] sm:$0xf]
        %v2446 = vld [vmem:[%s2432 + $0x34] sm:$0xf]
        %v2447 = vld [vmem:[%s2432 + $0x38] sm:$0xf]
        %v2448 = vld [vmem:[%s2432 + $0x3c] sm:$0xf]
        %v2449 = vrot.slane %v1928, 2
        %v2467 = vunpack.c.l.b16 %v2433
        %v2468 = vunpack.c.l.b16 %v2434
        %v2469 = vunpack.c.l.b16 %v2435
        %v2470 = vunpack.c.l.b16 %v2436
        %v2471 = vunpack.c.l.b16 %v2437
        %v2472 = vunpack.c.l.b16 %v2438
        %v2473 = vunpack.c.l.b16 %v2439
        %v2474 = vunpack.c.l.b16 %v2440
        %v2475 = vunpack.c.l.b16 %v2441
        %v2476 = vunpack.c.l.b16 %v2442
        %v2477 = vunpack.c.l.b16 %v2443
        %v2478 = vunpack.c.l.b16 %v2444
        %v2479 = vunpack.c.l.b16 %v2445
        %v2480 = vunpack.c.l.b16 %v2446
        %v2481 = vunpack.c.l.b16 %v2447
        %v2482 = vunpack.c.l.b16 %v2448
        %v2483 = vpack.c.b16 %v2468, %v2467
        %v2484 = vpack.c.b16 %v2470, %v2469
        %v2485 = vpack.c.b16 %v2472, %v2471
        %v2486 = vpack.c.b16 %v2474, %v2473
        %v2487 = vpack.c.b16 %v2476, %v2475
        %v2488 = vpack.c.b16 %v2478, %v2477
        %v2489 = vpack.c.b16 %v2480, %v2479
        %v2490 = vpack.c.b16 %v2482, %v2481
        %2499 = vmatprep.subr.bf16.mxu0 0
        %2500 = vmatpush1.bf16.msra.mxu0 %v2483
        %2501 = vmatprep.subr.bf16.mxu0 0
        %2502 = vmatpush1.bf16.msra.mxu0 %v2484
        %2503 = vmatprep.subr.bf16.mxu0 0
        %2504 = vmatpush1.bf16.msra.mxu0 %v2485
        %2505 = vmatprep.subr.bf16.mxu0 0
        %2506 = vmatpush1.bf16.msra.mxu0 %v2486
        %2507 = vmatprep.subr.bf16.mxu0 0
        %2508 = vmatpush1.bf16.msra.mxu0 %v2487
        %2509 = vmatprep.subr.bf16.mxu0 0
        %2510 = vmatpush1.bf16.msra.mxu0 %v2488
        %2511 = vmatprep.subr.bf16.mxu0 0
        %2512 = vmatpush1.bf16.msra.mxu0 %v2489
        %2513 = vmatprep.subr.bf16.mxu0 0
        %2514 = vmatpush1.bf16.msra.mxu0 %v2490
        %2515 = vmatprep.subr.bf16.mxu0 0
        %2516 = vmatpush1.bf16.msra.mxu0 0
        %2517 = vmatprep.subr.bf16.mxu0 0
        %2518 = vmatpush1.bf16.msra.mxu0 0
        %2519 = vmatprep.subr.bf16.mxu0 0
        %2520 = vmatpush1.bf16.msra.mxu0 0
        %2521 = vmatprep.subr.bf16.mxu0 0
        %2522 = vmatpush1.bf16.msra.mxu0 0
        %2523 = vmatprep.subr.bf16.mxu0 0
        %2524 = vmatpush1.bf16.msra.mxu0 0
        %2525 = vmatprep.subr.bf16.mxu0 0
        %2526 = vmatpush1.bf16.msra.mxu0 0
        %2527 = vmatprep.subr.bf16.mxu0 0
        %2528 = vmatpush1.bf16.msra.mxu0 0
        %2529 = vmatprep.subr.bf16.mxu0 0
        %2530 = vmatpush1.bf16.msra.mxu0 0
        %2531 = vmatprep.mubr.bf16.mxu0 0
        %2532 = vmatmul.mubr.bf16.gmra.mrb[0].mxu0 %v2449
        %v2533 = vpop.f32.mrb[0].mxu0
        %v2534 = vadd.f32 0.0, %v2533
        %v2535 = vpop.f32.mrb[0].mxu0
        %v2536 = vpop.f32.mrb[0].mxu0
        %v2537 = vpop.f32.mrb[0].mxu0
        %2538 = vdwg.mxu0
        %v2539 = vadd.f32 %v2431, %v2534
        %s2540 = scalar_lea.vmem %s4, 384
        %v2541 = vld [vmem:[%s2540] sm:$0xf]
        %v2542 = vld [vmem:[%s2540 + $0x4] sm:$0xf]
        %v2543 = vld [vmem:[%s2540 + $0x8] sm:$0xf]
        %v2544 = vld [vmem:[%s2540 + $0xc] sm:$0xf]
        %v2545 = vld [vmem:[%s2540 + $0x10] sm:$0xf]
        %v2546 = vld [vmem:[%s2540 + $0x14] sm:$0xf]
        %v2547 = vld [vmem:[%s2540 + $0x18] sm:$0xf]
        %v2548 = vld [vmem:[%s2540 + $0x1c] sm:$0xf]
        %v2549 = vld [vmem:[%s2540 + $0x20] sm:$0xf]
        %v2550 = vld [vmem:[%s2540 + $0x24] sm:$0xf]
        %v2551 = vld [vmem:[%s2540 + $0x28] sm:$0xf]
        %v2552 = vld [vmem:[%s2540 + $0x2c] sm:$0xf]
        %v2553 = vld [vmem:[%s2540 + $0x30] sm:$0xf]
        %v2554 = vld [vmem:[%s2540 + $0x34] sm:$0xf]
        %v2555 = vld [vmem:[%s2540 + $0x38] sm:$0xf]
        %v2556 = vld [vmem:[%s2540 + $0x3c] sm:$0xf]
        %v2557 = vrot.slane %v1893, 3
        %v2575 = vunpack.c.l.b16 %v2541
        %v2576 = vunpack.c.l.b16 %v2542
        %v2577 = vunpack.c.l.b16 %v2543
        %v2578 = vunpack.c.l.b16 %v2544
        %v2579 = vunpack.c.l.b16 %v2545
        %v2580 = vunpack.c.l.b16 %v2546
        %v2581 = vunpack.c.l.b16 %v2547
        %v2582 = vunpack.c.l.b16 %v2548
        %v2583 = vunpack.c.l.b16 %v2549
        %v2584 = vunpack.c.l.b16 %v2550
        %v2585 = vunpack.c.l.b16 %v2551
        %v2586 = vunpack.c.l.b16 %v2552
        %v2587 = vunpack.c.l.b16 %v2553
        %v2588 = vunpack.c.l.b16 %v2554
        %v2589 = vunpack.c.l.b16 %v2555
        %v2590 = vunpack.c.l.b16 %v2556
        %v2591 = vpack.c.b16 %v2576, %v2575
        %v2592 = vpack.c.b16 %v2578, %v2577
        %v2593 = vpack.c.b16 %v2580, %v2579
        %v2594 = vpack.c.b16 %v2582, %v2581
        %v2595 = vpack.c.b16 %v2584, %v2583
        %v2596 = vpack.c.b16 %v2586, %v2585
        %v2597 = vpack.c.b16 %v2588, %v2587
        %v2598 = vpack.c.b16 %v2590, %v2589
        %2607 = vmatprep.subr.bf16.mxu0 0
        %2608 = vmatpush1.bf16.msra.mxu0 %v2591
        %2609 = vmatprep.subr.bf16.mxu0 0
        %2610 = vmatpush1.bf16.msra.mxu0 %v2592
        %2611 = vmatprep.subr.bf16.mxu0 0
        %2612 = vmatpush1.bf16.msra.mxu0 %v2593
        %2613 = vmatprep.subr.bf16.mxu0 0
        %2614 = vmatpush1.bf16.msra.mxu0 %v2594
        %2615 = vmatprep.subr.bf16.mxu0 0
        %2616 = vmatpush1.bf16.msra.mxu0 %v2595
        %2617 = vmatprep.subr.bf16.mxu0 0
        %2618 = vmatpush1.bf16.msra.mxu0 %v2596
        %2619 = vmatprep.subr.bf16.mxu0 0
        %2620 = vmatpush1.bf16.msra.mxu0 %v2597
        %2621 = vmatprep.subr.bf16.mxu0 0
        %2622 = vmatpush1.bf16.msra.mxu0 %v2598
        %2623 = vmatprep.subr.bf16.mxu0 0
        %2624 = vmatpush1.bf16.msra.mxu0 0
        %2625 = vmatprep.subr.bf16.mxu0 0
        %2626 = vmatpush1.bf16.msra.mxu0 0
        %2627 = vmatprep.subr.bf16.mxu0 0
        %2628 = vmatpush1.bf16.msra.mxu0 0
        %2629 = vmatprep.subr.bf16.mxu0 0
        %2630 = vmatpush1.bf16.msra.mxu0 0
        %2631 = vmatprep.subr.bf16.mxu0 0
        %2632 = vmatpush1.bf16.msra.mxu0 0
        %2633 = vmatprep.subr.bf16.mxu0 0
        %2634 = vmatpush1.bf16.msra.mxu0 0
        %2635 = vmatprep.subr.bf16.mxu0 0
        %2636 = vmatpush1.bf16.msra.mxu0 0
        %2637 = vmatprep.subr.bf16.mxu0 0
        %2638 = vmatpush1.bf16.msra.mxu0 0
        %2639 = vmatprep.mubr.bf16.mxu0 0
        %2640 = vmatmul.mubr.bf16.gmra.mrb[0].mxu0 %v2557
        %v2641 = vpop.f32.mrb[0].mxu0
        %v2642 = vadd.f32 0.0, %v2641
        %v2643 = vpop.f32.mrb[0].mxu0
        %v2644 = vpop.f32.mrb[0].mxu0
        %v2645 = vpop.f32.mrb[0].mxu0
        %2646 = vdwg.mxu0
        %v2647 = vadd.f32 %v2539, %v2642
        %s2648 = scalar_lea.vmem %s4, 448
        %v2649 = vld [vmem:[%s2648] sm:$0xf]
        %v2650 = vld [vmem:[%s2648 + $0x4] sm:$0xf]
        %v2651 = vld [vmem:[%s2648 + $0x8] sm:$0xf]
        %v2652 = vld [vmem:[%s2648 + $0xc] sm:$0xf]
        %v2653 = vld [vmem:[%s2648 + $0x10] sm:$0xf]
        %v2654 = vld [vmem:[%s2648 + $0x14] sm:$0xf]
        %v2655 = vld [vmem:[%s2648 + $0x18] sm:$0xf]
        %v2656 = vld [vmem:[%s2648 + $0x1c] sm:$0xf]
        %v2657 = vld [vmem:[%s2648 + $0x20] sm:$0xf]
        %v2658 = vld [vmem:[%s2648 + $0x24] sm:$0xf]
        %v2659 = vld [vmem:[%s2648 + $0x28] sm:$0xf]
        %v2660 = vld [vmem:[%s2648 + $0x2c] sm:$0xf]
        %v2661 = vld [vmem:[%s2648 + $0x30] sm:$0xf]
        %v2662 = vld [vmem:[%s2648 + $0x34] sm:$0xf]
        %v2663 = vld [vmem:[%s2648 + $0x38] sm:$0xf]
        %v2664 = vld [vmem:[%s2648 + $0x3c] sm:$0xf]
        %v2665 = vrot.slane %v1928, 3
        %v2683 = vunpack.c.l.b16 %v2649
        %v2684 = vunpack.c.l.b16 %v2650
        %v2685 = vunpack.c.l.b16 %v2651
        %v2686 = vunpack.c.l.b16 %v2652
        %v2687 = vunpack.c.l.b16 %v2653
        %v2688 = vunpack.c.l.b16 %v2654
        %v2689 = vunpack.c.l.b16 %v2655
        %v2690 = vunpack.c.l.b16 %v2656
        %v2691 = vunpack.c.l.b16 %v2657
        %v2692 = vunpack.c.l.b16 %v2658
        %v2693 = vunpack.c.l.b16 %v2659
        %v2694 = vunpack.c.l.b16 %v2660
        %v2695 = vunpack.c.l.b16 %v2661
        %v2696 = vunpack.c.l.b16 %v2662
        %v2697 = vunpack.c.l.b16 %v2663
        %v2698 = vunpack.c.l.b16 %v2664
        %v2699 = vpack.c.b16 %v2684, %v2683
        %v2700 = vpack.c.b16 %v2686, %v2685
        %v2701 = vpack.c.b16 %v2688, %v2687
        %v2702 = vpack.c.b16 %v2690, %v2689
        %v2703 = vpack.c.b16 %v2692, %v2691
        %v2704 = vpack.c.b16 %v2694, %v2693
        %v2705 = vpack.c.b16 %v2696, %v2695
        %v2706 = vpack.c.b16 %v2698, %v2697
        %2715 = vmatprep.subr.bf16.mxu0 0
        %2716 = vmatpush1.bf16.msra.mxu0 %v2699
        %2717 = vmatprep.subr.bf16.mxu0 0
        %2718 = vmatpush1.bf16.msra.mxu0 %v2700
        %2719 = vmatprep.subr.bf16.mxu0 0
        %2720 = vmatpush1.bf16.msra.mxu0 %v2701
        %2721 = vmatprep.subr.bf16.mxu0 0
        %2722 = vmatpush1.bf16.msra.mxu0 %v2702
        %2723 = vmatprep.subr.bf16.mxu0 0
        %2724 = vmatpush1.bf16.msra.mxu0 %v2703
        %2725 = vmatprep.subr.bf16.mxu0 0
        %2726 = vmatpush1.bf16.msra.mxu0 %v2704
        %2727 = vmatprep.subr.bf16.mxu0 0
        %2728 = vmatpush1.bf16.msra.mxu0 %v2705
        %2729 = vmatprep.subr.bf16.mxu0 0
        %2730 = vmatpush1.bf16.msra.mxu0 %v2706
        %2731 = vmatprep.subr.bf16.mxu0 0
        %2732 = vmatpush1.bf16.msra.mxu0 0
        %2733 = vmatprep.subr.bf16.mxu0 0
        %2734 = vmatpush1.bf16.msra.mxu0 0
        %2735 = vmatprep.subr.bf16.mxu0 0
        %2736 = vmatpush1.bf16.msra.mxu0 0
        %2737 = vmatprep.subr.bf16.mxu0 0
        %2738 = vmatpush1.bf16.msra.mxu0 0
        %2739 = vmatprep.subr.bf16.mxu0 0
        %2740 = vmatpush1.bf16.msra.mxu0 0
        %2741 = vmatprep.subr.bf16.mxu0 0
        %2742 = vmatpush1.bf16.msra.mxu0 0
        %2743 = vmatprep.subr.bf16.mxu0 0
        %2744 = vmatpush1.bf16.msra.mxu0 0
        %2745 = vmatprep.subr.bf16.mxu0 0
        %2746 = vmatpush1.bf16.msra.mxu0 0
        %2747 = vmatprep.mubr.bf16.mxu0 0
        %2748 = vmatmul.mubr.bf16.gmra.mrb[0].mxu0 %v2665
        %v2749 = vpop.f32.mrb[0].mxu0
        %v2750 = vadd.f32 0.0, %v2749
        %v2751 = vpop.f32.mrb[0].mxu0
        %v2752 = vpop.f32.mrb[0].mxu0
        %v2753 = vpop.f32.mrb[0].mxu0
        %2754 = vdwg.mxu0
        %v2755 = vadd.f32 %v2647, %v2750
        %v2756 = vpack.c.bf16 %v1890, %v1890
        %s2757 = scalar_lea.vmem %s4, 512
        %v2758 = vld [vmem:[%s2757] sm:$0xf]
        %v2759 = vld [vmem:[%s2757 + $0x4] sm:$0xf]
        %v2760 = vld [vmem:[%s2757 + $0x8] sm:$0xf]
        %v2761 = vld [vmem:[%s2757 + $0xc] sm:$0xf]
        %v2762 = vld [vmem:[%s2757 + $0x10] sm:$0xf]
        %v2763 = vld [vmem:[%s2757 + $0x14] sm:$0xf]
        %v2764 = vld [vmem:[%s2757 + $0x18] sm:$0xf]
        %v2765 = vld [vmem:[%s2757 + $0x1c] sm:$0xf]
        %v2766 = vld [vmem:[%s2757 + $0x20] sm:$0xf]
        %v2767 = vld [vmem:[%s2757 + $0x24] sm:$0xf]
        %v2768 = vld [vmem:[%s2757 + $0x28] sm:$0xf]
        %v2769 = vld [vmem:[%s2757 + $0x2c] sm:$0xf]
        %v2770 = vld [vmem:[%s2757 + $0x30] sm:$0xf]
        %v2771 = vld [vmem:[%s2757 + $0x34] sm:$0xf]
        %v2772 = vld [vmem:[%s2757 + $0x38] sm:$0xf]
        %v2773 = vld [vmem:[%s2757 + $0x3c] sm:$0xf]
        %v2790 = vunpack.c.l.b16 %v2758
        %v2791 = vunpack.c.l.b16 %v2759
        %v2792 = vunpack.c.l.b16 %v2760
        %v2793 = vunpack.c.l.b16 %v2761
        %v2794 = vunpack.c.l.b16 %v2762
        %v2795 = vunpack.c.l.b16 %v2763
        %v2796 = vunpack.c.l.b16 %v2764
        %v2797 = vunpack.c.l.b16 %v2765
        %v2798 = vunpack.c.l.b16 %v2766
        %v2799 = vunpack.c.l.b16 %v2767
        %v2800 = vunpack.c.l.b16 %v2768
        %v2801 = vunpack.c.l.b16 %v2769
        %v2802 = vunpack.c.l.b16 %v2770
        %v2803 = vunpack.c.l.b16 %v2771
        %v2804 = vunpack.c.l.b16 %v2772
        %v2805 = vunpack.c.l.b16 %v2773
        %v2806 = vpack.c.b16 %v2791, %v2790
        %v2807 = vpack.c.b16 %v2793, %v2792
        %v2808 = vpack.c.b16 %v2795, %v2794
        %v2809 = vpack.c.b16 %v2797, %v2796
        %v2810 = vpack.c.b16 %v2799, %v2798
        %v2811 = vpack.c.b16 %v2801, %v2800
        %v2812 = vpack.c.b16 %v2803, %v2802
        %v2813 = vpack.c.b16 %v2805, %v2804
        %2822 = vmatprep.subr.bf16.mxu0 0
        %2823 = vmatpush1.bf16.msra.mxu0 %v2806
        %2824 = vmatprep.subr.bf16.mxu0 0
        %2825 = vmatpush1.bf16.msra.mxu0 %v2807
        %2826 = vmatprep.subr.bf16.mxu0 0
        %2827 = vmatpush1.bf16.msra.mxu0 %v2808
        %2828 = vmatprep.subr.bf16.mxu0 0
        %2829 = vmatpush1.bf16.msra.mxu0 %v2809
        %2830 = vmatprep.subr.bf16.mxu0 0
        %2831 = vmatpush1.bf16.msra.mxu0 %v2810
        %2832 = vmatprep.subr.bf16.mxu0 0
        %2833 = vmatpush1.bf16.msra.mxu0 %v2811
        %2834 = vmatprep.subr.bf16.mxu0 0
        %2835 = vmatpush1.bf16.msra.mxu0 %v2812
        %2836 = vmatprep.subr.bf16.mxu0 0
        %2837 = vmatpush1.bf16.msra.mxu0 %v2813
        %2838 = vmatprep.subr.bf16.mxu0 0
        %2839 = vmatpush1.bf16.msra.mxu0 0
        %2840 = vmatprep.subr.bf16.mxu0 0
        %2841 = vmatpush1.bf16.msra.mxu0 0
        %2842 = vmatprep.subr.bf16.mxu0 0
        %2843 = vmatpush1.bf16.msra.mxu0 0
        %2844 = vmatprep.subr.bf16.mxu0 0
        %2845 = vmatpush1.bf16.msra.mxu0 0
        %2846 = vmatprep.subr.bf16.mxu0 0
        %2847 = vmatpush1.bf16.msra.mxu0 0
        %2848 = vmatprep.subr.bf16.mxu0 0
        %2849 = vmatpush1.bf16.msra.mxu0 0
        %2850 = vmatprep.subr.bf16.mxu0 0
        %2851 = vmatpush1.bf16.msra.mxu0 0
        %2852 = vmatprep.subr.bf16.mxu0 0
        %2853 = vmatpush1.bf16.msra.mxu0 0
        %2854 = vmatprep.mubr.bf16.mxu0 0
        %2855 = vmatmul.mubr.bf16.gmra.mrb[0].mxu0 %v2756
        %v2856 = vpop.f32.mrb[0].mxu0
        %v2857 = vadd.f32 0.0, %v2856
        %v2858 = vpop.f32.mrb[0].mxu0
        %v2859 = vpop.f32.mrb[0].mxu0
        %v2860 = vpop.f32.mrb[0].mxu0
        %2861 = vdwg.mxu0
        %v2862 = vadd.f32 %v2755, %v2857
        %s2863 = scalar_lea.vmem %s4, 576
        %v2864 = vld [vmem:[%s2863] sm:$0xf]
        %v2865 = vld [vmem:[%s2863 + $0x4] sm:$0xf]
        %v2866 = vld [vmem:[%s2863 + $0x8] sm:$0xf]
        %v2867 = vld [vmem:[%s2863 + $0xc] sm:$0xf]
        %v2868 = vld [vmem:[%s2863 + $0x10] sm:$0xf]
        %v2869 = vld [vmem:[%s2863 + $0x14] sm:$0xf]
        %v2870 = vld [vmem:[%s2863 + $0x18] sm:$0xf]
        %v2871 = vld [vmem:[%s2863 + $0x1c] sm:$0xf]
        %v2872 = vld [vmem:[%s2863 + $0x20] sm:$0xf]
        %v2873 = vld [vmem:[%s2863 + $0x24] sm:$0xf]
        %v2874 = vld [vmem:[%s2863 + $0x28] sm:$0xf]
        %v2875 = vld [vmem:[%s2863 + $0x2c] sm:$0xf]
        %v2876 = vld [vmem:[%s2863 + $0x30] sm:$0xf]
        %v2877 = vld [vmem:[%s2863 + $0x34] sm:$0xf]
        %v2878 = vld [vmem:[%s2863 + $0x38] sm:$0xf]
        %v2879 = vld [vmem:[%s2863 + $0x3c] sm:$0xf]
        %v2881 = vshrl.u32 %v2756, 16
        %v2900 = vunpack.c.l.b16 %v2864
        %v2901 = vunpack.c.l.b16 %v2865
        %v2902 = vunpack.c.l.b16 %v2866
        %v2903 = vunpack.c.l.b16 %v2867
        %v2904 = vunpack.c.l.b16 %v2868
        %v2905 = vunpack.c.l.b16 %v2869
        %v2906 = vunpack.c.l.b16 %v2870
        %v2907 = vunpack.c.l.b16 %v2871
        %v2908 = vunpack.c.l.b16 %v2872
        %v2909 = vunpack.c.l.b16 %v2873
        %v2910 = vunpack.c.l.b16 %v2874
        %v2911 = vunpack.c.l.b16 %v2875
        %v2912 = vunpack.c.l.b16 %v2876
        %v2913 = vunpack.c.l.b16 %v2877
        %v2914 = vunpack.c.l.b16 %v2878
        %v2915 = vunpack.c.l.b16 %v2879
        %v2916 = vpack.c.b16 %v2901, %v2900
        %v2917 = vpack.c.b16 %v2903, %v2902
        %v2918 = vpack.c.b16 %v2905, %v2904
        %v2919 = vpack.c.b16 %v2907, %v2906
        %v2920 = vpack.c.b16 %v2909, %v2908
        %v2921 = vpack.c.b16 %v2911, %v2910
        %v2922 = vpack.c.b16 %v2913, %v2912
        %v2923 = vpack.c.b16 %v2915, %v2914
        %2932 = vmatprep.subr.bf16.mxu0 0
        %2933 = vmatpush1.bf16.msra.mxu0 %v2916
        %2934 = vmatprep.subr.bf16.mxu0 0
        %2935 = vmatpush1.bf16.msra.mxu0 %v2917
        %2936 = vmatprep.subr.bf16.mxu0 0
        %2937 = vmatpush1.bf16.msra.mxu0 %v2918
        %2938 = vmatprep.subr.bf16.mxu0 0
        %2939 = vmatpush1.bf16.msra.mxu0 %v2919
        %2940 = vmatprep.subr.bf16.mxu0 0
        %2941 = vmatpush1.bf16.msra.mxu0 %v2920
        %2942 = vmatprep.subr.bf16.mxu0 0
        %2943 = vmatpush1.bf16.msra.mxu0 %v2921
        %2944 = vmatprep.subr.bf16.mxu0 0
        %2945 = vmatpush1.bf16.msra.mxu0 %v2922
        %2946 = vmatprep.subr.bf16.mxu0 0
        %2947 = vmatpush1.bf16.msra.mxu0 %v2923
        %2948 = vmatprep.subr.bf16.mxu0 0
        %2949 = vmatpush1.bf16.msra.mxu0 0
        %2950 = vmatprep.subr.bf16.mxu0 0
        %2951 = vmatpush1.bf16.msra.mxu0 0
        %2952 = vmatprep.subr.bf16.mxu0 0
        %2953 = vmatpush1.bf16.msra.mxu0 0
        %2954 = vmatprep.subr.bf16.mxu0 0
        %2955 = vmatpush1.bf16.msra.mxu0 0
        %2956 = vmatprep.subr.bf16.mxu0 0
        %2957 = vmatpush1.bf16.msra.mxu0 0
        %2958 = vmatprep.subr.bf16.mxu0 0
        %2959 = vmatpush1.bf16.msra.mxu0 0
        %2960 = vmatprep.subr.bf16.mxu0 0
        %2961 = vmatpush1.bf16.msra.mxu0 0
        %2962 = vmatprep.subr.bf16.mxu0 0
        %2963 = vmatpush1.bf16.msra.mxu0 0
        %2964 = vmatprep.mubr.bf16.mxu0 0
        %2965 = vmatmul.mubr.bf16.gmra.mrb[0].mxu0 %v2881
        %v2966 = vpop.f32.mrb[0].mxu0
        %v2967 = vadd.f32 0.0, %v2966
        %v2968 = vpop.f32.mrb[0].mxu0
        %v2969 = vpop.f32.mrb[0].mxu0
        %v2970 = vpop.f32.mrb[0].mxu0
        %2971 = vdwg.mxu0
        %v2972 = vadd.f32 %v2862, %v2967
        %s2973 = scalar_lea.vmem %s4, 640
        %v2974 = vld [vmem:[%s2973] sm:$0xf]
        %v2975 = vld [vmem:[%s2973 + $0x4] sm:$0xf]
        %v2976 = vld [vmem:[%s2973 + $0x8] sm:$0xf]
        %v2977 = vld [vmem:[%s2973 + $0xc] sm:$0xf]
        %v2978 = vld [vmem:[%s2973 + $0x10] sm:$0xf]
        %v2979 = vld [vmem:[%s2973 + $0x14] sm:$0xf]
        %v2980 = vld [vmem:[%s2973 + $0x18] sm:$0xf]
        %v2981 = vld [vmem:[%s2973 + $0x1c] sm:$0xf]
        %v2982 = vld [vmem:[%s2973 + $0x20] sm:$0xf]
        %v2983 = vld [vmem:[%s2973 + $0x24] sm:$0xf]
        %v2984 = vld [vmem:[%s2973 + $0x28] sm:$0xf]
        %v2985 = vld [vmem:[%s2973 + $0x2c] sm:$0xf]
        %v2986 = vld [vmem:[%s2973 + $0x30] sm:$0xf]
        %v2987 = vld [vmem:[%s2973 + $0x34] sm:$0xf]
        %v2988 = vld [vmem:[%s2973 + $0x38] sm:$0xf]
        %v2989 = vld [vmem:[%s2973 + $0x3c] sm:$0xf]
        %v2991 = vrot.slane %v2756, 1
        %v3009 = vunpack.c.l.b16 %v2974
        %v3010 = vunpack.c.l.b16 %v2975
        %v3011 = vunpack.c.l.b16 %v2976
        %v3012 = vunpack.c.l.b16 %v2977
        %v3013 = vunpack.c.l.b16 %v2978
        %v3014 = vunpack.c.l.b16 %v2979
        %v3015 = vunpack.c.l.b16 %v2980
        %v3016 = vunpack.c.l.b16 %v2981
        %v3017 = vunpack.c.l.b16 %v2982
        %v3018 = vunpack.c.l.b16 %v2983
        %v3019 = vunpack.c.l.b16 %v2984
        %v3020 = vunpack.c.l.b16 %v2985
        %v3021 = vunpack.c.l.b16 %v2986
        %v3022 = vunpack.c.l.b16 %v2987
        %v3023 = vunpack.c.l.b16 %v2988
        %v3024 = vunpack.c.l.b16 %v2989
        %v3025 = vpack.c.b16 %v3010, %v3009
        %v3026 = vpack.c.b16 %v3012, %v3011
        %v3027 = vpack.c.b16 %v3014, %v3013
        %v3028 = vpack.c.b16 %v3016, %v3015
        %v3029 = vpack.c.b16 %v3018, %v3017
        %v3030 = vpack.c.b16 %v3020, %v3019
        %v3031 = vpack.c.b16 %v3022, %v3021
        %v3032 = vpack.c.b16 %v3024, %v3023
        %3041 = vmatprep.subr.bf16.mxu0 0
        %3042 = vmatpush1.bf16.msra.mxu0 %v3025
        %3043 = vmatprep.subr.bf16.mxu0 0
        %3044 = vmatpush1.bf16.msra.mxu0 %v3026
        %3045 = vmatprep.subr.bf16.mxu0 0
        %3046 = vmatpush1.bf16.msra.mxu0 %v3027
        %3047 = vmatprep.subr.bf16.mxu0 0
        %3048 = vmatpush1.bf16.msra.mxu0 %v3028
        %3049 = vmatprep.subr.bf16.mxu0 0
        %3050 = vmatpush1.bf16.msra.mxu0 %v3029
        %3051 = vmatprep.subr.bf16.mxu0 0
        %3052 = vmatpush1.bf16.msra.mxu0 %v3030
        %3053 = vmatprep.subr.bf16.mxu0 0
        %3054 = vmatpush1.bf16.msra.mxu0 %v3031
        %3055 = vmatprep.subr.bf16.mxu0 0
        %3056 = vmatpush1.bf16.msra.mxu0 %v3032
        %3057 = vmatprep.subr.bf16.mxu0 0
        %3058 = vmatpush1.bf16.msra.mxu0 0
        %3059 = vmatprep.subr.bf16.mxu0 0
        %3060 = vmatpush1.bf16.msra.mxu0 0
        %3061 = vmatprep.subr.bf16.mxu0 0
        %3062 = vmatpush1.bf16.msra.mxu0 0
        %3063 = vmatprep.subr.bf16.mxu0 0
        %3064 = vmatpush1.bf16.msra.mxu0 0
        %3065 = vmatprep.subr.bf16.mxu0 0
        %3066 = vmatpush1.bf16.msra.mxu0 0
        %3067 = vmatprep.subr.bf16.mxu0 0
        %3068 = vmatpush1.bf16.msra.mxu0 0
        %3069 = vmatprep.subr.bf16.mxu0 0
        %3070 = vmatpush1.bf16.msra.mxu0 0
        %3071 = vmatprep.subr.bf16.mxu0 0
        %3072 = vmatpush1.bf16.msra.mxu0 0
        %3073 = vmatprep.mubr.bf16.mxu0 0
        %3074 = vmatmul.mubr.bf16.gmra.mrb[0].mxu0 %v2991
        %v3075 = vpop.f32.mrb[0].mxu0
        %v3076 = vadd.f32 0.0, %v3075
        %v3077 = vpop.f32.mrb[0].mxu0
        %v3078 = vpop.f32.mrb[0].mxu0
        %v3079 = vpop.f32.mrb[0].mxu0
        %3080 = vdwg.mxu0
        %v3081 = vadd.f32 %v2972, %v3076
        %s3082 = scalar_lea.vmem %s4, 704
        %v3083 = vld [vmem:[%s3082] sm:$0xf]
        %v3084 = vld [vmem:[%s3082 + $0x4] sm:$0xf]
        %v3085 = vld [vmem:[%s3082 + $0x8] sm:$0xf]
        %v3086 = vld [vmem:[%s3082 + $0xc] sm:$0xf]
        %v3087 = vld [vmem:[%s3082 + $0x10] sm:$0xf]
        %v3088 = vld [vmem:[%s3082 + $0x14] sm:$0xf]
        %v3089 = vld [vmem:[%s3082 + $0x18] sm:$0xf]
        %v3090 = vld [vmem:[%s3082 + $0x1c] sm:$0xf]
        %v3091 = vld [vmem:[%s3082 + $0x20] sm:$0xf]
        %v3092 = vld [vmem:[%s3082 + $0x24] sm:$0xf]
        %v3093 = vld [vmem:[%s3082 + $0x28] sm:$0xf]
        %v3094 = vld [vmem:[%s3082 + $0x2c] sm:$0xf]
        %v3095 = vld [vmem:[%s3082 + $0x30] sm:$0xf]
        %v3096 = vld [vmem:[%s3082 + $0x34] sm:$0xf]
        %v3097 = vld [vmem:[%s3082 + $0x38] sm:$0xf]
        %v3098 = vld [vmem:[%s3082 + $0x3c] sm:$0xf]
        %v3099 = vrot.slane %v2881, 1
        %v3117 = vunpack.c.l.b16 %v3083
        %v3118 = vunpack.c.l.b16 %v3084
        %v3119 = vunpack.c.l.b16 %v3085
        %v3120 = vunpack.c.l.b16 %v3086
        %v3121 = vunpack.c.l.b16 %v3087
        %v3122 = vunpack.c.l.b16 %v3088
        %v3123 = vunpack.c.l.b16 %v3089
        %v3124 = vunpack.c.l.b16 %v3090
        %v3125 = vunpack.c.l.b16 %v3091
        %v3126 = vunpack.c.l.b16 %v3092
        %v3127 = vunpack.c.l.b16 %v3093
        %v3128 = vunpack.c.l.b16 %v3094
        %v3129 = vunpack.c.l.b16 %v3095
        %v3130 = vunpack.c.l.b16 %v3096
        %v3131 = vunpack.c.l.b16 %v3097
        %v3132 = vunpack.c.l.b16 %v3098
        %v3133 = vpack.c.b16 %v3118, %v3117
        %v3134 = vpack.c.b16 %v3120, %v3119
        %v3135 = vpack.c.b16 %v3122, %v3121
        %v3136 = vpack.c.b16 %v3124, %v3123
        %v3137 = vpack.c.b16 %v3126, %v3125
        %v3138 = vpack.c.b16 %v3128, %v3127
        %v3139 = vpack.c.b16 %v3130, %v3129
        %v3140 = vpack.c.b16 %v3132, %v3131
        %3149 = vmatprep.subr.bf16.mxu0 0
        %3150 = vmatpush1.bf16.msra.mxu0 %v3133
        %3151 = vmatprep.subr.bf16.mxu0 0
        %3152 = vmatpush1.bf16.msra.mxu0 %v3134
        %3153 = vmatprep.subr.bf16.mxu0 0
        %3154 = vmatpush1.bf16.msra.mxu0 %v3135
        %3155 = vmatprep.subr.bf16.mxu0 0
        %3156 = vmatpush1.bf16.msra.mxu0 %v3136
        %3157 = vmatprep.subr.bf16.mxu0 0
        %3158 = vmatpush1.bf16.msra.mxu0 %v3137
        %3159 = vmatprep.subr.bf16.mxu0 0
        %3160 = vmatpush1.bf16.msra.mxu0 %v3138
        %3161 = vmatprep.subr.bf16.mxu0 0
        %3162 = vmatpush1.bf16.msra.mxu0 %v3139
        %3163 = vmatprep.subr.bf16.mxu0 0
        %3164 = vmatpush1.bf16.msra.mxu0 %v3140
        %3165 = vmatprep.subr.bf16.mxu0 0
        %3166 = vmatpush1.bf16.msra.mxu0 0
        %3167 = vmatprep.subr.bf16.mxu0 0
        %3168 = vmatpush1.bf16.msra.mxu0 0
        %3169 = vmatprep.subr.bf16.mxu0 0
        %3170 = vmatpush1.bf16.msra.mxu0 0
        %3171 = vmatprep.subr.bf16.mxu0 0
        %3172 = vmatpush1.bf16.msra.mxu0 0
        %3173 = vmatprep.subr.bf16.mxu0 0
        %3174 = vmatpush1.bf16.msra.mxu0 0
        %3175 = vmatprep.subr.bf16.mxu0 0
        %3176 = vmatpush1.bf16.msra.mxu0 0
        %3177 = vmatprep.subr.bf16.mxu0 0
        %3178 = vmatpush1.bf16.msra.mxu0 0
        %3179 = vmatprep.subr.bf16.mxu0 0
        %3180 = vmatpush1.bf16.msra.mxu0 0
        %3181 = vmatprep.mubr.bf16.mxu0 0
        %3182 = vmatmul.mubr.bf16.gmra.mrb[0].mxu0 %v3099
        %v3183 = vpop.f32.mrb[0].mxu0
        %v3184 = vadd.f32 0.0, %v3183
        %v3185 = vpop.f32.mrb[0].mxu0
        %v3186 = vpop.f32.mrb[0].mxu0
        %v3187 = vpop.f32.mrb[0].mxu0
        %3188 = vdwg.mxu0
        %v3189 = vadd.f32 %v3081, %v3184
        %s3190 = scalar_lea.vmem %s4, 768
        %v3191 = vld [vmem:[%s3190] sm:$0xf]
        %v3192 = vld [vmem:[%s3190 + $0x4] sm:$0xf]
        %v3193 = vld [vmem:[%s3190 + $0x8] sm:$0xf]
        %v3194 = vld [vmem:[%s3190 + $0xc] sm:$0xf]
        %v3195 = vld [vmem:[%s3190 + $0x10] sm:$0xf]
        %v3196 = vld [vmem:[%s3190 + $0x14] sm:$0xf]
        %v3197 = vld [vmem:[%s3190 + $0x18] sm:$0xf]
        %v3198 = vld [vmem:[%s3190 + $0x1c] sm:$0xf]
        %v3199 = vld [vmem:[%s3190 + $0x20] sm:$0xf]
        %v3200 = vld [vmem:[%s3190 + $0x24] sm:$0xf]
        %v3201 = vld [vmem:[%s3190 + $0x28] sm:$0xf]
        %v3202 = vld [vmem:[%s3190 + $0x2c] sm:$0xf]
        %v3203 = vld [vmem:[%s3190 + $0x30] sm:$0xf]
        %v3204 = vld [vmem:[%s3190 + $0x34] sm:$0xf]
        %v3205 = vld [vmem:[%s3190 + $0x38] sm:$0xf]
        %v3206 = vld [vmem:[%s3190 + $0x3c] sm:$0xf]
        %v3207 = vrot.slane %v2756, 2
        %v3225 = vunpack.c.l.b16 %v3191
        %v3226 = vunpack.c.l.b16 %v3192
        %v3227 = vunpack.c.l.b16 %v3193
        %v3228 = vunpack.c.l.b16 %v3194
        %v3229 = vunpack.c.l.b16 %v3195
        %v3230 = vunpack.c.l.b16 %v3196
        %v3231 = vunpack.c.l.b16 %v3197
        %v3232 = vunpack.c.l.b16 %v3198
        %v3233 = vunpack.c.l.b16 %v3199
        %v3234 = vunpack.c.l.b16 %v3200
        %v3235 = vunpack.c.l.b16 %v3201
        %v3236 = vunpack.c.l.b16 %v3202
        %v3237 = vunpack.c.l.b16 %v3203
        %v3238 = vunpack.c.l.b16 %v3204
        %v3239 = vunpack.c.l.b16 %v3205
        %v3240 = vunpack.c.l.b16 %v3206
        %v3241 = vpack.c.b16 %v3226, %v3225
        %v3242 = vpack.c.b16 %v3228, %v3227
        %v3243 = vpack.c.b16 %v3230, %v3229
        %v3244 = vpack.c.b16 %v3232, %v3231
        %v3245 = vpack.c.b16 %v3234, %v3233
        %v3246 = vpack.c.b16 %v3236, %v3235
        %v3247 = vpack.c.b16 %v3238, %v3237
        %v3248 = vpack.c.b16 %v3240, %v3239
        %3257 = vmatprep.subr.bf16.mxu0 0
        %3258 = vmatpush1.bf16.msra.mxu0 %v3241
        %3259 = vmatprep.subr.bf16.mxu0 0
        %3260 = vmatpush1.bf16.msra.mxu0 %v3242
        %3261 = vmatprep.subr.bf16.mxu0 0
        %3262 = vmatpush1.bf16.msra.mxu0 %v3243
        %3263 = vmatprep.subr.bf16.mxu0 0
        %3264 = vmatpush1.bf16.msra.mxu0 %v3244
        %3265 = vmatprep.subr.bf16.mxu0 0
        %3266 = vmatpush1.bf16.msra.mxu0 %v3245
        %3267 = vmatprep.subr.bf16.mxu0 0
        %3268 = vmatpush1.bf16.msra.mxu0 %v3246
        %3269 = vmatprep.subr.bf16.mxu0 0
        %3270 = vmatpush1.bf16.msra.mxu0 %v3247
        %3271 = vmatprep.subr.bf16.mxu0 0
        %3272 = vmatpush1.bf16.msra.mxu0 %v3248
        %3273 = vmatprep.subr.bf16.mxu0 0
        %3274 = vmatpush1.bf16.msra.mxu0 0
        %3275 = vmatprep.subr.bf16.mxu0 0
        %3276 = vmatpush1.bf16.msra.mxu0 0
        %3277 = vmatprep.subr.bf16.mxu0 0
        %3278 = vmatpush1.bf16.msra.mxu0 0
        %3279 = vmatprep.subr.bf16.mxu0 0
        %3280 = vmatpush1.bf16.msra.mxu0 0
        %3281 = vmatprep.subr.bf16.mxu0 0
        %3282 = vmatpush1.bf16.msra.mxu0 0
        %3283 = vmatprep.subr.bf16.mxu0 0
        %3284 = vmatpush1.bf16.msra.mxu0 0
        %3285 = vmatprep.subr.bf16.mxu0 0
        %3286 = vmatpush1.bf16.msra.mxu0 0
        %3287 = vmatprep.subr.bf16.mxu0 0
        %3288 = vmatpush1.bf16.msra.mxu0 0
        %3289 = vmatprep.mubr.bf16.mxu0 0
        %3290 = vmatmul.mubr.bf16.gmra.mrb[0].mxu0 %v3207
        %v3291 = vpop.f32.mrb[0].mxu0
        %v3292 = vadd.f32 0.0, %v3291
        %v3293 = vpop.f32.mrb[0].mxu0
        %v3294 = vpop.f32.mrb[0].mxu0
        %v3295 = vpop.f32.mrb[0].mxu0
        %3296 = vdwg.mxu0
        %v3297 = vadd.f32 %v3189, %v3292
        %s3298 = scalar_lea.vmem %s4, 832
        %v3299 = vld [vmem:[%s3298] sm:$0xf]
        %v3300 = vld [vmem:[%s3298 + $0x4] sm:$0xf]
        %v3301 = vld [vmem:[%s3298 + $0x8] sm:$0xf]
        %v3302 = vld [vmem:[%s3298 + $0xc] sm:$0xf]
        %v3303 = vld [vmem:[%s3298 + $0x10] sm:$0xf]
        %v3304 = vld [vmem:[%s3298 + $0x14] sm:$0xf]
        %v3305 = vld [vmem:[%s3298 + $0x18] sm:$0xf]
        %v3306 = vld [vmem:[%s3298 + $0x1c] sm:$0xf]
        %v3307 = vld [vmem:[%s3298 + $0x20] sm:$0xf]
        %v3308 = vld [vmem:[%s3298 + $0x24] sm:$0xf]
        %v3309 = vld [vmem:[%s3298 + $0x28] sm:$0xf]
        %v3310 = vld [vmem:[%s3298 + $0x2c] sm:$0xf]
        %v3311 = vld [vmem:[%s3298 + $0x30] sm:$0xf]
        %v3312 = vld [vmem:[%s3298 + $0x34] sm:$0xf]
        %v3313 = vld [vmem:[%s3298 + $0x38] sm:$0xf]
        %v3314 = vld [vmem:[%s3298 + $0x3c] sm:$0xf]
        %v3315 = vrot.slane %v2881, 2
        %v3333 = vunpack.c.l.b16 %v3299
        %v3334 = vunpack.c.l.b16 %v3300
        %v3335 = vunpack.c.l.b16 %v3301
        %v3336 = vunpack.c.l.b16 %v3302
        %v3337 = vunpack.c.l.b16 %v3303
        %v3338 = vunpack.c.l.b16 %v3304
        %v3339 = vunpack.c.l.b16 %v3305
        %v3340 = vunpack.c.l.b16 %v3306
        %v3341 = vunpack.c.l.b16 %v3307
        %v3342 = vunpack.c.l.b16 %v3308
        %v3343 = vunpack.c.l.b16 %v3309
        %v3344 = vunpack.c.l.b16 %v3310
        %v3345 = vunpack.c.l.b16 %v3311
        %v3346 = vunpack.c.l.b16 %v3312
        %v3347 = vunpack.c.l.b16 %v3313
        %v3348 = vunpack.c.l.b16 %v3314
        %v3349 = vpack.c.b16 %v3334, %v3333
        %v3350 = vpack.c.b16 %v3336, %v3335
        %v3351 = vpack.c.b16 %v3338, %v3337
        %v3352 = vpack.c.b16 %v3340, %v3339
        %v3353 = vpack.c.b16 %v3342, %v3341
        %v3354 = vpack.c.b16 %v3344, %v3343
        %v3355 = vpack.c.b16 %v3346, %v3345
        %v3356 = vpack.c.b16 %v3348, %v3347
        %3365 = vmatprep.subr.bf16.mxu0 0
        %3366 = vmatpush1.bf16.msra.mxu0 %v3349
        %3367 = vmatprep.subr.bf16.mxu0 0
        %3368 = vmatpush1.bf16.msra.mxu0 %v3350
        %3369 = vmatprep.subr.bf16.mxu0 0
        %3370 = vmatpush1.bf16.msra.mxu0 %v3351
        %3371 = vmatprep.subr.bf16.mxu0 0
        %3372 = vmatpush1.bf16.msra.mxu0 %v3352
        %3373 = vmatprep.subr.bf16.mxu0 0
        %3374 = vmatpush1.bf16.msra.mxu0 %v3353
        %3375 = vmatprep.subr.bf16.mxu0 0
        %3376 = vmatpush1.bf16.msra.mxu0 %v3354
        %3377 = vmatprep.subr.bf16.mxu0 0
        %3378 = vmatpush1.bf16.msra.mxu0 %v3355
        %3379 = vmatprep.subr.bf16.mxu0 0
        %3380 = vmatpush1.bf16.msra.mxu0 %v3356
        %3381 = vmatprep.subr.bf16.mxu0 0
        %3382 = vmatpush1.bf16.msra.mxu0 0
        %3383 = vmatprep.subr.bf16.mxu0 0
        %3384 = vmatpush1.bf16.msra.mxu0 0
        %3385 = vmatprep.subr.bf16.mxu0 0
        %3386 = vmatpush1.bf16.msra.mxu0 0
        %3387 = vmatprep.subr.bf16.mxu0 0
        %3388 = vmatpush1.bf16.msra.mxu0 0
        %3389 = vmatprep.subr.bf16.mxu0 0
        %3390 = vmatpush1.bf16.msra.mxu0 0
        %3391 = vmatprep.subr.bf16.mxu0 0
        %3392 = vmatpush1.bf16.msra.mxu0 0
        %3393 = vmatprep.subr.bf16.mxu0 0
        %3394 = vmatpush1.bf16.msra.mxu0 0
        %3395 = vmatprep.subr.bf16.mxu0 0
        %3396 = vmatpush1.bf16.msra.mxu0 0
        %3397 = vmatprep.mubr.bf16.mxu0 0
        %3398 = vmatmul.mubr.bf16.gmra.mrb[0].mxu0 %v3315
        %v3399 = vpop.f32.mrb[0].mxu0
        %v3400 = vadd.f32 0.0, %v3399
        %v3401 = vpop.f32.mrb[0].mxu0
        %v3402 = vpop.f32.mrb[0].mxu0
        %v3403 = vpop.f32.mrb[0].mxu0
        %3404 = vdwg.mxu0
        %v3405 = vadd.f32 %v3297, %v3400
        %s3406 = scalar_lea.vmem %s4, 896
        %v3407 = vld [vmem:[%s3406] sm:$0xf]
        %v3408 = vld [vmem:[%s3406 + $0x4] sm:$0xf]
        %v3409 = vld [vmem:[%s3406 + $0x8] sm:$0xf]
        %v3410 = vld [vmem:[%s3406 + $0xc] sm:$0xf]
        %v3411 = vld [vmem:[%s3406 + $0x10] sm:$0xf]
        %v3412 = vld [vmem:[%s3406 + $0x14] sm:$0xf]
        %v3413 = vld [vmem:[%s3406 + $0x18] sm:$0xf]
        %v3414 = vld [vmem:[%s3406 + $0x1c] sm:$0xf]
        %v3415 = vld [vmem:[%s3406 + $0x20] sm:$0xf]
        %v3416 = vld [vmem:[%s3406 + $0x24] sm:$0xf]
        %v3417 = vld [vmem:[%s3406 + $0x28] sm:$0xf]
        %v3418 = vld [vmem:[%s3406 + $0x2c] sm:$0xf]
        %v3419 = vld [vmem:[%s3406 + $0x30] sm:$0xf]
        %v3420 = vld [vmem:[%s3406 + $0x34] sm:$0xf]
        %v3421 = vld [vmem:[%s3406 + $0x38] sm:$0xf]
        %v3422 = vld [vmem:[%s3406 + $0x3c] sm:$0xf]
        %v3423 = vrot.slane %v2756, 3
        %v3441 = vunpack.c.l.b16 %v3407
        %v3442 = vunpack.c.l.b16 %v3408
        %v3443 = vunpack.c.l.b16 %v3409
        %v3444 = vunpack.c.l.b16 %v3410
        %v3445 = vunpack.c.l.b16 %v3411
        %v3446 = vunpack.c.l.b16 %v3412
        %v3447 = vunpack.c.l.b16 %v3413
        %v3448 = vunpack.c.l.b16 %v3414
        %v3449 = vunpack.c.l.b16 %v3415
        %v3450 = vunpack.c.l.b16 %v3416
        %v3451 = vunpack.c.l.b16 %v3417
        %v3452 = vunpack.c.l.b16 %v3418
        %v3453 = vunpack.c.l.b16 %v3419
        %v3454 = vunpack.c.l.b16 %v3420
        %v3455 = vunpack.c.l.b16 %v3421
        %v3456 = vunpack.c.l.b16 %v3422
        %v3457 = vpack.c.b16 %v3442, %v3441
        %v3458 = vpack.c.b16 %v3444, %v3443
        %v3459 = vpack.c.b16 %v3446, %v3445
        %v3460 = vpack.c.b16 %v3448, %v3447
        %v3461 = vpack.c.b16 %v3450, %v3449
        %v3462 = vpack.c.b16 %v3452, %v3451
        %v3463 = vpack.c.b16 %v3454, %v3453
        %v3464 = vpack.c.b16 %v3456, %v3455
        %3473 = vmatprep.subr.bf16.mxu0 0
        %3474 = vmatpush1.bf16.msra.mxu0 %v3457
        %3475 = vmatprep.subr.bf16.mxu0 0
        %3476 = vmatpush1.bf16.msra.mxu0 %v3458
        %3477 = vmatprep.subr.bf16.mxu0 0
        %3478 = vmatpush1.bf16.msra.mxu0 %v3459
        %3479 = vmatprep.subr.bf16.mxu0 0
        %3480 = vmatpush1.bf16.msra.mxu0 %v3460
        %3481 = vmatprep.subr.bf16.mxu0 0
        %3482 = vmatpush1.bf16.msra.mxu0 %v3461
        %3483 = vmatprep.subr.bf16.mxu0 0
        %3484 = vmatpush1.bf16.msra.mxu0 %v3462
        %3485 = vmatprep.subr.bf16.mxu0 0
        %3486 = vmatpush1.bf16.msra.mxu0 %v3463
        %3487 = vmatprep.subr.bf16.mxu0 0
        %3488 = vmatpush1.bf16.msra.mxu0 %v3464
        %3489 = vmatprep.subr.bf16.mxu0 0
        %3490 = vmatpush1.bf16.msra.mxu0 0
        %3491 = vmatprep.subr.bf16.mxu0 0
        %3492 = vmatpush1.bf16.msra.mxu0 0
        %3493 = vmatprep.subr.bf16.mxu0 0
        %3494 = vmatpush1.bf16.msra.mxu0 0
        %3495 = vmatprep.subr.bf16.mxu0 0
        %3496 = vmatpush1.bf16.msra.mxu0 0
        %3497 = vmatprep.subr.bf16.mxu0 0
        %3498 = vmatpush1.bf16.msra.mxu0 0
        %3499 = vmatprep.subr.bf16.mxu0 0
        %3500 = vmatpush1.bf16.msra.mxu0 0
        %3501 = vmatprep.subr.bf16.mxu0 0
        %3502 = vmatpush1.bf16.msra.mxu0 0
        %3503 = vmatprep.subr.bf16.mxu0 0
        %3504 = vmatpush1.bf16.msra.mxu0 0
        %3505 = vmatprep.mubr.bf16.mxu0 0
        %3506 = vmatmul.mubr.bf16.gmra.mrb[0].mxu0 %v3423
        %v3507 = vpop.f32.mrb[0].mxu0
        %v3508 = vadd.f32 0.0, %v3507
        %v3509 = vpop.f32.mrb[0].mxu0
        %v3510 = vpop.f32.mrb[0].mxu0
        %v3511 = vpop.f32.mrb[0].mxu0
        %3512 = vdwg.mxu0
        %v3513 = vadd.f32 %v3405, %v3508
        %s3514 = scalar_lea.vmem %s4, 960
        %v3515 = vld [vmem:[%s3514] sm:$0xf]
        %v3516 = vld [vmem:[%s3514 + $0x4] sm:$0xf]
        %v3517 = vld [vmem:[%s3514 + $0x8] sm:$0xf]
        %v3518 = vld [vmem:[%s3514 + $0xc] sm:$0xf]
        %v3519 = vld [vmem:[%s3514 + $0x10] sm:$0xf]
        %v3520 = vld [vmem:[%s3514 + $0x14] sm:$0xf]
        %v3521 = vld [vmem:[%s3514 + $0x18] sm:$0xf]
        %v3522 = vld [vmem:[%s3514 + $0x1c] sm:$0xf]
        %v3523 = vld [vmem:[%s3514 + $0x20] sm:$0xf]
        %v3524 = vld [vmem:[%s3514 + $0x24] sm:$0xf]
        %v3525 = vld [vmem:[%s3514 + $0x28] sm:$0xf]
        %v3526 = vld [vmem:[%s3514 + $0x2c] sm:$0xf]
        %v3527 = vld [vmem:[%s3514 + $0x30] sm:$0xf]
        %v3528 = vld [vmem:[%s3514 + $0x34] sm:$0xf]
        %v3529 = vld [vmem:[%s3514 + $0x38] sm:$0xf]
        %v3530 = vld [vmem:[%s3514 + $0x3c] sm:$0xf]
        %v3531 = vrot.slane %v2881, 3
        %v3549 = vunpack.c.l.b16 %v3515
        %v3550 = vunpack.c.l.b16 %v3516
        %v3551 = vunpack.c.l.b16 %v3517
        %v3552 = vunpack.c.l.b16 %v3518
        %v3553 = vunpack.c.l.b16 %v3519
        %v3554 = vunpack.c.l.b16 %v3520
        %v3555 = vunpack.c.l.b16 %v3521
        %v3556 = vunpack.c.l.b16 %v3522
        %v3557 = vunpack.c.l.b16 %v3523
        %v3558 = vunpack.c.l.b16 %v3524
        %v3559 = vunpack.c.l.b16 %v3525
        %v3560 = vunpack.c.l.b16 %v3526
        %v3561 = vunpack.c.l.b16 %v3527
        %v3562 = vunpack.c.l.b16 %v3528
        %v3563 = vunpack.c.l.b16 %v3529
        %v3564 = vunpack.c.l.b16 %v3530
        %v3565 = vpack.c.b16 %v3550, %v3549
        %v3566 = vpack.c.b16 %v3552, %v3551
        %v3567 = vpack.c.b16 %v3554, %v3553
        %v3568 = vpack.c.b16 %v3556, %v3555
        %v3569 = vpack.c.b16 %v3558, %v3557
        %v3570 = vpack.c.b16 %v3560, %v3559
        %v3571 = vpack.c.b16 %v3562, %v3561
        %v3572 = vpack.c.b16 %v3564, %v3563
        %3581 = vmatprep.subr.bf16.mxu0 0
        %3582 = vmatpush1.bf16.msra.mxu0 %v3565
        %3583 = vmatprep.subr.bf16.mxu0 0
        %3584 = vmatpush1.bf16.msra.mxu0 %v3566
        %3585 = vmatprep.subr.bf16.mxu0 0
        %3586 = vmatpush1.bf16.msra.mxu0 %v3567
        %3587 = vmatprep.subr.bf16.mxu0 0
        %3588 = vmatpush1.bf16.msra.mxu0 %v3568
        %3589 = vmatprep.subr.bf16.mxu0 0
        %3590 = vmatpush1.bf16.msra.mxu0 %v3569
        %3591 = vmatprep.subr.bf16.mxu0 0
        %3592 = vmatpush1.bf16.msra.mxu0 %v3570
        %3593 = vmatprep.subr.bf16.mxu0 0
        %3594 = vmatpush1.bf16.msra.mxu0 %v3571
        %3595 = vmatprep.subr.bf16.mxu0 0
        %3596 = vmatpush1.bf16.msra.mxu0 %v3572
        %3597 = vmatprep.subr.bf16.mxu0 0
        %3598 = vmatpush1.bf16.msra.mxu0 0
        %3599 = vmatprep.subr.bf16.mxu0 0
        %3600 = vmatpush1.bf16.msra.mxu0 0
        %3601 = vmatprep.subr.bf16.mxu0 0
        %3602 = vmatpush1.bf16.msra.mxu0 0
        %3603 = vmatprep.subr.bf16.mxu0 0
        %3604 = vmatpush1.bf16.msra.mxu0 0
        %3605 = vmatprep.subr.bf16.mxu0 0
        %3606 = vmatpush1.bf16.msra.mxu0 0
        %3607 = vmatprep.subr.bf16.mxu0 0
        %3608 = vmatpush1.bf16.msra.mxu0 0
        %3609 = vmatprep.subr.bf16.mxu0 0
        %3610 = vmatpush1.bf16.msra.mxu0 0
        %3611 = vmatprep.subr.bf16.mxu0 0
        %3612 = vmatpush1.bf16.msra.mxu0 0
        %3613 = vmatprep.mubr.bf16.mxu0 0
        %3614 = vmatmul.mubr.bf16.gmra.mrb[0].mxu0 %v3531
        %v3615 = vpop.f32.mrb[0].mxu0
        %v3616 = vadd.f32 0.0, %v3615
        %v3617 = vpop.f32.mrb[0].mxu0
        %v3618 = vpop.f32.mrb[0].mxu0
        %v3619 = vpop.f32.mrb[0].mxu0
        %3620 = vdwg.mxu0
        %v3621 = vadd.f32 %v3513, %v3616
        %v3622 = vpack.c.bf16 %v1891, %v1891
        %s3623 = scalar_lea.vmem %s4, 1024
        %v3624 = vld [vmem:[%s3623] sm:$0xf]
        %v3625 = vld [vmem:[%s3623 + $0x4] sm:$0xf]
        %v3626 = vld [vmem:[%s3623 + $0x8] sm:$0xf]
        %v3627 = vld [vmem:[%s3623 + $0xc] sm:$0xf]
        %v3628 = vld [vmem:[%s3623 + $0x10] sm:$0xf]
        %v3629 = vld [vmem:[%s3623 + $0x14] sm:$0xf]
        %v3630 = vld [vmem:[%s3623 + $0x18] sm:$0xf]
        %v3631 = vld [vmem:[%s3623 + $0x1c] sm:$0xf]
        %v3632 = vld [vmem:[%s3623 + $0x20] sm:$0xf]
        %v3633 = vld [vmem:[%s3623 + $0x24] sm:$0xf]
        %v3634 = vld [vmem:[%s3623 + $0x28] sm:$0xf]
        %v3635 = vld [vmem:[%s3623 + $0x2c] sm:$0xf]
        %v3636 = vld [vmem:[%s3623 + $0x30] sm:$0xf]
        %v3637 = vld [vmem:[%s3623 + $0x34] sm:$0xf]
        %v3638 = vld [vmem:[%s3623 + $0x38] sm:$0xf]
        %v3639 = vld [vmem:[%s3623 + $0x3c] sm:$0xf]
        %v3656 = vunpack.c.l.b16 %v3624
        %v3657 = vunpack.c.l.b16 %v3625
        %v3658 = vunpack.c.l.b16 %v3626
        %v3659 = vunpack.c.l.b16 %v3627
        %v3660 = vunpack.c.l.b16 %v3628
        %v3661 = vunpack.c.l.b16 %v3629
        %v3662 = vunpack.c.l.b16 %v3630
        %v3663 = vunpack.c.l.b16 %v3631
        %v3664 = vunpack.c.l.b16 %v3632
        %v3665 = vunpack.c.l.b16 %v3633
        %v3666 = vunpack.c.l.b16 %v3634
        %v3667 = vunpack.c.l.b16 %v3635
        %v3668 = vunpack.c.l.b16 %v3636
        %v3669 = vunpack.c.l.b16 %v3637
        %v3670 = vunpack.c.l.b16 %v3638
        %v3671 = vunpack.c.l.b16 %v3639
        %v3672 = vpack.c.b16 %v3657, %v3656
        %v3673 = vpack.c.b16 %v3659, %v3658
        %v3674 = vpack.c.b16 %v3661, %v3660
        %v3675 = vpack.c.b16 %v3663, %v3662
        %v3676 = vpack.c.b16 %v3665, %v3664
        %v3677 = vpack.c.b16 %v3667, %v3666
        %v3678 = vpack.c.b16 %v3669, %v3668
        %v3679 = vpack.c.b16 %v3671, %v3670
        %3688 = vmatprep.subr.bf16.mxu0 0
        %3689 = vmatpush1.bf16.msra.mxu0 %v3672
        %3690 = vmatprep.subr.bf16.mxu0 0
        %3691 = vmatpush1.bf16.msra.mxu0 %v3673
        %3692 = vmatprep.subr.bf16.mxu0 0
        %3693 = vmatpush1.bf16.msra.mxu0 %v3674
        %3694 = vmatprep.subr.bf16.mxu0 0
        %3695 = vmatpush1.bf16.msra.mxu0 %v3675
        %3696 = vmatprep.subr.bf16.mxu0 0
        %3697 = vmatpush1.bf16.msra.mxu0 %v3676
        %3698 = vmatprep.subr.bf16.mxu0 0
        %3699 = vmatpush1.bf16.msra.mxu0 %v3677
        %3700 = vmatprep.subr.bf16.mxu0 0
        %3701 = vmatpush1.bf16.msra.mxu0 %v3678
        %3702 = vmatprep.subr.bf16.mxu0 0
        %3703 = vmatpush1.bf16.msra.mxu0 %v3679
        %3704 = vmatprep.subr.bf16.mxu0 0
        %3705 = vmatpush1.bf16.msra.mxu0 0
        %3706 = vmatprep.subr.bf16.mxu0 0
        %3707 = vmatpush1.bf16.msra.mxu0 0
        %3708 = vmatprep.subr.bf16.mxu0 0
        %3709 = vmatpush1.bf16.msra.mxu0 0
        %3710 = vmatprep.subr.bf16.mxu0 0
        %3711 = vmatpush1.bf16.msra.mxu0 0
        %3712 = vmatprep.subr.bf16.mxu0 0
        %3713 = vmatpush1.bf16.msra.mxu0 0
        %3714 = vmatprep.subr.bf16.mxu0 0
        %3715 = vmatpush1.bf16.msra.mxu0 0
        %3716 = vmatprep.subr.bf16.mxu0 0
        %3717 = vmatpush1.bf16.msra.mxu0 0
        %3718 = vmatprep.subr.bf16.mxu0 0
        %3719 = vmatpush1.bf16.msra.mxu0 0
        %3720 = vmatprep.mubr.bf16.mxu0 0
        %3721 = vmatmul.mubr.bf16.gmra.mrb[0].mxu0 %v3622
        %v3722 = vpop.f32.mrb[0].mxu0
        %v3723 = vadd.f32 0.0, %v3722
        %v3724 = vpop.f32.mrb[0].mxu0
        %v3725 = vpop.f32.mrb[0].mxu0
        %v3726 = vpop.f32.mrb[0].mxu0
        %3727 = vdwg.mxu0
        %v3728 = vadd.f32 %v3621, %v3723
        %s3729 = scalar_lea.vmem %s4, 1088
        %v3730 = vld [vmem:[%s3729] sm:$0xf]
        %v3731 = vld [vmem:[%s3729 + $0x4] sm:$0xf]
        %v3732 = vld [vmem:[%s3729 + $0x8] sm:$0xf]
        %v3733 = vld [vmem:[%s3729 + $0xc] sm:$0xf]
        %v3734 = vld [vmem:[%s3729 + $0x10] sm:$0xf]
        %v3735 = vld [vmem:[%s3729 + $0x14] sm:$0xf]
        %v3736 = vld [vmem:[%s3729 + $0x18] sm:$0xf]
        %v3737 = vld [vmem:[%s3729 + $0x1c] sm:$0xf]
        %v3738 = vld [vmem:[%s3729 + $0x20] sm:$0xf]
        %v3739 = vld [vmem:[%s3729 + $0x24] sm:$0xf]
        %v3740 = vld [vmem:[%s3729 + $0x28] sm:$0xf]
        %v3741 = vld [vmem:[%s3729 + $0x2c] sm:$0xf]
        %v3742 = vld [vmem:[%s3729 + $0x30] sm:$0xf]
        %v3743 = vld [vmem:[%s3729 + $0x34] sm:$0xf]
        %v3744 = vld [vmem:[%s3729 + $0x38] sm:$0xf]
        %v3745 = vld [vmem:[%s3729 + $0x3c] sm:$0xf]
        %v3747 = vshrl.u32 %v3622, 16
        %v3766 = vunpack.c.l.b16 %v3730
        %v3767 = vunpack.c.l.b16 %v3731
        %v3768 = vunpack.c.l.b16 %v3732
        %v3769 = vunpack.c.l.b16 %v3733
        %v3770 = vunpack.c.l.b16 %v3734
        %v3771 = vunpack.c.l.b16 %v3735
        %v3772 = vunpack.c.l.b16 %v3736
        %v3773 = vunpack.c.l.b16 %v3737
        %v3774 = vunpack.c.l.b16 %v3738
        %v3775 = vunpack.c.l.b16 %v3739
        %v3776 = vunpack.c.l.b16 %v3740
        %v3777 = vunpack.c.l.b16 %v3741
        %v3778 = vunpack.c.l.b16 %v3742
        %v3779 = vunpack.c.l.b16 %v3743
        %v3780 = vunpack.c.l.b16 %v3744
        %v3781 = vunpack.c.l.b16 %v3745
        %v3782 = vpack.c.b16 %v3767, %v3766
        %v3783 = vpack.c.b16 %v3769, %v3768
        %v3784 = vpack.c.b16 %v3771, %v3770
        %v3785 = vpack.c.b16 %v3773, %v3772
        %v3786 = vpack.c.b16 %v3775, %v3774
        %v3787 = vpack.c.b16 %v3777, %v3776
        %v3788 = vpack.c.b16 %v3779, %v3778
        %v3789 = vpack.c.b16 %v3781, %v3780
        %3798 = vmatprep.subr.bf16.mxu0 0
        %3799 = vmatpush1.bf16.msra.mxu0 %v3782
        %3800 = vmatprep.subr.bf16.mxu0 0
        %3801 = vmatpush1.bf16.msra.mxu0 %v3783
        %3802 = vmatprep.subr.bf16.mxu0 0
        %3803 = vmatpush1.bf16.msra.mxu0 %v3784
        %3804 = vmatprep.subr.bf16.mxu0 0
        %3805 = vmatpush1.bf16.msra.mxu0 %v3785
        %3806 = vmatprep.subr.bf16.mxu0 0
        %3807 = vmatpush1.bf16.msra.mxu0 %v3786
        %3808 = vmatprep.subr.bf16.mxu0 0
        %3809 = vmatpush1.bf16.msra.mxu0 %v3787
        %3810 = vmatprep.subr.bf16.mxu0 0
        %3811 = vmatpush1.bf16.msra.mxu0 %v3788
        %3812 = vmatprep.subr.bf16.mxu0 0
        %3813 = vmatpush1.bf16.msra.mxu0 %v3789
        %3814 = vmatprep.subr.bf16.mxu0 0
        %3815 = vmatpush1.bf16.msra.mxu0 0
        %3816 = vmatprep.subr.bf16.mxu0 0
        %3817 = vmatpush1.bf16.msra.mxu0 0
        %3818 = vmatprep.subr.bf16.mxu0 0
        %3819 = vmatpush1.bf16.msra.mxu0 0
        %3820 = vmatprep.subr.bf16.mxu0 0
        %3821 = vmatpush1.bf16.msra.mxu0 0
        %3822 = vmatprep.subr.bf16.mxu0 0
        %3823 = vmatpush1.bf16.msra.mxu0 0
        %3824 = vmatprep.subr.bf16.mxu0 0
        %3825 = vmatpush1.bf16.msra.mxu0 0
        %3826 = vmatprep.subr.bf16.mxu0 0
        %3827 = vmatpush1.bf16.msra.mxu0 0
        %3828 = vmatprep.subr.bf16.mxu0 0
        %3829 = vmatpush1.bf16.msra.mxu0 0
        %3830 = vmatprep.mubr.bf16.mxu0 0
        %3831 = vmatmul.mubr.bf16.gmra.mrb[0].mxu0 %v3747
        %v3832 = vpop.f32.mrb[0].mxu0
        %v3833 = vadd.f32 0.0, %v3832
        %v3834 = vpop.f32.mrb[0].mxu0
        %v3835 = vpop.f32.mrb[0].mxu0
        %v3836 = vpop.f32.mrb[0].mxu0
        %3837 = vdwg.mxu0
        %v3838 = vadd.f32 %v3728, %v3833
        %s3839 = scalar_lea.vmem %s4, 1152
        %v3840 = vld [vmem:[%s3839] sm:$0xf]
        %v3841 = vld [vmem:[%s3839 + $0x4] sm:$0xf]
        %v3842 = vld [vmem:[%s3839 + $0x8] sm:$0xf]
        %v3843 = vld [vmem:[%s3839 + $0xc] sm:$0xf]
        %v3844 = vld [vmem:[%s3839 + $0x10] sm:$0xf]
        %v3845 = vld [vmem:[%s3839 + $0x14] sm:$0xf]
        %v3846 = vld [vmem:[%s3839 + $0x18] sm:$0xf]
        %v3847 = vld [vmem:[%s3839 + $0x1c] sm:$0xf]
        %v3848 = vld [vmem:[%s3839 + $0x20] sm:$0xf]
        %v3849 = vld [vmem:[%s3839 + $0x24] sm:$0xf]
        %v3850 = vld [vmem:[%s3839 + $0x28] sm:$0xf]
        %v3851 = vld [vmem:[%s3839 + $0x2c] sm:$0xf]
        %v3852 = vld [vmem:[%s3839 + $0x30] sm:$0xf]
        %v3853 = vld [vmem:[%s3839 + $0x34] sm:$0xf]
        %v3854 = vld [vmem:[%s3839 + $0x38] sm:$0xf]
        %v3855 = vld [vmem:[%s3839 + $0x3c] sm:$0xf]
        %v3857 = vrot.slane %v3622, 1
        %v3875 = vunpack.c.l.b16 %v3840
        %v3876 = vunpack.c.l.b16 %v3841
        %v3877 = vunpack.c.l.b16 %v3842
        %v3878 = vunpack.c.l.b16 %v3843
        %v3879 = vunpack.c.l.b16 %v3844
        %v3880 = vunpack.c.l.b16 %v3845
        %v3881 = vunpack.c.l.b16 %v3846
        %v3882 = vunpack.c.l.b16 %v3847
        %v3883 = vunpack.c.l.b16 %v3848
        %v3884 = vunpack.c.l.b16 %v3849
        %v3885 = vunpack.c.l.b16 %v3850
        %v3886 = vunpack.c.l.b16 %v3851
        %v3887 = vunpack.c.l.b16 %v3852
        %v3888 = vunpack.c.l.b16 %v3853
        %v3889 = vunpack.c.l.b16 %v3854
        %v3890 = vunpack.c.l.b16 %v3855
        %v3891 = vpack.c.b16 %v3876, %v3875
        %v3892 = vpack.c.b16 %v3878, %v3877
        %v3893 = vpack.c.b16 %v3880, %v3879
        %v3894 = vpack.c.b16 %v3882, %v3881
        %v3895 = vpack.c.b16 %v3884, %v3883
        %v3896 = vpack.c.b16 %v3886, %v3885
        %v3897 = vpack.c.b16 %v3888, %v3887
        %v3898 = vpack.c.b16 %v3890, %v3889
        %3907 = vmatprep.subr.bf16.mxu0 0
        %3908 = vmatpush1.bf16.msra.mxu0 %v3891
        %3909 = vmatprep.subr.bf16.mxu0 0
        %3910 = vmatpush1.bf16.msra.mxu0 %v3892
        %3911 = vmatprep.subr.bf16.mxu0 0
        %3912 = vmatpush1.bf16.msra.mxu0 %v3893
        %3913 = vmatprep.subr.bf16.mxu0 0
        %3914 = vmatpush1.bf16.msra.mxu0 %v3894
        %3915 = vmatprep.subr.bf16.mxu0 0
        %3916 = vmatpush1.bf16.msra.mxu0 %v3895
        %3917 = vmatprep.subr.bf16.mxu0 0
        %3918 = vmatpush1.bf16.msra.mxu0 %v3896
        %3919 = vmatprep.subr.bf16.mxu0 0
        %3920 = vmatpush1.bf16.msra.mxu0 %v3897
        %3921 = vmatprep.subr.bf16.mxu0 0
        %3922 = vmatpush1.bf16.msra.mxu0 %v3898
        %3923 = vmatprep.subr.bf16.mxu0 0
        %3924 = vmatpush1.bf16.msra.mxu0 0
        %3925 = vmatprep.subr.bf16.mxu0 0
        %3926 = vmatpush1.bf16.msra.mxu0 0
        %3927 = vmatprep.subr.bf16.mxu0 0
        %3928 = vmatpush1.bf16.msra.mxu0 0
        %3929 = vmatprep.subr.bf16.mxu0 0
        %3930 = vmatpush1.bf16.msra.mxu0 0
        %3931 = vmatprep.subr.bf16.mxu0 0
        %3932 = vmatpush1.bf16.msra.mxu0 0
        %3933 = vmatprep.subr.bf16.mxu0 0
        %3934 = vmatpush1.bf16.msra.mxu0 0
        %3935 = vmatprep.subr.bf16.mxu0 0
        %3936 = vmatpush1.bf16.msra.mxu0 0
        %3937 = vmatprep.subr.bf16.mxu0 0
        %3938 = vmatpush1.bf16.msra.mxu0 0
        %3939 = vmatprep.mubr.bf16.mxu0 0
        %3940 = vmatmul.mubr.bf16.gmra.mrb[0].mxu0 %v3857
        %v3941 = vpop.f32.mrb[0].mxu0
        %v3942 = vadd.f32 0.0, %v3941
        %v3943 = vpop.f32.mrb[0].mxu0
        %v3944 = vpop.f32.mrb[0].mxu0
        %v3945 = vpop.f32.mrb[0].mxu0
        %3946 = vdwg.mxu0
        %v3947 = vadd.f32 %v3838, %v3942
        %s3948 = scalar_lea.vmem %s4, 1216
        %v3949 = vld [vmem:[%s3948] sm:$0xf]
        %v3950 = vld [vmem:[%s3948 + $0x4] sm:$0xf]
        %v3951 = vld [vmem:[%s3948 + $0x8] sm:$0xf]
        %v3952 = vld [vmem:[%s3948 + $0xc] sm:$0xf]
        %v3953 = vld [vmem:[%s3948 + $0x10] sm:$0xf]
        %v3954 = vld [vmem:[%s3948 + $0x14] sm:$0xf]
        %v3955 = vld [vmem:[%s3948 + $0x18] sm:$0xf]
        %v3956 = vld [vmem:[%s3948 + $0x1c] sm:$0xf]
        %v3957 = vld [vmem:[%s3948 + $0x20] sm:$0xf]
        %v3958 = vld [vmem:[%s3948 + $0x24] sm:$0xf]
        %v3959 = vld [vmem:[%s3948 + $0x28] sm:$0xf]
        %v3960 = vld [vmem:[%s3948 + $0x2c] sm:$0xf]
        %v3961 = vld [vmem:[%s3948 + $0x30] sm:$0xf]
        %v3962 = vld [vmem:[%s3948 + $0x34] sm:$0xf]
        %v3963 = vld [vmem:[%s3948 + $0x38] sm:$0xf]
        %v3964 = vld [vmem:[%s3948 + $0x3c] sm:$0xf]
        %v3965 = vrot.slane %v3747, 1
        %v3983 = vunpack.c.l.b16 %v3949
        %v3984 = vunpack.c.l.b16 %v3950
        %v3985 = vunpack.c.l.b16 %v3951
        %v3986 = vunpack.c.l.b16 %v3952
        %v3987 = vunpack.c.l.b16 %v3953
        %v3988 = vunpack.c.l.b16 %v3954
        %v3989 = vunpack.c.l.b16 %v3955
        %v3990 = vunpack.c.l.b16 %v3956
        %v3991 = vunpack.c.l.b16 %v3957
        %v3992 = vunpack.c.l.b16 %v3958
        %v3993 = vunpack.c.l.b16 %v3959
        %v3994 = vunpack.c.l.b16 %v3960
        %v3995 = vunpack.c.l.b16 %v3961
        %v3996 = vunpack.c.l.b16 %v3962
        %v3997 = vunpack.c.l.b16 %v3963
        %v3998 = vunpack.c.l.b16 %v3964
        %v3999 = vpack.c.b16 %v3984, %v3983
        %v4000 = vpack.c.b16 %v3986, %v3985
        %v4001 = vpack.c.b16 %v3988, %v3987
        %v4002 = vpack.c.b16 %v3990, %v3989
        %v4003 = vpack.c.b16 %v3992, %v3991
        %v4004 = vpack.c.b16 %v3994, %v3993
        %v4005 = vpack.c.b16 %v3996, %v3995
        %v4006 = vpack.c.b16 %v3998, %v3997
        %4015 = vmatprep.subr.bf16.mxu0 0
        %4016 = vmatpush1.bf16.msra.mxu0 %v3999
        %4017 = vmatprep.subr.bf16.mxu0 0
        %4018 = vmatpush1.bf16.msra.mxu0 %v4000
        %4019 = vmatprep.subr.bf16.mxu0 0
        %4020 = vmatpush1.bf16.msra.mxu0 %v4001
        %4021 = vmatprep.subr.bf16.mxu0 0
        %4022 = vmatpush1.bf16.msra.mxu0 %v4002
        %4023 = vmatprep.subr.bf16.mxu0 0
        %4024 = vmatpush1.bf16.msra.mxu0 %v4003
        %4025 = vmatprep.subr.bf16.mxu0 0
        %4026 = vmatpush1.bf16.msra.mxu0 %v4004
        %4027 = vmatprep.subr.bf16.mxu0 0
        %4028 = vmatpush1.bf16.msra.mxu0 %v4005
        %4029 = vmatprep.subr.bf16.mxu0 0
        %4030 = vmatpush1.bf16.msra.mxu0 %v4006
        %4031 = vmatprep.subr.bf16.mxu0 0
        %4032 = vmatpush1.bf16.msra.mxu0 0
        %4033 = vmatprep.subr.bf16.mxu0 0
        %4034 = vmatpush1.bf16.msra.mxu0 0
        %4035 = vmatprep.subr.bf16.mxu0 0
        %4036 = vmatpush1.bf16.msra.mxu0 0
        %4037 = vmatprep.subr.bf16.mxu0 0
        %4038 = vmatpush1.bf16.msra.mxu0 0
        %4039 = vmatprep.subr.bf16.mxu0 0
        %4040 = vmatpush1.bf16.msra.mxu0 0
        %4041 = vmatprep.subr.bf16.mxu0 0
        %4042 = vmatpush1.bf16.msra.mxu0 0
        %4043 = vmatprep.subr.bf16.mxu0 0
        %4044 = vmatpush1.bf16.msra.mxu0 0
        %4045 = vmatprep.subr.bf16.mxu0 0
        %4046 = vmatpush1.bf16.msra.mxu0 0
        %4047 = vmatprep.mubr.bf16.mxu0 0
        %4048 = vmatmul.mubr.bf16.gmra.mrb[0].mxu0 %v3965
        %v4049 = vpop.f32.mrb[0].mxu0
        %v4050 = vadd.f32 0.0, %v4049
        %v4051 = vpop.f32.mrb[0].mxu0
        %v4052 = vpop.f32.mrb[0].mxu0
        %v4053 = vpop.f32.mrb[0].mxu0
        %4054 = vdwg.mxu0
        %v4055 = vadd.f32 %v3947, %v4050
        %s4056 = scalar_lea.vmem %s4, 1280
        %v4057 = vld [vmem:[%s4056] sm:$0xf]
        %v4058 = vld [vmem:[%s4056 + $0x4] sm:$0xf]
        %v4059 = vld [vmem:[%s4056 + $0x8] sm:$0xf]
        %v4060 = vld [vmem:[%s4056 + $0xc] sm:$0xf]
        %v4061 = vld [vmem:[%s4056 + $0x10] sm:$0xf]
        %v4062 = vld [vmem:[%s4056 + $0x14] sm:$0xf]
        %v4063 = vld [vmem:[%s4056 + $0x18] sm:$0xf]
        %v4064 = vld [vmem:[%s4056 + $0x1c] sm:$0xf]
        %v4065 = vld [vmem:[%s4056 + $0x20] sm:$0xf]
        %v4066 = vld [vmem:[%s4056 + $0x24] sm:$0xf]
        %v4067 = vld [vmem:[%s4056 + $0x28] sm:$0xf]
        %v4068 = vld [vmem:[%s4056 + $0x2c] sm:$0xf]
        %v4069 = vld [vmem:[%s4056 + $0x30] sm:$0xf]
        %v4070 = vld [vmem:[%s4056 + $0x34] sm:$0xf]
        %v4071 = vld [vmem:[%s4056 + $0x38] sm:$0xf]
        %v4072 = vld [vmem:[%s4056 + $0x3c] sm:$0xf]
        %v4073 = vrot.slane %v3622, 2
        %v4091 = vunpack.c.l.b16 %v4057
        %v4092 = vunpack.c.l.b16 %v4058
        %v4093 = vunpack.c.l.b16 %v4059
        %v4094 = vunpack.c.l.b16 %v4060
        %v4095 = vunpack.c.l.b16 %v4061
        %v4096 = vunpack.c.l.b16 %v4062
        %v4097 = vunpack.c.l.b16 %v4063
        %v4098 = vunpack.c.l.b16 %v4064
        %v4099 = vunpack.c.l.b16 %v4065
        %v4100 = vunpack.c.l.b16 %v4066
        %v4101 = vunpack.c.l.b16 %v4067
        %v4102 = vunpack.c.l.b16 %v4068
        %v4103 = vunpack.c.l.b16 %v4069
        %v4104 = vunpack.c.l.b16 %v4070
        %v4105 = vunpack.c.l.b16 %v4071
        %v4106 = vunpack.c.l.b16 %v4072
        %v4107 = vpack.c.b16 %v4092, %v4091
        %v4108 = vpack.c.b16 %v4094, %v4093
        %v4109 = vpack.c.b16 %v4096, %v4095
        %v4110 = vpack.c.b16 %v4098, %v4097
        %v4111 = vpack.c.b16 %v4100, %v4099
        %v4112 = vpack.c.b16 %v4102, %v4101
        %v4113 = vpack.c.b16 %v4104, %v4103
        %v4114 = vpack.c.b16 %v4106, %v4105
        %4123 = vmatprep.subr.bf16.mxu0 0
        %4124 = vmatpush1.bf16.msra.mxu0 %v4107
        %4125 = vmatprep.subr.bf16.mxu0 0
        %4126 = vmatpush1.bf16.msra.mxu0 %v4108
        %4127 = vmatprep.subr.bf16.mxu0 0
        %4128 = vmatpush1.bf16.msra.mxu0 %v4109
        %4129 = vmatprep.subr.bf16.mxu0 0
        %4130 = vmatpush1.bf16.msra.mxu0 %v4110
        %4131 = vmatprep.subr.bf16.mxu0 0
        %4132 = vmatpush1.bf16.msra.mxu0 %v4111
        %4133 = vmatprep.subr.bf16.mxu0 0
        %4134 = vmatpush1.bf16.msra.mxu0 %v4112
        %4135 = vmatprep.subr.bf16.mxu0 0
        %4136 = vmatpush1.bf16.msra.mxu0 %v4113
        %4137 = vmatprep.subr.bf16.mxu0 0
        %4138 = vmatpush1.bf16.msra.mxu0 %v4114
        %4139 = vmatprep.subr.bf16.mxu0 0
        %4140 = vmatpush1.bf16.msra.mxu0 0
        %4141 = vmatprep.subr.bf16.mxu0 0
        %4142 = vmatpush1.bf16.msra.mxu0 0
        %4143 = vmatprep.subr.bf16.mxu0 0
        %4144 = vmatpush1.bf16.msra.mxu0 0
        %4145 = vmatprep.subr.bf16.mxu0 0
        %4146 = vmatpush1.bf16.msra.mxu0 0
        %4147 = vmatprep.subr.bf16.mxu0 0
        %4148 = vmatpush1.bf16.msra.mxu0 0
        %4149 = vmatprep.subr.bf16.mxu0 0
        %4150 = vmatpush1.bf16.msra.mxu0 0
        %4151 = vmatprep.subr.bf16.mxu0 0
        %4152 = vmatpush1.bf16.msra.mxu0 0
        %4153 = vmatprep.subr.bf16.mxu0 0
        %4154 = vmatpush1.bf16.msra.mxu0 0
        %4155 = vmatprep.mubr.bf16.mxu0 0
        %4156 = vmatmul.mubr.bf16.gmra.mrb[0].mxu0 %v4073
        %v4157 = vpop.f32.mrb[0].mxu0
        %v4158 = vadd.f32 0.0, %v4157
        %v4159 = vpop.f32.mrb[0].mxu0
        %v4160 = vpop.f32.mrb[0].mxu0
        %v4161 = vpop.f32.mrb[0].mxu0
        %4162 = vdwg.mxu0
        %v4163 = vadd.f32 %v4055, %v4158
        %s4164 = scalar_lea.vmem %s4, 1344
        %v4165 = vld [vmem:[%s4164] sm:$0xf]
        %v4166 = vld [vmem:[%s4164 + $0x4] sm:$0xf]
        %v4167 = vld [vmem:[%s4164 + $0x8] sm:$0xf]
        %v4168 = vld [vmem:[%s4164 + $0xc] sm:$0xf]
        %v4169 = vld [vmem:[%s4164 + $0x10] sm:$0xf]
        %v4170 = vld [vmem:[%s4164 + $0x14] sm:$0xf]
        %v4171 = vld [vmem:[%s4164 + $0x18] sm:$0xf]
        %v4172 = vld [vmem:[%s4164 + $0x1c] sm:$0xf]
        %v4173 = vld [vmem:[%s4164 + $0x20] sm:$0xf]
        %v4174 = vld [vmem:[%s4164 + $0x24] sm:$0xf]
        %v4175 = vld [vmem:[%s4164 + $0x28] sm:$0xf]
        %v4176 = vld [vmem:[%s4164 + $0x2c] sm:$0xf]
        %v4177 = vld [vmem:[%s4164 + $0x30] sm:$0xf]
        %v4178 = vld [vmem:[%s4164 + $0x34] sm:$0xf]
        %v4179 = vld [vmem:[%s4164 + $0x38] sm:$0xf]
        %v4180 = vld [vmem:[%s4164 + $0x3c] sm:$0xf]
        %v4181 = vrot.slane %v3747, 2
        %v4199 = vunpack.c.l.b16 %v4165
        %v4200 = vunpack.c.l.b16 %v4166
        %v4201 = vunpack.c.l.b16 %v4167
        %v4202 = vunpack.c.l.b16 %v4168
        %v4203 = vunpack.c.l.b16 %v4169
        %v4204 = vunpack.c.l.b16 %v4170
        %v4205 = vunpack.c.l.b16 %v4171
        %v4206 = vunpack.c.l.b16 %v4172
        %v4207 = vunpack.c.l.b16 %v4173
        %v4208 = vunpack.c.l.b16 %v4174
        %v4209 = vunpack.c.l.b16 %v4175
        %v4210 = vunpack.c.l.b16 %v4176
        %v4211 = vunpack.c.l.b16 %v4177
        %v4212 = vunpack.c.l.b16 %v4178
        %v4213 = vunpack.c.l.b16 %v4179
        %v4214 = vunpack.c.l.b16 %v4180
        %v4215 = vpack.c.b16 %v4200, %v4199
        %v4216 = vpack.c.b16 %v4202, %v4201
        %v4217 = vpack.c.b16 %v4204, %v4203
        %v4218 = vpack.c.b16 %v4206, %v4205
        %v4219 = vpack.c.b16 %v4208, %v4207
        %v4220 = vpack.c.b16 %v4210, %v4209
        %v4221 = vpack.c.b16 %v4212, %v4211
        %v4222 = vpack.c.b16 %v4214, %v4213
        %4231 = vmatprep.subr.bf16.mxu0 0
        %4232 = vmatpush1.bf16.msra.mxu0 %v4215
        %4233 = vmatprep.subr.bf16.mxu0 0
        %4234 = vmatpush1.bf16.msra.mxu0 %v4216
        %4235 = vmatprep.subr.bf16.mxu0 0
        %4236 = vmatpush1.bf16.msra.mxu0 %v4217
        %4237 = vmatprep.subr.bf16.mxu0 0
        %4238 = vmatpush1.bf16.msra.mxu0 %v4218
        %4239 = vmatprep.subr.bf16.mxu0 0
        %4240 = vmatpush1.bf16.msra.mxu0 %v4219
        %4241 = vmatprep.subr.bf16.mxu0 0
        %4242 = vmatpush1.bf16.msra.mxu0 %v4220
        %4243 = vmatprep.subr.bf16.mxu0 0
        %4244 = vmatpush1.bf16.msra.mxu0 %v4221
        %4245 = vmatprep.subr.bf16.mxu0 0
        %4246 = vmatpush1.bf16.msra.mxu0 %v4222
        %4247 = vmatprep.subr.bf16.mxu0 0
        %4248 = vmatpush1.bf16.msra.mxu0 0
        %4249 = vmatprep.subr.bf16.mxu0 0
        %4250 = vmatpush1.bf16.msra.mxu0 0
        %4251 = vmatprep.subr.bf16.mxu0 0
        %4252 = vmatpush1.bf16.msra.mxu0 0
        %4253 = vmatprep.subr.bf16.mxu0 0
        %4254 = vmatpush1.bf16.msra.mxu0 0
        %4255 = vmatprep.subr.bf16.mxu0 0
        %4256 = vmatpush1.bf16.msra.mxu0 0
        %4257 = vmatprep.subr.bf16.mxu0 0
        %4258 = vmatpush1.bf16.msra.mxu0 0
        %4259 = vmatprep.subr.bf16.mxu0 0
        %4260 = vmatpush1.bf16.msra.mxu0 0
        %4261 = vmatprep.subr.bf16.mxu0 0
        %4262 = vmatpush1.bf16.msra.mxu0 0
        %4263 = vmatprep.mubr.bf16.mxu0 0
        %4264 = vmatmul.mubr.bf16.gmra.mrb[0].mxu0 %v4181
        %v4265 = vpop.f32.mrb[0].mxu0
        %v4266 = vadd.f32 0.0, %v4265
        %v4267 = vpop.f32.mrb[0].mxu0
        %v4268 = vpop.f32.mrb[0].mxu0
        %v4269 = vpop.f32.mrb[0].mxu0
        %4270 = vdwg.mxu0
        %v4271 = vadd.f32 %v4163, %v4266
        %s4272 = scalar_lea.vmem %s4, 1408
        %v4273 = vld [vmem:[%s4272] sm:$0xf]
        %v4274 = vld [vmem:[%s4272 + $0x4] sm:$0xf]
        %v4275 = vld [vmem:[%s4272 + $0x8] sm:$0xf]
        %v4276 = vld [vmem:[%s4272 + $0xc] sm:$0xf]
        %v4277 = vld [vmem:[%s4272 + $0x10] sm:$0xf]
        %v4278 = vld [vmem:[%s4272 + $0x14] sm:$0xf]
        %v4279 = vld [vmem:[%s4272 + $0x18] sm:$0xf]
        %v4280 = vld [vmem:[%s4272 + $0x1c] sm:$0xf]
        %v4281 = vld [vmem:[%s4272 + $0x20] sm:$0xf]
        %v4282 = vld [vmem:[%s4272 + $0x24] sm:$0xf]
        %v4283 = vld [vmem:[%s4272 + $0x28] sm:$0xf]
        %v4284 = vld [vmem:[%s4272 + $0x2c] sm:$0xf]
        %v4285 = vld [vmem:[%s4272 + $0x30] sm:$0xf]
        %v4286 = vld [vmem:[%s4272 + $0x34] sm:$0xf]
        %v4287 = vld [vmem:[%s4272 + $0x38] sm:$0xf]
        %v4288 = vld [vmem:[%s4272 + $0x3c] sm:$0xf]
        %v4289 = vrot.slane %v3622, 3
        %v4307 = vunpack.c.l.b16 %v4273
        %v4308 = vunpack.c.l.b16 %v4274
        %v4309 = vunpack.c.l.b16 %v4275
        %v4310 = vunpack.c.l.b16 %v4276
        %v4311 = vunpack.c.l.b16 %v4277
        %v4312 = vunpack.c.l.b16 %v4278
        %v4313 = vunpack.c.l.b16 %v4279
        %v4314 = vunpack.c.l.b16 %v4280
        %v4315 = vunpack.c.l.b16 %v4281
        %v4316 = vunpack.c.l.b16 %v4282
        %v4317 = vunpack.c.l.b16 %v4283
        %v4318 = vunpack.c.l.b16 %v4284
        %v4319 = vunpack.c.l.b16 %v4285
        %v4320 = vunpack.c.l.b16 %v4286
        %v4321 = vunpack.c.l.b16 %v4287
        %v4322 = vunpack.c.l.b16 %v4288
        %v4323 = vpack.c.b16 %v4308, %v4307
        %v4324 = vpack.c.b16 %v4310, %v4309
        %v4325 = vpack.c.b16 %v4312, %v4311
        %v4326 = vpack.c.b16 %v4314, %v4313
        %v4327 = vpack.c.b16 %v4316, %v4315
        %v4328 = vpack.c.b16 %v4318, %v4317
        %v4329 = vpack.c.b16 %v4320, %v4319
        %v4330 = vpack.c.b16 %v4322, %v4321
        %4339 = vmatprep.subr.bf16.mxu0 0
        %4340 = vmatpush1.bf16.msra.mxu0 %v4323
        %4341 = vmatprep.subr.bf16.mxu0 0
        %4342 = vmatpush1.bf16.msra.mxu0 %v4324
        %4343 = vmatprep.subr.bf16.mxu0 0
        %4344 = vmatpush1.bf16.msra.mxu0 %v4325
        %4345 = vmatprep.subr.bf16.mxu0 0
        %4346 = vmatpush1.bf16.msra.mxu0 %v4326
        %4347 = vmatprep.subr.bf16.mxu0 0
        %4348 = vmatpush1.bf16.msra.mxu0 %v4327
        %4349 = vmatprep.subr.bf16.mxu0 0
        %4350 = vmatpush1.bf16.msra.mxu0 %v4328
        %4351 = vmatprep.subr.bf16.mxu0 0
        %4352 = vmatpush1.bf16.msra.mxu0 %v4329
        %4353 = vmatprep.subr.bf16.mxu0 0
        %4354 = vmatpush1.bf16.msra.mxu0 %v4330
        %4355 = vmatprep.subr.bf16.mxu0 0
        %4356 = vmatpush1.bf16.msra.mxu0 0
        %4357 = vmatprep.subr.bf16.mxu0 0
        %4358 = vmatpush1.bf16.msra.mxu0 0
        %4359 = vmatprep.subr.bf16.mxu0 0
        %4360 = vmatpush1.bf16.msra.mxu0 0
        %4361 = vmatprep.subr.bf16.mxu0 0
        %4362 = vmatpush1.bf16.msra.mxu0 0
        %4363 = vmatprep.subr.bf16.mxu0 0
        %4364 = vmatpush1.bf16.msra.mxu0 0
        %4365 = vmatprep.subr.bf16.mxu0 0
        %4366 = vmatpush1.bf16.msra.mxu0 0
        %4367 = vmatprep.subr.bf16.mxu0 0
        %4368 = vmatpush1.bf16.msra.mxu0 0
        %4369 = vmatprep.subr.bf16.mxu0 0
        %4370 = vmatpush1.bf16.msra.mxu0 0
        %4371 = vmatprep.mubr.bf16.mxu0 0
        %4372 = vmatmul.mubr.bf16.gmra.mrb[0].mxu0 %v4289
        %v4373 = vpop.f32.mrb[0].mxu0
        %v4374 = vadd.f32 0.0, %v4373
        %v4375 = vpop.f32.mrb[0].mxu0
        %v4376 = vpop.f32.mrb[0].mxu0
        %v4377 = vpop.f32.mrb[0].mxu0
        %4378 = vdwg.mxu0
        %v4379 = vadd.f32 %v4271, %v4374
        %s4380 = scalar_lea.vmem %s4, 1472
        %v4381 = vld [vmem:[%s4380] sm:$0xf]
        %v4382 = vld [vmem:[%s4380 + $0x4] sm:$0xf]
        %v4383 = vld [vmem:[%s4380 + $0x8] sm:$0xf]
        %v4384 = vld [vmem:[%s4380 + $0xc] sm:$0xf]
        %v4385 = vld [vmem:[%s4380 + $0x10] sm:$0xf]
        %v4386 = vld [vmem:[%s4380 + $0x14] sm:$0xf]
        %v4387 = vld [vmem:[%s4380 + $0x18] sm:$0xf]
        %v4388 = vld [vmem:[%s4380 + $0x1c] sm:$0xf]
        %v4389 = vld [vmem:[%s4380 + $0x20] sm:$0xf]
        %v4390 = vld [vmem:[%s4380 + $0x24] sm:$0xf]
        %v4391 = vld [vmem:[%s4380 + $0x28] sm:$0xf]
        %v4392 = vld [vmem:[%s4380 + $0x2c] sm:$0xf]
        %v4393 = vld [vmem:[%s4380 + $0x30] sm:$0xf]
        %v4394 = vld [vmem:[%s4380 + $0x34] sm:$0xf]
        %v4395 = vld [vmem:[%s4380 + $0x38] sm:$0xf]
        %v4396 = vld [vmem:[%s4380 + $0x3c] sm:$0xf]
        %v4397 = vrot.slane %v3747, 3
        %v4415 = vunpack.c.l.b16 %v4381
        %v4416 = vunpack.c.l.b16 %v4382
        %v4417 = vunpack.c.l.b16 %v4383
        %v4418 = vunpack.c.l.b16 %v4384
        %v4419 = vunpack.c.l.b16 %v4385
        %v4420 = vunpack.c.l.b16 %v4386
        %v4421 = vunpack.c.l.b16 %v4387
        %v4422 = vunpack.c.l.b16 %v4388
        %v4423 = vunpack.c.l.b16 %v4389
        %v4424 = vunpack.c.l.b16 %v4390
        %v4425 = vunpack.c.l.b16 %v4391
        %v4426 = vunpack.c.l.b16 %v4392
        %v4427 = vunpack.c.l.b16 %v4393
        %v4428 = vunpack.c.l.b16 %v4394
        %v4429 = vunpack.c.l.b16 %v4395
        %v4430 = vunpack.c.l.b16 %v4396
        %v4431 = vpack.c.b16 %v4416, %v4415
        %v4432 = vpack.c.b16 %v4418, %v4417
        %v4433 = vpack.c.b16 %v4420, %v4419
        %v4434 = vpack.c.b16 %v4422, %v4421
        %v4435 = vpack.c.b16 %v4424, %v4423
        %v4436 = vpack.c.b16 %v4426, %v4425
        %v4437 = vpack.c.b16 %v4428, %v4427
        %v4438 = vpack.c.b16 %v4430, %v4429
        %4447 = vmatprep.subr.bf16.mxu0 0
        %4448 = vmatpush1.bf16.msra.mxu0 %v4431
        %4449 = vmatprep.subr.bf16.mxu0 0
        %4450 = vmatpush1.bf16.msra.mxu0 %v4432
        %4451 = vmatprep.subr.bf16.mxu0 0
        %4452 = vmatpush1.bf16.msra.mxu0 %v4433
        %4453 = vmatprep.subr.bf16.mxu0 0
        %4454 = vmatpush1.bf16.msra.mxu0 %v4434
        %4455 = vmatprep.subr.bf16.mxu0 0
        %4456 = vmatpush1.bf16.msra.mxu0 %v4435
        %4457 = vmatprep.subr.bf16.mxu0 0
        %4458 = vmatpush1.bf16.msra.mxu0 %v4436
        %4459 = vmatprep.subr.bf16.mxu0 0
        %4460 = vmatpush1.bf16.msra.mxu0 %v4437
        %4461 = vmatprep.subr.bf16.mxu0 0
        %4462 = vmatpush1.bf16.msra.mxu0 %v4438
        %4463 = vmatprep.subr.bf16.mxu0 0
        %4464 = vmatpush1.bf16.msra.mxu0 0
        %4465 = vmatprep.subr.bf16.mxu0 0
        %4466 = vmatpush1.bf16.msra.mxu0 0
        %4467 = vmatprep.subr.bf16.mxu0 0
        %4468 = vmatpush1.bf16.msra.mxu0 0
        %4469 = vmatprep.subr.bf16.mxu0 0
        %4470 = vmatpush1.bf16.msra.mxu0 0
        %4471 = vmatprep.subr.bf16.mxu0 0
        %4472 = vmatpush1.bf16.msra.mxu0 0
        %4473 = vmatprep.subr.bf16.mxu0 0
        %4474 = vmatpush1.bf16.msra.mxu0 0
        %4475 = vmatprep.subr.bf16.mxu0 0
        %4476 = vmatpush1.bf16.msra.mxu0 0
        %4477 = vmatprep.subr.bf16.mxu0 0
        %4478 = vmatpush1.bf16.msra.mxu0 0
        %4479 = vmatprep.mubr.bf16.mxu0 0
        %4480 = vmatmul.mubr.bf16.gmra.mrb[0].mxu0 %v4397
        %v4481 = vpop.f32.mrb[0].mxu0
        %v4482 = vadd.f32 0.0, %v4481
        %v4483 = vpop.f32.mrb[0].mxu0
        %v4484 = vpop.f32.mrb[0].mxu0
        %v4485 = vpop.f32.mrb[0].mxu0
        %4486 = vdwg.mxu0
        %v4487 = vadd.f32 %v4379, %v4482
        %v4488 = vpack.c.bf16 %v1892, %v1892
        %s4489 = scalar_lea.vmem %s4, 1536
        %v4490 = vld [vmem:[%s4489] sm:$0xf]
        %v4491 = vld [vmem:[%s4489 + $0x4] sm:$0xf]
        %v4492 = vld [vmem:[%s4489 + $0x8] sm:$0xf]
        %v4493 = vld [vmem:[%s4489 + $0xc] sm:$0xf]
        %v4494 = vld [vmem:[%s4489 + $0x10] sm:$0xf]
        %v4495 = vld [vmem:[%s4489 + $0x14] sm:$0xf]
        %v4496 = vld [vmem:[%s4489 + $0x18] sm:$0xf]
        %v4497 = vld [vmem:[%s4489 + $0x1c] sm:$0xf]
        %v4498 = vld [vmem:[%s4489 + $0x20] sm:$0xf]
        %v4499 = vld [vmem:[%s4489 + $0x24] sm:$0xf]
        %v4500 = vld [vmem:[%s4489 + $0x28] sm:$0xf]
        %v4501 = vld [vmem:[%s4489 + $0x2c] sm:$0xf]
        %v4502 = vld [vmem:[%s4489 + $0x30] sm:$0xf]
        %v4503 = vld [vmem:[%s4489 + $0x34] sm:$0xf]
        %v4504 = vld [vmem:[%s4489 + $0x38] sm:$0xf]
        %v4505 = vld [vmem:[%s4489 + $0x3c] sm:$0xf]
        %v4522 = vunpack.c.l.b16 %v4490
        %v4523 = vunpack.c.l.b16 %v4491
        %v4524 = vunpack.c.l.b16 %v4492
        %v4525 = vunpack.c.l.b16 %v4493
        %v4526 = vunpack.c.l.b16 %v4494
        %v4527 = vunpack.c.l.b16 %v4495
        %v4528 = vunpack.c.l.b16 %v4496
        %v4529 = vunpack.c.l.b16 %v4497
        %v4530 = vunpack.c.l.b16 %v4498
        %v4531 = vunpack.c.l.b16 %v4499
        %v4532 = vunpack.c.l.b16 %v4500
        %v4533 = vunpack.c.l.b16 %v4501
        %v4534 = vunpack.c.l.b16 %v4502
        %v4535 = vunpack.c.l.b16 %v4503
        %v4536 = vunpack.c.l.b16 %v4504
        %v4537 = vunpack.c.l.b16 %v4505
        %v4538 = vpack.c.b16 %v4523, %v4522
        %v4539 = vpack.c.b16 %v4525, %v4524
        %v4540 = vpack.c.b16 %v4527, %v4526
        %v4541 = vpack.c.b16 %v4529, %v4528
        %v4542 = vpack.c.b16 %v4531, %v4530
        %v4543 = vpack.c.b16 %v4533, %v4532
        %v4544 = vpack.c.b16 %v4535, %v4534
        %v4545 = vpack.c.b16 %v4537, %v4536
        %4554 = vmatprep.subr.bf16.mxu0 0
        %4555 = vmatpush1.bf16.msra.mxu0 %v4538
        %4556 = vmatprep.subr.bf16.mxu0 0
        %4557 = vmatpush1.bf16.msra.mxu0 %v4539
        %4558 = vmatprep.subr.bf16.mxu0 0
        %4559 = vmatpush1.bf16.msra.mxu0 %v4540
        %4560 = vmatprep.subr.bf16.mxu0 0
        %4561 = vmatpush1.bf16.msra.mxu0 %v4541
        %4562 = vmatprep.subr.bf16.mxu0 0
        %4563 = vmatpush1.bf16.msra.mxu0 %v4542
        %4564 = vmatprep.subr.bf16.mxu0 0
        %4565 = vmatpush1.bf16.msra.mxu0 %v4543
        %4566 = vmatprep.subr.bf16.mxu0 0
        %4567 = vmatpush1.bf16.msra.mxu0 %v4544
        %4568 = vmatprep.subr.bf16.mxu0 0
        %4569 = vmatpush1.bf16.msra.mxu0 %v4545
        %4570 = vmatprep.subr.bf16.mxu0 0
        %4571 = vmatpush1.bf16.msra.mxu0 0
        %4572 = vmatprep.subr.bf16.mxu0 0
        %4573 = vmatpush1.bf16.msra.mxu0 0
        %4574 = vmatprep.subr.bf16.mxu0 0
        %4575 = vmatpush1.bf16.msra.mxu0 0
        %4576 = vmatprep.subr.bf16.mxu0 0
        %4577 = vmatpush1.bf16.msra.mxu0 0
        %4578 = vmatprep.subr.bf16.mxu0 0
        %4579 = vmatpush1.bf16.msra.mxu0 0
        %4580 = vmatprep.subr.bf16.mxu0 0
        %4581 = vmatpush1.bf16.msra.mxu0 0
        %4582 = vmatprep.subr.bf16.mxu0 0
        %4583 = vmatpush1.bf16.msra.mxu0 0
        %4584 = vmatprep.subr.bf16.mxu0 0
        %4585 = vmatpush1.bf16.msra.mxu0 0
        %4586 = vmatprep.mubr.bf16.mxu0 0
        %4587 = vmatmul.mubr.bf16.gmra.mrb[0].mxu0 %v4488
        %v4588 = vpop.f32.mrb[0].mxu0
        %v4589 = vadd.f32 0.0, %v4588
        %v4590 = vpop.f32.mrb[0].mxu0
        %v4591 = vpop.f32.mrb[0].mxu0
        %v4592 = vpop.f32.mrb[0].mxu0
        %4593 = vdwg.mxu0
        %v4594 = vadd.f32 %v4487, %v4589
        %v4595 = vld [vmem:[%s5] sm:$0x1]
        %v4596 = vadd.f32 %v4594, %v4595
        %4597 = vst [vmem:[%s244] sm:$0x1] %v4596
        %s4598 = sand.u32 %s160, 1
        %s4599 = scalar_lea.sflag [#allocation4], %s4598
        %s4600 = sand.u32 %s160, 1
        %s4601 = scalar_lea.vmem [#allocation3], %s4600
        // Predicated region
        $region45: #{_lambda_.3} parent=43 // pred_check
          %p4602 = pneg %p170
        $region46: #{_lambda_.3} parent=43 // pred_check_branch
          %4604 = sbr.rel (%p4602) target = $region48
        $region47: #{_lambda_.3} parent=43 // pred_region
          %s4606 = ssub.s32 16, 16
          %4607 = vsyncadd %s4599, %s4606
          %s4608 = smul.addr %s21, 16
          %s4609 = scalar_lea.hbm %s6, %s4608
          %s4611 = sshll.u32 %s4601, 4
          %s4612 = int_to_ptr.vmem [resolvable:$true] %s4611
          %4614 = dma.vmem_to_hbm [thread:$0]  %s4612, 16, %s4609, %s4599
        $region48: #{_lambda_.3} parent=43 // pred_fallthru
          _
      $region44: #{_lambda_.3} parent=5 // pred_fallthru
        _
      %p4615 = scmp.le.s32.totalorder 2, %s16
      // Predicated region
      $region49: #{_lambda_.3} parent=5 // pred_check
        %p4616 = pneg %p4615
      $region50: #{_lambda_.3} parent=5 // pred_check_branch
        %4618 = sbr.rel (%p4616) target = $region52
      $region51: #{_lambda_.3} parent=5 // pred_region
        %s4619 = ssub.s32 %s16, 2
        // Predicated region
        $region53: #{_lambda_.3} parent=51 // pred_check
          %p4620 = pneg %p176
        $region54: #{_lambda_.3} parent=51 // pred_check_branch
          %4622 = sbr.rel (%p4620) target = $region56
        $region55: #{_lambda_.3} parent=51 // pred_region
          %s4623 = sand.u32 %s161, 1
          %s4624 = scalar_lea.sflag [#allocation4], %s4623
          %s4625 = sand.u32 %s161, 1
          %s4626 = scalar_lea.vmem [#allocation3], %s4625
          %4627 = dma.done %s4624, 16
        $region56: #{_lambda_.3} parent=51 // pred_fallthru
          _
      $region52: #{_lambda_.3} parent=5 // pred_fallthru
        _
    $region6: #{_lambda_.3} parent=1 // loop_footer
      %s20 = sadd.s32 1, %s16
    $region7: #{_lambda_.3} parent=1 // loop_footer_branch
      %15 = sbr.rel target = $region3
    $region8: #{_lambda_.3} parent=1 // loop_exit
      _
    %4628 = vsyncpa [#allocation4], 1
    %s4629 = scalar_lea.sflag [#allocation4], 1
    %4630 = vsyncpa %s4629, 1

</llo_original>
